<compile_context>
chip_gen: v7x
topology: tpu7x:2x2x1
jax: 0.10.0
libtpu: 0.0.40
codegen_flags: <defaults>
</compile_context>

<pallas_src>
import math

import jax
import jax.numpy as jnp
from jax.experimental import pallas as pl
from jax.experimental.pallas import tpu as pltpu

CONV_CHANNELS = 10
NUM_CLASSES = 10
H = W = 28             # input spatial size implied by fc1 (= C * 14 * 14)
POOL_HW = 14
M = POOL_HW * POOL_HW  # 196 pooled spatial positions
FC1_OUT = 100
FC1_PAD = 128          # fc1 hidden padded to a lane multiple


# ------------------------------ Pallas kernel ------------------------------

def tiny_cnn_kernel(p_ref, wc_ref, bc_ref, w1_ref, b1_ref, w2_ref, b2_ref, o_ref):
    """Fused conv(3x3) + 2x2 max-pool + tanh + fc1 + ReLU + fc2.

    p_ref : (B, 4, 9, M)   im2col patches, one (9, M) slab per pool branch
    wc_ref: (C, 9)         conv weight
    bc_ref: (C, 1)         conv bias
    w1_ref: (C, M, F)      fc1 weight as per-channel slabs (F padded to 128)
    b1_ref: (1, F)         fc1 bias (zero-padded)
    w2_ref: (F, NC)        fc2 weight (rows zero-padded)
    b2_ref: (1, NC)        fc2 bias
    o_ref : (B, NC)        logits
    """
    B = p_ref.shape[0]
    C = wc_ref.shape[0]
    wc = wc_ref[...]
    bc = bc_ref[...]
    b1 = b1_ref[...]
    w2 = w2_ref[...]
    b2 = b2_ref[...]

    for b in range(B):                       # static unroll, tiny batch
        # conv as GEMM; max over the 4 pool branches BEFORE bias + tanh
        # (tanh is monotone and the bias is constant across branches).
        acc = jnp.dot(wc, p_ref[b, 0], preferred_element_type=jnp.float32)
        for t in range(1, 4):
            acc = jnp.maximum(
                acc, jnp.dot(wc, p_ref[b, t], preferred_element_type=jnp.float32))
        y = jnp.tanh(acc + bc)               # (C, M) pooled features

        # fc1 as a sum of per-channel GEMMs: avoids an in-kernel (C, M) ->
        # (C*M,) relayout; feature order c*M + m matches torch.flatten.
        h = b1                               # (1, F)
        for c in range(C):
            h = h + jnp.dot(y[c:c + 1, :], w1_ref[c],
                            preferred_element_type=jnp.float32)
        h = jnp.maximum(h, 0.0)              # ReLU
        o_ref[b:b + 1, :] = (
            jnp.dot(h, w2, preferred_element_type=jnp.float32) + b2)


# -------------------------------- wrapper -----------------------------------

def build_patches(x):
    """im2col for the 3x3/pad=1 conv, split by 2x2 max-pool branch.

    Pure data layout (no MACs).  Output (B, 4, 9, M) with
      [b, t, k, m] = xpad[b, 2*(m//14) + t//2 + k//3, 2*(m%14) + t%2 + k%3]
    """
    B = x.shape[0]
    xpad = jnp.pad(x[:, 0], ((0, 0), (1, 1), (1, 1)))          # (B, 30, 30)
    sub = {}
    for u in range(4):
        for v in range(4):
            s = jax.lax.slice(xpad, (0, u, v), (B, u + 27, v + 27), (1, 2, 2))
            sub[(u, v)] = s.reshape(B, M)                       # (B, 196)
    taps = [sub[(ti + dy, tj + dx)]
            for ti in range(2) for tj in range(2)
            for dy in range(3) for dx in range(3)]
    return jnp.stack(taps, axis=1).reshape(B, 4, 9, M)


def prepare_params(params):
    """One-time conversion of PyTorch-layout params to kernel layouts."""
    conv_w, conv_b, fc1_w, fc1_b, fc2_w, fc2_b = params
    C = conv_w.shape[0]
    nc = fc2_w.shape[0]
    F = fc1_w.shape[0]                                          # 100
    wc = conv_w.reshape(C, 9).astype(jnp.float32)               # (C, 9)
    bc = conv_b.reshape(C, 1).astype(jnp.float32)               # (C, 1)
    # torch flatten of (C,14,14) is c*196 + m -> per-channel (M, F) slabs
    w1 = jnp.transpose(fc1_w.reshape(F, C, M), (1, 2, 0))       # (C, M, F)
    w1 = jnp.pad(w1, ((0, 0), (0, 0), (0, FC1_PAD - F)))        # (C, M, 128)
    b1 = jnp.pad(fc1_b, (0, FC1_PAD - F)).reshape(1, FC1_PAD)   # (1, 128)
    w2 = jnp.pad(fc2_w.T, ((0, FC1_PAD - F), (0, 0)))           # (128, nc)
    b2 = fc2_b.reshape(1, nc)                                   # (1, nc)
    return wc, bc, w1, b1, w2, b2


def tiny_cnn_forward(x, prepared):
    """x: (B, 1, 28, 28) float32, prepared = prepare_params(torch-layout params)."""
    wc, bc, w1, b1, w2, b2 = prepared
    B = x.shape[0]
    nc = w2.shape[1]
    patches = build_patches(x)                                  # (B, 4, 9, M)
    return pl.pallas_call(
        tiny_cnn_kernel,
        out_shape=jax.ShapeDtypeStruct((B, nc), jnp.float32),
        in_specs=[pl.BlockSpec(memory_space=pltpu.MemorySpace.VMEM)] * 7,
        out_specs=pl.BlockSpec(memory_space=pltpu.MemorySpace.VMEM),
    )(patches, wc, bc, w1, b1, w2, b2)


# ------------------------- parameters & reference ---------------------------

def init_params(key, conv_channels=CONV_CHANNELS, num_classes=NUM_CLASSES):
    ks = jax.random.split(key, 6)

    def unif(k, shape, bound):
        return jax.random.uniform(k, shape, jnp.float32, -bound, bound)

    conv_w = unif(ks[0], (conv_channels, 1, 3, 3), 1.0 / 3.0)
    conv_b = unif(ks[1], (conv_channels,), 1.0 / 3.0)
    fin1 = conv_channels * POOL_HW * POOL_HW
    fc1_w = unif(ks[2], (FC1_OUT, fin1), 1.0 / math.sqrt(fin1))
    fc1_b = unif(ks[3], (FC1_OUT,), 1.0 / math.sqrt(fin1))
    fc2_w = unif(ks[4], (num_classes, FC1_OUT), 1.0 / math.sqrt(FC1_OUT))
    fc2_b = unif(ks[5], (num_classes,), 1.0 / math.sqrt(FC1_OUT))
    return conv_w, conv_b, fc1_w, fc1_b, fc2_w, fc2_b


def tiny_cnn_reference(x, params):
    conv_w, conv_b, fc1_w, fc1_b, fc2_w, fc2_b = params
    B = x.shape[0]
    hp = jax.lax.Precision.HIGHEST
    y = jax.lax.conv_general_dilated(
        x, conv_w, window_strides=(1, 1), padding=((1, 1), (1, 1)),
        dimension_numbers=('NCHW', 'OIHW', 'NCHW'),
        precision=hp) + conv_b.reshape(1, -1, 1, 1)
    y = jnp.tanh(y)
    pooled = y.reshape(B, -1, POOL_HW, 2, POOL_HW, 2).max(axis=(3, 5))
    flat = pooled.reshape(B, -1)
    h = jnp.maximum(jnp.dot(flat, fc1_w.T, precision=hp) + fc1_b, 0.0)
    return jnp.dot(h, fc2_w.T, precision=hp) + fc2_b


# ----------------------------------- main ------------------------------------

if __name__ == "__main__":
    key = jax.random.PRNGKey(0)
    k_param, k_x = jax.random.split(key)
    params = init_params(k_param)
    x = jax.random.normal(k_x, (2, 1, H, W), jnp.float32)

    prepared = prepare_params(params)          # one-time weight prep (hoisted)
    fwd = jax.jit(tiny_cnn_forward)
    out = jax.block_until_ready(fwd(x, prepared))

    ref = tiny_cnn_reference(x, params)
    err = float(jnp.max(jnp.abs(out - ref)))
    assert out.shape == (2, NUM_CLASSES), out.shape
    assert err < 2e-2, f"mismatch vs reference: max abs err = {err}"
    print("KERNEL_OK")
</pallas_src>

<mosaic_0001>
module attributes {stable_mosaic.version = 11 : i64} {
  func.func @tiny_cnn_kernel(%arg0: memref<2x4x9x196xf32, #tpu.memory_space<vmem>>, %arg1: memref<10x9xf32, #tpu.memory_space<vmem>>, %arg2: memref<10x1xf32, #tpu.memory_space<vmem>>, %arg3: memref<10x196x128xf32, #tpu.memory_space<vmem>>, %arg4: memref<1x128xf32, #tpu.memory_space<vmem>>, %arg5: memref<128x10xf32, #tpu.memory_space<vmem>>, %arg6: memref<1x10xf32, #tpu.memory_space<vmem>>, %arg7: memref<2x10xf32, #tpu.memory_space<vmem>>) attributes {dimension_semantics = [], scalar_prefetch = 0 : i64, scratch_operands = 0 : i64, tpu.core_type = #tpu.core_type<tc>} {
    %c0 = arith.constant 0 : index
    %c0_0 = arith.constant 0 : index
    %0 = vector.load %arg1[%c0, %c0_0] : memref<10x9xf32, #tpu.memory_space<vmem>>, vector<10x9xf32>
    %c0_1 = arith.constant 0 : index
    %c0_2 = arith.constant 0 : index
    %1 = vector.load %arg2[%c0_1, %c0_2] : memref<10x1xf32, #tpu.memory_space<vmem>>, vector<10x1xf32>
    %c0_3 = arith.constant 0 : index
    %c0_4 = arith.constant 0 : index
    %2 = vector.load %arg4[%c0_3, %c0_4] : memref<1x128xf32, #tpu.memory_space<vmem>>, vector<1x128xf32>
    %c0_5 = arith.constant 0 : index
    %c0_6 = arith.constant 0 : index
    %3 = vector.load %arg5[%c0_5, %c0_6] : memref<128x10xf32, #tpu.memory_space<vmem>>, vector<128x10xf32>
    %c0_7 = arith.constant 0 : index
    %c0_8 = arith.constant 0 : index
    %4 = vector.load %arg6[%c0_7, %c0_8] : memref<1x10xf32, #tpu.memory_space<vmem>>, vector<1x10xf32>
    %c0_9 = arith.constant 0 : index
    %c0_10 = arith.constant 0 : index
    %c0_11 = arith.constant 0 : index
    %c0_12 = arith.constant 0 : index
    %5 = vector.load %arg0[%c0_9, %c0_10, %c0_11, %c0_12] : memref<2x4x9x196xf32, #tpu.memory_space<vmem>>, vector<1x1x9x196xf32>
    %6 = vector.shape_cast %5 : vector<1x1x9x196xf32> to vector<9x196xf32>
    %cst = arith.constant dense<0.000000e+00> : vector<10x196xf32>
    %7 = tpu.matmul %0, %6, %cst {dimension_numbers = #tpu.dot_dimension_numbers<[1], [0], [0], [1], [0, 0, 1, 1], [], []>} : vector<10x9xf32>, vector<9x196xf32>, vector<10x196xf32> -> vector<10x196xf32>
    %c0_13 = arith.constant 0 : index
    %c1 = arith.constant 1 : index
    %c0_14 = arith.constant 0 : index
    %c0_15 = arith.constant 0 : index
    %8 = vector.load %arg0[%c0_13, %c1, %c0_14, %c0_15] : memref<2x4x9x196xf32, #tpu.memory_space<vmem>>, vector<1x1x9x196xf32>
    %9 = vector.shape_cast %8 : vector<1x1x9x196xf32> to vector<9x196xf32>
    %cst_16 = arith.constant dense<0.000000e+00> : vector<10x196xf32>
    %10 = tpu.matmul %0, %9, %cst_16 {dimension_numbers = #tpu.dot_dimension_numbers<[1], [0], [0], [1], [0, 0, 1, 1], [], []>} : vector<10x9xf32>, vector<9x196xf32>, vector<10x196xf32> -> vector<10x196xf32>
    %11 = arith.maximumf %7, %10 : vector<10x196xf32>
    %c0_17 = arith.constant 0 : index
    %c2 = arith.constant 2 : index
    %c0_18 = arith.constant 0 : index
    %c0_19 = arith.constant 0 : index
    %12 = vector.load %arg0[%c0_17, %c2, %c0_18, %c0_19] : memref<2x4x9x196xf32, #tpu.memory_space<vmem>>, vector<1x1x9x196xf32>
    %13 = vector.shape_cast %12 : vector<1x1x9x196xf32> to vector<9x196xf32>
    %cst_20 = arith.constant dense<0.000000e+00> : vector<10x196xf32>
    %14 = tpu.matmul %0, %13, %cst_20 {dimension_numbers = #tpu.dot_dimension_numbers<[1], [0], [0], [1], [0, 0, 1, 1], [], []>} : vector<10x9xf32>, vector<9x196xf32>, vector<10x196xf32> -> vector<10x196xf32>
    %15 = arith.maximumf %11, %14 : vector<10x196xf32>
    %c0_21 = arith.constant 0 : index
    %c3 = arith.constant 3 : index
    %c0_22 = arith.constant 0 : index
    %c0_23 = arith.constant 0 : index
    %16 = vector.load %arg0[%c0_21, %c3, %c0_22, %c0_23] : memref<2x4x9x196xf32, #tpu.memory_space<vmem>>, vector<1x1x9x196xf32>
    %17 = vector.shape_cast %16 : vector<1x1x9x196xf32> to vector<9x196xf32>
    %cst_24 = arith.constant dense<0.000000e+00> : vector<10x196xf32>
    %18 = tpu.matmul %0, %17, %cst_24 {dimension_numbers = #tpu.dot_dimension_numbers<[1], [0], [0], [1], [0, 0, 1, 1], [], []>} : vector<10x9xf32>, vector<9x196xf32>, vector<10x196xf32> -> vector<10x196xf32>
    %19 = arith.maximumf %15, %18 : vector<10x196xf32>
    %20 = vector.broadcast %1 : vector<10x1xf32> to vector<10x196xf32>
    %21 = arith.addf %19, %20 : vector<10x196xf32>
    %22 = math.tanh %21 : vector<10x196xf32>
    %23 = vector.extract_strided_slice %22 {offsets = [0, 0], sizes = [1, 196], strides = [1, 1]} : vector<10x196xf32> to vector<1x196xf32>
    %c0_25 = arith.constant 0 : index
    %c0_26 = arith.constant 0 : index
    %c0_27 = arith.constant 0 : index
    %24 = vector.load %arg3[%c0_25, %c0_26, %c0_27] : memref<10x196x128xf32, #tpu.memory_space<vmem>>, vector<1x196x128xf32>
    %25 = vector.shape_cast %24 : vector<1x196x128xf32> to vector<196x128xf32>
    %cst_28 = arith.constant dense<0.000000e+00> : vector<1x128xf32>
    %26 = tpu.matmul %23, %25, %cst_28 {dimension_numbers = #tpu.dot_dimension_numbers<[1], [0], [0], [1], [0, 0, 1, 1], [], []>} : vector<1x196xf32>, vector<196x128xf32>, vector<1x128xf32> -> vector<1x128xf32>
    %27 = arith.addf %2, %26 : vector<1x128xf32>
    %28 = vector.extract_strided_slice %22 {offsets = [1, 0], sizes = [1, 196], strides = [1, 1]} : vector<10x196xf32> to vector<1x196xf32>
    %c1_29 = arith.constant 1 : index
    %c0_30 = arith.constant 0 : index
    %c0_31 = arith.constant 0 : index
    %29 = vector.load %arg3[%c1_29, %c0_30, %c0_31] : memref<10x196x128xf32, #tpu.memory_space<vmem>>, vector<1x196x128xf32>
    %30 = vector.shape_cast %29 : vector<1x196x128xf32> to vector<196x128xf32>
    %cst_32 = arith.constant dense<0.000000e+00> : vector<1x128xf32>
    %31 = tpu.matmul %28, %30, %cst_32 {dimension_numbers = #tpu.dot_dimension_numbers<[1], [0], [0], [1], [0, 0, 1, 1], [], []>} : vector<1x196xf32>, vector<196x128xf32>, vector<1x128xf32> -> vector<1x128xf32>
    %32 = arith.addf %27, %31 : vector<1x128xf32>
    %33 = vector.extract_strided_slice %22 {offsets = [2, 0], sizes = [1, 196], strides = [1, 1]} : vector<10x196xf32> to vector<1x196xf32>
    %c2_33 = arith.constant 2 : index
    %c0_34 = arith.constant 0 : index
    %c0_35 = arith.constant 0 : index
    %34 = vector.load %arg3[%c2_33, %c0_34, %c0_35] : memref<10x196x128xf32, #tpu.memory_space<vmem>>, vector<1x196x128xf32>
    %35 = vector.shape_cast %34 : vector<1x196x128xf32> to vector<196x128xf32>
    %cst_36 = arith.constant dense<0.000000e+00> : vector<1x128xf32>
    %36 = tpu.matmul %33, %35, %cst_36 {dimension_numbers = #tpu.dot_dimension_numbers<[1], [0], [0], [1], [0, 0, 1, 1], [], []>} : vector<1x196xf32>, vector<196x128xf32>, vector<1x128xf32> -> vector<1x128xf32>
    %37 = arith.addf %32, %36 : vector<1x128xf32>
    %38 = vector.extract_strided_slice %22 {offsets = [3, 0], sizes = [1, 196], strides = [1, 1]} : vector<10x196xf32> to vector<1x196xf32>
    %c3_37 = arith.constant 3 : index
    %c0_38 = arith.constant 0 : index
    %c0_39 = arith.constant 0 : index
    %39 = vector.load %arg3[%c3_37, %c0_38, %c0_39] : memref<10x196x128xf32, #tpu.memory_space<vmem>>, vector<1x196x128xf32>
    %40 = vector.shape_cast %39 : vector<1x196x128xf32> to vector<196x128xf32>
    %cst_40 = arith.constant dense<0.000000e+00> : vector<1x128xf32>
    %41 = tpu.matmul %38, %40, %cst_40 {dimension_numbers = #tpu.dot_dimension_numbers<[1], [0], [0], [1], [0, 0, 1, 1], [], []>} : vector<1x196xf32>, vector<196x128xf32>, vector<1x128xf32> -> vector<1x128xf32>
    %42 = arith.addf %37, %41 : vector<1x128xf32>
    %43 = vector.extract_strided_slice %22 {offsets = [4, 0], sizes = [1, 196], strides = [1, 1]} : vector<10x196xf32> to vector<1x196xf32>
    %c4 = arith.constant 4 : index
    %c0_41 = arith.constant 0 : index
    %c0_42 = arith.constant 0 : index
    %44 = vector.load %arg3[%c4, %c0_41, %c0_42] : memref<10x196x128xf32, #tpu.memory_space<vmem>>, vector<1x196x128xf32>
    %45 = vector.shape_cast %44 : vector<1x196x128xf32> to vector<196x128xf32>
    %cst_43 = arith.constant dense<0.000000e+00> : vector<1x128xf32>
    %46 = tpu.matmul %43, %45, %cst_43 {dimension_numbers = #tpu.dot_dimension_numbers<[1], [0], [0], [1], [0, 0, 1, 1], [], []>} : vector<1x196xf32>, vector<196x128xf32>, vector<1x128xf32> -> vector<1x128xf32>
    %47 = arith.addf %42, %46 : vector<1x128xf32>
    %48 = vector.extract_strided_slice %22 {offsets = [5, 0], sizes = [1, 196], strides = [1, 1]} : vector<10x196xf32> to vector<1x196xf32>
    %c5 = arith.constant 5 : index
    %c0_44 = arith.constant 0 : index
    %c0_45 = arith.constant 0 : index
    %49 = vector.load %arg3[%c5, %c0_44, %c0_45] : memref<10x196x128xf32, #tpu.memory_space<vmem>>, vector<1x196x128xf32>
    %50 = vector.shape_cast %49 : vector<1x196x128xf32> to vector<196x128xf32>
    %cst_46 = arith.constant dense<0.000000e+00> : vector<1x128xf32>
    %51 = tpu.matmul %48, %50, %cst_46 {dimension_numbers = #tpu.dot_dimension_numbers<[1], [0], [0], [1], [0, 0, 1, 1], [], []>} : vector<1x196xf32>, vector<196x128xf32>, vector<1x128xf32> -> vector<1x128xf32>
    %52 = arith.addf %47, %51 : vector<1x128xf32>
    %53 = vector.extract_strided_slice %22 {offsets = [6, 0], sizes = [1, 196], strides = [1, 1]} : vector<10x196xf32> to vector<1x196xf32>
    %c6 = arith.constant 6 : index
    %c0_47 = arith.constant 0 : index
    %c0_48 = arith.constant 0 : index
    %54 = vector.load %arg3[%c6, %c0_47, %c0_48] : memref<10x196x128xf32, #tpu.memory_space<vmem>>, vector<1x196x128xf32>
    %55 = vector.shape_cast %54 : vector<1x196x128xf32> to vector<196x128xf32>
    %cst_49 = arith.constant dense<0.000000e+00> : vector<1x128xf32>
    %56 = tpu.matmul %53, %55, %cst_49 {dimension_numbers = #tpu.dot_dimension_numbers<[1], [0], [0], [1], [0, 0, 1, 1], [], []>} : vector<1x196xf32>, vector<196x128xf32>, vector<1x128xf32> -> vector<1x128xf32>
    %57 = arith.addf %52, %56 : vector<1x128xf32>
    %58 = vector.extract_strided_slice %22 {offsets = [7, 0], sizes = [1, 196], strides = [1, 1]} : vector<10x196xf32> to vector<1x196xf32>
    %c7 = arith.constant 7 : index
    %c0_50 = arith.constant 0 : index
    %c0_51 = arith.constant 0 : index
    %59 = vector.load %arg3[%c7, %c0_50, %c0_51] : memref<10x196x128xf32, #tpu.memory_space<vmem>>, vector<1x196x128xf32>
    %60 = vector.shape_cast %59 : vector<1x196x128xf32> to vector<196x128xf32>
    %cst_52 = arith.constant dense<0.000000e+00> : vector<1x128xf32>
    %61 = tpu.matmul %58, %60, %cst_52 {dimension_numbers = #tpu.dot_dimension_numbers<[1], [0], [0], [1], [0, 0, 1, 1], [], []>} : vector<1x196xf32>, vector<196x128xf32>, vector<1x128xf32> -> vector<1x128xf32>
    %62 = arith.addf %57, %61 : vector<1x128xf32>
    %63 = vector.extract_strided_slice %22 {offsets = [8, 0], sizes = [1, 196], strides = [1, 1]} : vector<10x196xf32> to vector<1x196xf32>
    %c8 = arith.constant 8 : index
    %c0_53 = arith.constant 0 : index
    %c0_54 = arith.constant 0 : index
    %64 = vector.load %arg3[%c8, %c0_53, %c0_54] : memref<10x196x128xf32, #tpu.memory_space<vmem>>, vector<1x196x128xf32>
    %65 = vector.shape_cast %64 : vector<1x196x128xf32> to vector<196x128xf32>
    %cst_55 = arith.constant dense<0.000000e+00> : vector<1x128xf32>
    %66 = tpu.matmul %63, %65, %cst_55 {dimension_numbers = #tpu.dot_dimension_numbers<[1], [0], [0], [1], [0, 0, 1, 1], [], []>} : vector<1x196xf32>, vector<196x128xf32>, vector<1x128xf32> -> vector<1x128xf32>
    %67 = arith.addf %62, %66 : vector<1x128xf32>
    %68 = vector.extract_strided_slice %22 {offsets = [9, 0], sizes = [1, 196], strides = [1, 1]} : vector<10x196xf32> to vector<1x196xf32>
    %c9 = arith.constant 9 : index
    %c0_56 = arith.constant 0 : index
    %c0_57 = arith.constant 0 : index
    %69 = vector.load %arg3[%c9, %c0_56, %c0_57] : memref<10x196x128xf32, #tpu.memory_space<vmem>>, vector<1x196x128xf32>
    %70 = vector.shape_cast %69 : vector<1x196x128xf32> to vector<196x128xf32>
    %cst_58 = arith.constant dense<0.000000e+00> : vector<1x128xf32>
    %71 = tpu.matmul %68, %70, %cst_58 {dimension_numbers = #tpu.dot_dimension_numbers<[1], [0], [0], [1], [0, 0, 1, 1], [], []>} : vector<1x196xf32>, vector<196x128xf32>, vector<1x128xf32> -> vector<1x128xf32>
    %72 = arith.addf %67, %71 : vector<1x128xf32>
    %cst_59 = arith.constant 0.000000e+00 : f32
    %73 = vector.broadcast %cst_59 : f32 to vector<1x128xf32>
    %74 = arith.maximumf %72, %73 : vector<1x128xf32>
    %cst_60 = arith.constant dense<0.000000e+00> : vector<1x10xf32>
    %75 = tpu.matmul %74, %3, %cst_60 {dimension_numbers = #tpu.dot_dimension_numbers<[1], [0], [0], [1], [0, 0, 1, 1], [], []>} : vector<1x128xf32>, vector<128x10xf32>, vector<1x10xf32> -> vector<1x10xf32>
    %76 = arith.addf %75, %4 : vector<1x10xf32>
    %c0_61 = arith.constant 0 : index
    %c0_62 = arith.constant 0 : index
    %77 = vector.load %arg7[%c0_61, %c0_62] : memref<2x10xf32, #tpu.memory_space<vmem>>, vector<1x10xf32>
    tpu.vector_store %arg7[%c0_61, %c0_62], %76 {strides = array<i32>} : memref<2x10xf32, #tpu.memory_space<vmem>>, vector<1x10xf32>,
    %c1_63 = arith.constant 1 : index
    %c0_64 = arith.constant 0 : index
    %c0_65 = arith.constant 0 : index
    %c0_66 = arith.constant 0 : index
    %78 = vector.load %arg0[%c1_63, %c0_64, %c0_65, %c0_66] : memref<2x4x9x196xf32, #tpu.memory_space<vmem>>, vector<1x1x9x196xf32>
    %79 = vector.shape_cast %78 : vector<1x1x9x196xf32> to vector<9x196xf32>
    %cst_67 = arith.constant dense<0.000000e+00> : vector<10x196xf32>
    %80 = tpu.matmul %0, %79, %cst_67 {dimension_numbers = #tpu.dot_dimension_numbers<[1], [0], [0], [1], [0, 0, 1, 1], [], []>} : vector<10x9xf32>, vector<9x196xf32>, vector<10x196xf32> -> vector<10x196xf32>
    %c1_68 = arith.constant 1 : index
    %c1_69 = arith.constant 1 : index
    %c0_70 = arith.constant 0 : index
    %c0_71 = arith.constant 0 : index
    %81 = vector.load %arg0[%c1_68, %c1_69, %c0_70, %c0_71] : memref<2x4x9x196xf32, #tpu.memory_space<vmem>>, vector<1x1x9x196xf32>
    %82 = vector.shape_cast %81 : vector<1x1x9x196xf32> to vector<9x196xf32>
    %cst_72 = arith.constant dense<0.000000e+00> : vector<10x196xf32>
    %83 = tpu.matmul %0, %82, %cst_72 {dimension_numbers = #tpu.dot_dimension_numbers<[1], [0], [0], [1], [0, 0, 1, 1], [], []>} : vector<10x9xf32>, vector<9x196xf32>, vector<10x196xf32> -> vector<10x196xf32>
    %84 = arith.maximumf %80, %83 : vector<10x196xf32>
    %c1_73 = arith.constant 1 : index
    %c2_74 = arith.constant 2 : index
    %c0_75 = arith.constant 0 : index
    %c0_76 = arith.constant 0 : index
    %85 = vector.load %arg0[%c1_73, %c2_74, %c0_75, %c0_76] : memref<2x4x9x196xf32, #tpu.memory_space<vmem>>, vector<1x1x9x196xf32>
    %86 = vector.shape_cast %85 : vector<1x1x9x196xf32> to vector<9x196xf32>
    %cst_77 = arith.constant dense<0.000000e+00> : vector<10x196xf32>
    %87 = tpu.matmul %0, %86, %cst_77 {dimension_numbers = #tpu.dot_dimension_numbers<[1], [0], [0], [1], [0, 0, 1, 1], [], []>} : vector<10x9xf32>, vector<9x196xf32>, vector<10x196xf32> -> vector<10x196xf32>
    %88 = arith.maximumf %84, %87 : vector<10x196xf32>
    %c1_78 = arith.constant 1 : index
    %c3_79 = arith.constant 3 : index
    %c0_80 = arith.constant 0 : index
    %c0_81 = arith.constant 0 : index
    %89 = vector.load %arg0[%c1_78, %c3_79, %c0_80, %c0_81] : memref<2x4x9x196xf32, #tpu.memory_space<vmem>>, vector<1x1x9x196xf32>
    %90 = vector.shape_cast %89 : vector<1x1x9x196xf32> to vector<9x196xf32>
    %cst_82 = arith.constant dense<0.000000e+00> : vector<10x196xf32>
    %91 = tpu.matmul %0, %90, %cst_82 {dimension_numbers = #tpu.dot_dimension_numbers<[1], [0], [0], [1], [0, 0, 1, 1], [], []>} : vector<10x9xf32>, vector<9x196xf32>, vector<10x196xf32> -> vector<10x196xf32>
    %92 = arith.maximumf %88, %91 : vector<10x196xf32>
    %93 = vector.broadcast %1 : vector<10x1xf32> to vector<10x196xf32>
    %94 = arith.addf %92, %93 : vector<10x196xf32>
    %95 = math.tanh %94 : vector<10x196xf32>
    %96 = vector.extract_strided_slice %95 {offsets = [0, 0], sizes = [1, 196], strides = [1, 1]} : vector<10x196xf32> to vector<1x196xf32>
    %c0_83 = arith.constant 0 : index
    %c0_84 = arith.constant 0 : index
    %c0_85 = arith.constant 0 : index
    %97 = vector.load %arg3[%c0_83, %c0_84, %c0_85] : memref<10x196x128xf32, #tpu.memory_space<vmem>>, vector<1x196x128xf32>
    %98 = vector.shape_cast %97 : vector<1x196x128xf32> to vector<196x128xf32>
    %cst_86 = arith.constant dense<0.000000e+00> : vector<1x128xf32>
    %99 = tpu.matmul %96, %98, %cst_86 {dimension_numbers = #tpu.dot_dimension_numbers<[1], [0], [0], [1], [0, 0, 1, 1], [], []>} : vector<1x196xf32>, vector<196x128xf32>, vector<1x128xf32> -> vector<1x128xf32>
    %100 = arith.addf %2, %99 : vector<1x128xf32>
    %101 = vector.extract_strided_slice %95 {offsets = [1, 0], sizes = [1, 196], strides = [1, 1]} : vector<10x196xf32> to vector<1x196xf32>
    %c1_87 = arith.constant 1 : index
    %c0_88 = arith.constant 0 : index
    %c0_89 = arith.constant 0 : index
    %102 = vector.load %arg3[%c1_87, %c0_88, %c0_89] : memref<10x196x128xf32, #tpu.memory_space<vmem>>, vector<1x196x128xf32>
    %103 = vector.shape_cast %102 : vector<1x196x128xf32> to vector<196x128xf32>
    %cst_90 = arith.constant dense<0.000000e+00> : vector<1x128xf32>
    %104 = tpu.matmul %101, %103, %cst_90 {dimension_numbers = #tpu.dot_dimension_numbers<[1], [0], [0], [1], [0, 0, 1, 1], [], []>} : vector<1x196xf32>, vector<196x128xf32>, vector<1x128xf32> -> vector<1x128xf32>
    %105 = arith.addf %100, %104 : vector<1x128xf32>
    %106 = vector.extract_strided_slice %95 {offsets = [2, 0], sizes = [1, 196], strides = [1, 1]} : vector<10x196xf32> to vector<1x196xf32>
    %c2_91 = arith.constant 2 : index
    %c0_92 = arith.constant 0 : index
    %c0_93 = arith.constant 0 : index
    %107 = vector.load %arg3[%c2_91, %c0_92, %c0_93] : memref<10x196x128xf32, #tpu.memory_space<vmem>>, vector<1x196x128xf32>
    %108 = vector.shape_cast %107 : vector<1x196x128xf32> to vector<196x128xf32>
    %cst_94 = arith.constant dense<0.000000e+00> : vector<1x128xf32>
    %109 = tpu.matmul %106, %108, %cst_94 {dimension_numbers = #tpu.dot_dimension_numbers<[1], [0], [0], [1], [0, 0, 1, 1], [], []>} : vector<1x196xf32>, vector<196x128xf32>, vector<1x128xf32> -> vector<1x128xf32>
    %110 = arith.addf %105, %109 : vector<1x128xf32>
    %111 = vector.extract_strided_slice %95 {offsets = [3, 0], sizes = [1, 196], strides = [1, 1]} : vector<10x196xf32> to vector<1x196xf32>
    %c3_95 = arith.constant 3 : index
    %c0_96 = arith.constant 0 : index
    %c0_97 = arith.constant 0 : index
    %112 = vector.load %arg3[%c3_95, %c0_96, %c0_97] : memref<10x196x128xf32, #tpu.memory_space<vmem>>, vector<1x196x128xf32>
    %113 = vector.shape_cast %112 : vector<1x196x128xf32> to vector<196x128xf32>
    %cst_98 = arith.constant dense<0.000000e+00> : vector<1x128xf32>
    %114 = tpu.matmul %111, %113, %cst_98 {dimension_numbers = #tpu.dot_dimension_numbers<[1], [0], [0], [1], [0, 0, 1, 1], [], []>} : vector<1x196xf32>, vector<196x128xf32>, vector<1x128xf32> -> vector<1x128xf32>
    %115 = arith.addf %110, %114 : vector<1x128xf32>
    %116 = vector.extract_strided_slice %95 {offsets = [4, 0], sizes = [1, 196], strides = [1, 1]} : vector<10x196xf32> to vector<1x196xf32>
    %c4_99 = arith.constant 4 : index
    %c0_100 = arith.constant 0 : index
    %c0_101 = arith.constant 0 : index
    %117 = vector.load %arg3[%c4_99, %c0_100, %c0_101] : memref<10x196x128xf32, #tpu.memory_space<vmem>>, vector<1x196x128xf32>
    %118 = vector.shape_cast %117 : vector<1x196x128xf32> to vector<196x128xf32>
    %cst_102 = arith.constant dense<0.000000e+00> : vector<1x128xf32>
    %119 = tpu.matmul %116, %118, %cst_102 {dimension_numbers = #tpu.dot_dimension_numbers<[1], [0], [0], [1], [0, 0, 1, 1], [], []>} : vector<1x196xf32>, vector<196x128xf32>, vector<1x128xf32> -> vector<1x128xf32>
    %120 = arith.addf %115, %119 : vector<1x128xf32>
    %121 = vector.extract_strided_slice %95 {offsets = [5, 0], sizes = [1, 196], strides = [1, 1]} : vector<10x196xf32> to vector<1x196xf32>
    %c5_103 = arith.constant 5 : index
    %c0_104 = arith.constant 0 : index
    %c0_105 = arith.constant 0 : index
    %122 = vector.load %arg3[%c5_103, %c0_104, %c0_105] : memref<10x196x128xf32, #tpu.memory_space<vmem>>, vector<1x196x128xf32>
    %123 = vector.shape_cast %122 : vector<1x196x128xf32> to vector<196x128xf32>
    %cst_106 = arith.constant dense<0.000000e+00> : vector<1x128xf32>
    %124 = tpu.matmul %121, %123, %cst_106 {dimension_numbers = #tpu.dot_dimension_numbers<[1], [0], [0], [1], [0, 0, 1, 1], [], []>} : vector<1x196xf32>, vector<196x128xf32>, vector<1x128xf32> -> vector<1x128xf32>
    %125 = arith.addf %120, %124 : vector<1x128xf32>
    %126 = vector.extract_strided_slice %95 {offsets = [6, 0], sizes = [1, 196], strides = [1, 1]} : vector<10x196xf32> to vector<1x196xf32>
    %c6_107 = arith.constant 6 : index
    %c0_108 = arith.constant 0 : index
    %c0_109 = arith.constant 0 : index
    %127 = vector.load %arg3[%c6_107, %c0_108, %c0_109] : memref<10x196x128xf32, #tpu.memory_space<vmem>>, vector<1x196x128xf32>
    %128 = vector.shape_cast %127 : vector<1x196x128xf32> to vector<196x128xf32>
    %cst_110 = arith.constant dense<0.000000e+00> : vector<1x128xf32>
    %129 = tpu.matmul %126, %128, %cst_110 {dimension_numbers = #tpu.dot_dimension_numbers<[1], [0], [0], [1], [0, 0, 1, 1], [], []>} : vector<1x196xf32>, vector<196x128xf32>, vector<1x128xf32> -> vector<1x128xf32>
    %130 = arith.addf %125, %129 : vector<1x128xf32>
    %131 = vector.extract_strided_slice %95 {offsets = [7, 0], sizes = [1, 196], strides = [1, 1]} : vector<10x196xf32> to vector<1x196xf32>
    %c7_111 = arith.constant 7 : index
    %c0_112 = arith.constant 0 : index
    %c0_113 = arith.constant 0 : index
    %132 = vector.load %arg3[%c7_111, %c0_112, %c0_113] : memref<10x196x128xf32, #tpu.memory_space<vmem>>, vector<1x196x128xf32>
    %133 = vector.shape_cast %132 : vector<1x196x128xf32> to vector<196x128xf32>
    %cst_114 = arith.constant dense<0.000000e+00> : vector<1x128xf32>
    %134 = tpu.matmul %131, %133, %cst_114 {dimension_numbers = #tpu.dot_dimension_numbers<[1], [0], [0], [1], [0, 0, 1, 1], [], []>} : vector<1x196xf32>, vector<196x128xf32>, vector<1x128xf32> -> vector<1x128xf32>
    %135 = arith.addf %130, %134 : vector<1x128xf32>
    %136 = vector.extract_strided_slice %95 {offsets = [8, 0], sizes = [1, 196], strides = [1, 1]} : vector<10x196xf32> to vector<1x196xf32>
    %c8_115 = arith.constant 8 : index
    %c0_116 = arith.constant 0 : index
    %c0_117 = arith.constant 0 : index
    %137 = vector.load %arg3[%c8_115, %c0_116, %c0_117] : memref<10x196x128xf32, #tpu.memory_space<vmem>>, vector<1x196x128xf32>
    %138 = vector.shape_cast %137 : vector<1x196x128xf32> to vector<196x128xf32>
    %cst_118 = arith.constant dense<0.000000e+00> : vector<1x128xf32>
    %139 = tpu.matmul %136, %138, %cst_118 {dimension_numbers = #tpu.dot_dimension_numbers<[1], [0], [0], [1], [0, 0, 1, 1], [], []>} : vector<1x196xf32>, vector<196x128xf32>, vector<1x128xf32> -> vector<1x128xf32>
    %140 = arith.addf %135, %139 : vector<1x128xf32>
    %141 = vector.extract_strided_slice %95 {offsets = [9, 0], sizes = [1, 196], strides = [1, 1]} : vector<10x196xf32> to vector<1x196xf32>
    %c9_119 = arith.constant 9 : index
    %c0_120 = arith.constant 0 : index
    %c0_121 = arith.constant 0 : index
    %142 = vector.load %arg3[%c9_119, %c0_120, %c0_121] : memref<10x196x128xf32, #tpu.memory_space<vmem>>, vector<1x196x128xf32>
    %143 = vector.shape_cast %142 : vector<1x196x128xf32> to vector<196x128xf32>
    %cst_122 = arith.constant dense<0.000000e+00> : vector<1x128xf32>
    %144 = tpu.matmul %141, %143, %cst_122 {dimension_numbers = #tpu.dot_dimension_numbers<[1], [0], [0], [1], [0, 0, 1, 1], [], []>} : vector<1x196xf32>, vector<196x128xf32>, vector<1x128xf32> -> vector<1x128xf32>
    %145 = arith.addf %140, %144 : vector<1x128xf32>
    %cst_123 = arith.constant 0.000000e+00 : f32
    %146 = vector.broadcast %cst_123 : f32 to vector<1x128xf32>
    %147 = arith.maximumf %145, %146 : vector<1x128xf32>
    %cst_124 = arith.constant dense<0.000000e+00> : vector<1x10xf32>
    %148 = tpu.matmul %147, %3, %cst_124 {dimension_numbers = #tpu.dot_dimension_numbers<[1], [0], [0], [1], [0, 0, 1, 1], [], []>} : vector<1x128xf32>, vector<128x10xf32>, vector<1x10xf32> -> vector<1x10xf32>
    %149 = arith.addf %148, %4 : vector<1x10xf32>
    %c1_125 = arith.constant 1 : index
    %c0_126 = arith.constant 0 : index
    %150 = vector.load %arg7[%c1_125, %c0_126] : memref<2x10xf32, #tpu.memory_space<vmem>>, vector<1x10xf32>
    tpu.vector_store %arg7[%c1_125, %c0_126], %149 {strides = array<i32>} : memref<2x10xf32, #tpu.memory_space<vmem>>, vector<1x10xf32>,
    return
  }
}

</mosaic_0001>

<llo_original>
// kernel: tiny_cnn_forward.1
$region0: #{tiny_cnn_forward.1}
  #allocation0 [shape = 'u32[]', space=smem, size = 0x4, offset = 0x4, fixed_abs, tag = 'smem constant byte address 0x4 - core index']
  #allocation1 [shape = 'u32[144,128]{1,0:T(1,128)}', space=vmem, size = 0x12000, scoped, tag = 'internal scratch']
  %s0 = inlined_call_operand.vmem [shape: f32[2,4,9,196], index: 0, kind: input, shape index: {}]
  %s1 = inlined_call_operand.vmem [shape: f32[10,9], index: 1, kind: input, shape index: {}]
  %s2 = inlined_call_operand.vmem [shape: f32[10,1], index: 2, kind: input, shape index: {}]
  %s3 = inlined_call_operand.hbm [shape: f32[10,196,128], index: 3, kind: input, shape index: {}]
  %s4 = inlined_call_operand.vmem [shape: f32[1,128], index: 4, kind: input, shape index: {}]
  %s5 = inlined_call_operand.vmem [shape: f32[128,10], index: 5, kind: input, shape index: {}]
  %s6 = inlined_call_operand.vmem [shape: f32[1,10], index: 6, kind: input, shape index: {}]
  %s7 = inlined_call_operand.hbm [shape: f32[2,10], index: 7, kind: output, shape index: {}]
  %s8 = sld [smem:[#allocation0]]
  $region42: #{tiny_cnn_forward.1} parent=0
    _
  %s10 = ssub.s32 1, %s8
  %s11 = scalar_select 0, %s10, %s8
  $region1: #{tiny_cnn_forward.1} parent=0
    #allocation2 [shape = 'u8[1024000]{0}', space=vmem, size = 0xfa000, scoped, tag = 'input window, operand 3, single buffered']
    #allocation3 [shape = 's32[1]{0}', space=sflag, size = 0x4, scoped, tag = 'scoped memory for tiny_cnn_forward.1']
    #allocation4 [shape = 's32[1]{0}', space=sflag, size = 0x4, scoped, tag = 'scoped memory for tiny_cnn_forward.1']
    #allocation5 [shape = 'u8[1024]{0}', space=vmem, size = 0x400, scoped, tag = 'output window, operand 0, single buffered']
    %12 = vsyncpa [#allocation3], 0
    %13 = vsyncpa [#allocation4], 0
    // Predicated region
    $region2: #{tiny_cnn_forward.1} parent=1 // pred_check
      _
    $region3: #{tiny_cnn_forward.1} parent=1 // pred_check_branch
      %15 = sbr.rel (0) target = $region5
    $region4: #{tiny_cnn_forward.1} parent=1 // pred_region
      _
    $region5: #{tiny_cnn_forward.1} parent=1 // pred_fallthru
      _
    // Predicated region
    $region6: #{tiny_cnn_forward.1} parent=1 // pred_check
      _
    $region7: #{tiny_cnn_forward.1} parent=1 // pred_check_branch
      %17 = sbr.rel (0) target = $region9
    $region8: #{tiny_cnn_forward.1} parent=1 // pred_region
      _
    $region9: #{tiny_cnn_forward.1} parent=1 // pred_fallthru
      _
    // Predicated region
    $region10: #{tiny_cnn_forward.1} parent=1 // pred_check
      _
    $region11: #{tiny_cnn_forward.1} parent=1 // pred_check_branch
      %19 = sbr.rel (0) target = $region13
    $region12: #{tiny_cnn_forward.1} parent=1 // pred_region
      _
    $region13: #{tiny_cnn_forward.1} parent=1 // pred_fallthru
      _
    // Predicated region
    $region14: #{tiny_cnn_forward.1} parent=1 // pred_check
      _
    $region15: #{tiny_cnn_forward.1} parent=1 // pred_check_branch
      %21 = sbr.rel (0) target = $region17
    $region16: #{tiny_cnn_forward.1} parent=1 // pred_region
      %s23 = ssub.s32 32000, 32000
      %24 = vsyncadd [#allocation3], %s23
      %s25 = sshll.u32 [#allocation2], 4
      %s26 = int_to_ptr.vmem [resolvable:$true] %s25
      %31 = dma.hbm_to_vmem [thread:$0]  %s3, 32000, %s26, [#allocation3], 128, 128, 8
    $region17: #{tiny_cnn_forward.1} parent=1 // pred_fallthru
      _
    // Predicated region
    $region18: #{tiny_cnn_forward.1} parent=1 // pred_check
      _
    $region19: #{tiny_cnn_forward.1} parent=1 // pred_check_branch
      %33 = sbr.rel (0) target = $region21
    $region20: #{tiny_cnn_forward.1} parent=1 // pred_region
      _
    $region21: #{tiny_cnn_forward.1} parent=1 // pred_fallthru
      _
    // Predicated region
    $region22: #{tiny_cnn_forward.1} parent=1 // pred_check
      _
    $region23: #{tiny_cnn_forward.1} parent=1 // pred_check_branch
      %35 = sbr.rel (0) target = $region25
    $region24: #{tiny_cnn_forward.1} parent=1 // pred_region
      _
    $region25: #{tiny_cnn_forward.1} parent=1 // pred_fallthru
      _
    // Predicated region
    $region26: #{tiny_cnn_forward.1} parent=1 // pred_check
      _
    $region27: #{tiny_cnn_forward.1} parent=1 // pred_check_branch
      %37 = sbr.rel (0) target = $region29
    $region28: #{tiny_cnn_forward.1} parent=1 // pred_region
      _
    $region29: #{tiny_cnn_forward.1} parent=1 // pred_fallthru
      _
    // Predicated region
    $region30: #{tiny_cnn_forward.1} parent=1 // pred_check
      _
    $region31: #{tiny_cnn_forward.1} parent=1 // pred_check_branch
      %39 = sbr.rel (0) target = $region33
    $region32: #{tiny_cnn_forward.1} parent=1 // pred_region
      %40 = dma.done [#allocation3], 32000
    $region33: #{tiny_cnn_forward.1} parent=1 // pred_fallthru
      _
    %v41 = vld [vmem:[%s1] sm:$0xff]
    %v42 = vld [vmem:[%s1 + $0x8] sm:$0x3]
    %v43 = vld [vmem:[%s2] sm:$0xff]
    %v44 = vld [vmem:[%s2 + $0x8] sm:$0x3]
    %v45 = vld [vmem:[%s4] sm:$0x1]
    %v46 = vld [vmem:[%s5] sm:$0xff]
    %v47 = vld [vmem:[%s5 + $0x8] sm:$0xff]
    %v48 = vld [vmem:[%s5 + $0x10] sm:$0xff]
    %v49 = vld [vmem:[%s5 + $0x18] sm:$0xff]
    %v50 = vld [vmem:[%s5 + $0x20] sm:$0xff]
    %v51 = vld [vmem:[%s5 + $0x28] sm:$0xff]
    %v52 = vld [vmem:[%s5 + $0x30] sm:$0xff]
    %v53 = vld [vmem:[%s5 + $0x38] sm:$0xff]
    %v54 = vld [vmem:[%s5 + $0x40] sm:$0xff]
    %v55 = vld [vmem:[%s5 + $0x48] sm:$0xff]
    %v56 = vld [vmem:[%s5 + $0x50] sm:$0xff]
    %v57 = vld [vmem:[%s5 + $0x58] sm:$0xff]
    %v58 = vld [vmem:[%s5 + $0x60] sm:$0xff]
    %v59 = vld [vmem:[%s5 + $0x68] sm:$0xff]
    %v60 = vld [vmem:[%s5 + $0x70] sm:$0xff]
    %v61 = vld [vmem:[%s5 + $0x78] sm:$0xff]
    %v62 = vld [vmem:[%s6] sm:$0x1]
    %v63 = vld [vmem:[%s0] sm:$0xff]
    %v64 = vld [vmem:[%s0 + $0x8] sm:$0xff]
    %v65 = vld [vmem:[%s0 + $0x10] sm:$0x1]
    %v66 = vld [vmem:[%s0 + $0x18] sm:$0x1]
    %vm67 = vcmask 72704
    %v69 = vsel %vm67, %v41, 0
    %v72 = vsel %vm67, %v42, 0
    %vm74 = vcmask 1040384
    %v76 = vsel %vm74, %v65, 0
    %v79 = vsel %vm74, %v66, 0
    %81 = vmatprep.subr.mxu0 %v64
    %82 = vmatpush1.msra.mxu0 %v63
    %83 = vmatprep.subr.mxu0 %v79
    %84 = vmatpush1.msra.mxu0 %v76
    %85 = vmatprep.subr.mxu0 0.0
    %86 = vmatpush1.msra.mxu0 0.0
    %87 = vmatprep.subr.mxu0 0.0
    %88 = vmatpush1.msra.mxu0 0.0
    %89 = vmatprep.subr.mxu0 0.0
    %90 = vmatpush1.msra.mxu0 0.0
    %91 = vmatprep.subr.mxu0 0.0
    %92 = vmatpush1.msra.mxu0 0.0
    %93 = vmatprep.subr.mxu0 0.0
    %94 = vmatpush1.msra.mxu0 0.0
    %95 = vmatprep.subr.mxu0 0.0
    %96 = vmatpush1.msra.mxu0 0.0
    %97 = vmatprep.subr.mxu0 0.0
    %98 = vmatpush1.msra.mxu0 0.0
    %99 = vmatprep.subr.mxu0 0.0
    %100 = vmatpush1.msra.mxu0 0.0
    %101 = vmatprep.subr.mxu0 0.0
    %102 = vmatpush1.msra.mxu0 0.0
    %103 = vmatprep.subr.mxu0 0.0
    %104 = vmatpush1.msra.mxu0 0.0
    %105 = vmatprep.subr.mxu0 0.0
    %106 = vmatpush1.msra.mxu0 0.0
    %107 = vmatprep.subr.mxu0 0.0
    %108 = vmatpush1.msra.mxu0 0.0
    %109 = vmatprep.subr.mxu0 0.0
    %110 = vmatpush1.msra.mxu0 0.0
    %111 = vmatprep.subr.mxu0 0.0
    %112 = vmatpush1.msra.mxu0 0.0
    %113 = vmatprep.subr.mxu0 0.0
    %114 = vmatpush1.msra.mxu0 0.0
    %115 = vmatprep.subr.mxu0 0.0
    %116 = vmatpush1.msra.mxu0 0.0
    %117 = vmatprep.subr.mxu0 0.0
    %118 = vmatpush1.msra.mxu0 0.0
    %119 = vmatprep.subr.mxu0 0.0
    %120 = vmatpush1.msra.mxu0 0.0
    %121 = vmatprep.subr.mxu0 0.0
    %122 = vmatpush1.msra.mxu0 0.0
    %123 = vmatprep.subr.mxu0 0.0
    %124 = vmatpush1.msra.mxu0 0.0
    %125 = vmatprep.subr.mxu0 0.0
    %126 = vmatpush1.msra.mxu0 0.0
    %127 = vmatprep.subr.mxu0 0.0
    %128 = vmatpush1.msra.mxu0 0.0
    %129 = vmatprep.subr.mxu0 0.0
    %130 = vmatpush1.msra.mxu0 0.0
    %131 = vmatprep.subr.mxu0 0.0
    %132 = vmatpush1.msra.mxu0 0.0
    %133 = vmatprep.subr.mxu0 0.0
    %134 = vmatpush1.msra.mxu0 0.0
    %135 = vmatprep.subr.mxu0 0.0
    %136 = vmatpush1.msra.mxu0 0.0
    %137 = vmatprep.subr.mxu0 0.0
    %138 = vmatpush1.msra.mxu0 0.0
    %139 = vmatprep.subr.mxu0 0.0
    %140 = vmatpush1.msra.mxu0 0.0
    %141 = vmatprep.subr.mxu0 0.0
    %142 = vmatpush1.msra.mxu0 0.0
    %143 = vmatprep.subr.mxu0 0.0
    %144 = vmatpush1.msra.mxu0 0.0
    %145 = vmatprep.mubr.f32.mxu0 0.0
    %146 = vmatmul.mubr.f32.gmra.mrb[0].mxu0 %v69
    %v147 = vpop.f32.mrb[0].mxu0
    %v148 = vadd.f32 0.0, %v147
    %v149 = vpop.f32.mrb[0].mxu0
    %v150 = vadd.f32 0.0, %v149
    %151 = vmatprep.mubr.f32.mxu0 0.0
    %152 = vmatmul.mubr.f32.gmra.mrb[0].mxu0 %v72
    %v153 = vpop.f32.mrb[0].mxu0
    %v154 = vadd.f32 0.0, %v153
    %v155 = vpop.f32.mrb[0].mxu0
    %v156 = vadd.f32 0.0, %v155
    %157 = vdwg.mxu0
    %s158 = scalar_lea.vmem %s0, 32
    %v159 = vld [vmem:[%s158] sm:$0xff]
    %v160 = vld [vmem:[%s158 + $0x8] sm:$0xff]
    %v161 = vld [vmem:[%s158 + $0x10] sm:$0x1]
    %v162 = vld [vmem:[%s158 + $0x18] sm:$0x1]
    %v164 = vsel %vm74, %v161, 0
    %v167 = vsel %vm74, %v162, 0
    %169 = vmatprep.subr.mxu0 %v160
    %170 = vmatpush1.msra.mxu0 %v159
    %171 = vmatprep.subr.mxu0 %v167
    %172 = vmatpush1.msra.mxu0 %v164
    %173 = vmatprep.subr.mxu0 0.0
    %174 = vmatpush1.msra.mxu0 0.0
    %175 = vmatprep.subr.mxu0 0.0
    %176 = vmatpush1.msra.mxu0 0.0
    %177 = vmatprep.subr.mxu0 0.0
    %178 = vmatpush1.msra.mxu0 0.0
    %179 = vmatprep.subr.mxu0 0.0
    %180 = vmatpush1.msra.mxu0 0.0
    %181 = vmatprep.subr.mxu0 0.0
    %182 = vmatpush1.msra.mxu0 0.0
    %183 = vmatprep.subr.mxu0 0.0
    %184 = vmatpush1.msra.mxu0 0.0
    %185 = vmatprep.subr.mxu0 0.0
    %186 = vmatpush1.msra.mxu0 0.0
    %187 = vmatprep.subr.mxu0 0.0
    %188 = vmatpush1.msra.mxu0 0.0
    %189 = vmatprep.subr.mxu0 0.0
    %190 = vmatpush1.msra.mxu0 0.0
    %191 = vmatprep.subr.mxu0 0.0
    %192 = vmatpush1.msra.mxu0 0.0
    %193 = vmatprep.subr.mxu0 0.0
    %194 = vmatpush1.msra.mxu0 0.0
    %195 = vmatprep.subr.mxu0 0.0
    %196 = vmatpush1.msra.mxu0 0.0
    %197 = vmatprep.subr.mxu0 0.0
    %198 = vmatpush1.msra.mxu0 0.0
    %199 = vmatprep.subr.mxu0 0.0
    %200 = vmatpush1.msra.mxu0 0.0
    %201 = vmatprep.subr.mxu0 0.0
    %202 = vmatpush1.msra.mxu0 0.0
    %203 = vmatprep.subr.mxu0 0.0
    %204 = vmatpush1.msra.mxu0 0.0
    %205 = vmatprep.subr.mxu0 0.0
    %206 = vmatpush1.msra.mxu0 0.0
    %207 = vmatprep.subr.mxu0 0.0
    %208 = vmatpush1.msra.mxu0 0.0
    %209 = vmatprep.subr.mxu0 0.0
    %210 = vmatpush1.msra.mxu0 0.0
    %211 = vmatprep.subr.mxu0 0.0
    %212 = vmatpush1.msra.mxu0 0.0
    %213 = vmatprep.subr.mxu0 0.0
    %214 = vmatpush1.msra.mxu0 0.0
    %215 = vmatprep.subr.mxu0 0.0
    %216 = vmatpush1.msra.mxu0 0.0
    %217 = vmatprep.subr.mxu0 0.0
    %218 = vmatpush1.msra.mxu0 0.0
    %219 = vmatprep.subr.mxu0 0.0
    %220 = vmatpush1.msra.mxu0 0.0
    %221 = vmatprep.subr.mxu0 0.0
    %222 = vmatpush1.msra.mxu0 0.0
    %223 = vmatprep.subr.mxu0 0.0
    %224 = vmatpush1.msra.mxu0 0.0
    %225 = vmatprep.subr.mxu0 0.0
    %226 = vmatpush1.msra.mxu0 0.0
    %227 = vmatprep.subr.mxu0 0.0
    %228 = vmatpush1.msra.mxu0 0.0
    %229 = vmatprep.subr.mxu0 0.0
    %230 = vmatpush1.msra.mxu0 0.0
    %231 = vmatprep.subr.mxu0 0.0
    %232 = vmatpush1.msra.mxu0 0.0
    %233 = vmatprep.mubr.f32.mxu0 0.0
    %234 = vmatmul.mubr.f32.gmra.mrb[0].mxu0 %v69
    %v235 = vpop.f32.mrb[0].mxu0
    %v236 = vadd.f32 0.0, %v235
    %v237 = vpop.f32.mrb[0].mxu0
    %v238 = vadd.f32 0.0, %v237
    %239 = vmatprep.mubr.f32.mxu0 0.0
    %240 = vmatmul.mubr.f32.gmra.mrb[0].mxu0 %v72
    %v241 = vpop.f32.mrb[0].mxu0
    %v242 = vadd.f32 0.0, %v241
    %v243 = vpop.f32.mrb[0].mxu0
    %v244 = vadd.f32 0.0, %v243
    %245 = vdwg.mxu0
    %v246 = vmax.f32 %v148, %v236
    %v247 = vmax.f32 %v150, %v238
    %v248 = vmax.f32 %v154, %v242
    %v249 = vmax.f32 %v156, %v244
    %s250 = scalar_lea.vmem %s0, 64
    %v251 = vld [vmem:[%s250] sm:$0xff]
    %v252 = vld [vmem:[%s250 + $0x8] sm:$0xff]
    %v253 = vld [vmem:[%s250 + $0x10] sm:$0x1]
    %v254 = vld [vmem:[%s250 + $0x18] sm:$0x1]
    %v256 = vsel %vm74, %v253, 0
    %v259 = vsel %vm74, %v254, 0
    %261 = vmatprep.subr.mxu0 %v252
    %262 = vmatpush1.msra.mxu0 %v251
    %263 = vmatprep.subr.mxu0 %v259
    %264 = vmatpush1.msra.mxu0 %v256
    %265 = vmatprep.subr.mxu0 0.0
    %266 = vmatpush1.msra.mxu0 0.0
    %267 = vmatprep.subr.mxu0 0.0
    %268 = vmatpush1.msra.mxu0 0.0
    %269 = vmatprep.subr.mxu0 0.0
    %270 = vmatpush1.msra.mxu0 0.0
    %271 = vmatprep.subr.mxu0 0.0
    %272 = vmatpush1.msra.mxu0 0.0
    %273 = vmatprep.subr.mxu0 0.0
    %274 = vmatpush1.msra.mxu0 0.0
    %275 = vmatprep.subr.mxu0 0.0
    %276 = vmatpush1.msra.mxu0 0.0
    %277 = vmatprep.subr.mxu0 0.0
    %278 = vmatpush1.msra.mxu0 0.0
    %279 = vmatprep.subr.mxu0 0.0
    %280 = vmatpush1.msra.mxu0 0.0
    %281 = vmatprep.subr.mxu0 0.0
    %282 = vmatpush1.msra.mxu0 0.0
    %283 = vmatprep.subr.mxu0 0.0
    %284 = vmatpush1.msra.mxu0 0.0
    %285 = vmatprep.subr.mxu0 0.0
    %286 = vmatpush1.msra.mxu0 0.0
    %287 = vmatprep.subr.mxu0 0.0
    %288 = vmatpush1.msra.mxu0 0.0
    %289 = vmatprep.subr.mxu0 0.0
    %290 = vmatpush1.msra.mxu0 0.0
    %291 = vmatprep.subr.mxu0 0.0
    %292 = vmatpush1.msra.mxu0 0.0
    %293 = vmatprep.subr.mxu0 0.0
    %294 = vmatpush1.msra.mxu0 0.0
    %295 = vmatprep.subr.mxu0 0.0
    %296 = vmatpush1.msra.mxu0 0.0
    %297 = vmatprep.subr.mxu0 0.0
    %298 = vmatpush1.msra.mxu0 0.0
    %299 = vmatprep.subr.mxu0 0.0
    %300 = vmatpush1.msra.mxu0 0.0
    %301 = vmatprep.subr.mxu0 0.0
    %302 = vmatpush1.msra.mxu0 0.0
    %303 = vmatprep.subr.mxu0 0.0
    %304 = vmatpush1.msra.mxu0 0.0
    %305 = vmatprep.subr.mxu0 0.0
    %306 = vmatpush1.msra.mxu0 0.0
    %307 = vmatprep.subr.mxu0 0.0
    %308 = vmatpush1.msra.mxu0 0.0
    %309 = vmatprep.subr.mxu0 0.0
    %310 = vmatpush1.msra.mxu0 0.0
    %311 = vmatprep.subr.mxu0 0.0
    %312 = vmatpush1.msra.mxu0 0.0
    %313 = vmatprep.subr.mxu0 0.0
    %314 = vmatpush1.msra.mxu0 0.0
    %315 = vmatprep.subr.mxu0 0.0
    %316 = vmatpush1.msra.mxu0 0.0
    %317 = vmatprep.subr.mxu0 0.0
    %318 = vmatpush1.msra.mxu0 0.0
    %319 = vmatprep.subr.mxu0 0.0
    %320 = vmatpush1.msra.mxu0 0.0
    %321 = vmatprep.subr.mxu0 0.0
    %322 = vmatpush1.msra.mxu0 0.0
    %323 = vmatprep.subr.mxu0 0.0
    %324 = vmatpush1.msra.mxu0 0.0
    %325 = vmatprep.mubr.f32.mxu0 0.0
    %326 = vmatmul.mubr.f32.gmra.mrb[0].mxu0 %v69
    %v327 = vpop.f32.mrb[0].mxu0
    %v328 = vadd.f32 0.0, %v327
    %v329 = vpop.f32.mrb[0].mxu0
    %v330 = vadd.f32 0.0, %v329
    %331 = vmatprep.mubr.f32.mxu0 0.0
    %332 = vmatmul.mubr.f32.gmra.mrb[0].mxu0 %v72
    %v333 = vpop.f32.mrb[0].mxu0
    %v334 = vadd.f32 0.0, %v333
    %v335 = vpop.f32.mrb[0].mxu0
    %v336 = vadd.f32 0.0, %v335
    %337 = vdwg.mxu0
    %v338 = vmax.f32 %v246, %v328
    %v339 = vmax.f32 %v247, %v330
    %v340 = vmax.f32 %v248, %v334
    %v341 = vmax.f32 %v249, %v336
    %s342 = scalar_lea.vmem %s0, 96
    %v343 = vld [vmem:[%s342] sm:$0xff]
    %v344 = vld [vmem:[%s342 + $0x8] sm:$0xff]
    %v345 = vld [vmem:[%s342 + $0x10] sm:$0x1]
    %v346 = vld [vmem:[%s342 + $0x18] sm:$0x1]
    %v348 = vsel %vm74, %v345, 0
    %v351 = vsel %vm74, %v346, 0
    %353 = vmatprep.subr.mxu0 %v344
    %354 = vmatpush1.msra.mxu0 %v343
    %355 = vmatprep.subr.mxu0 %v351
    %356 = vmatpush1.msra.mxu0 %v348
    %357 = vmatprep.subr.mxu0 0.0
    %358 = vmatpush1.msra.mxu0 0.0
    %359 = vmatprep.subr.mxu0 0.0
    %360 = vmatpush1.msra.mxu0 0.0
    %361 = vmatprep.subr.mxu0 0.0
    %362 = vmatpush1.msra.mxu0 0.0
    %363 = vmatprep.subr.mxu0 0.0
    %364 = vmatpush1.msra.mxu0 0.0
    %365 = vmatprep.subr.mxu0 0.0
    %366 = vmatpush1.msra.mxu0 0.0
    %367 = vmatprep.subr.mxu0 0.0
    %368 = vmatpush1.msra.mxu0 0.0
    %369 = vmatprep.subr.mxu0 0.0
    %370 = vmatpush1.msra.mxu0 0.0
    %371 = vmatprep.subr.mxu0 0.0
    %372 = vmatpush1.msra.mxu0 0.0
    %373 = vmatprep.subr.mxu0 0.0
    %374 = vmatpush1.msra.mxu0 0.0
    %375 = vmatprep.subr.mxu0 0.0
    %376 = vmatpush1.msra.mxu0 0.0
    %377 = vmatprep.subr.mxu0 0.0
    %378 = vmatpush1.msra.mxu0 0.0
    %379 = vmatprep.subr.mxu0 0.0
    %380 = vmatpush1.msra.mxu0 0.0
    %381 = vmatprep.subr.mxu0 0.0
    %382 = vmatpush1.msra.mxu0 0.0
    %383 = vmatprep.subr.mxu0 0.0
    %384 = vmatpush1.msra.mxu0 0.0
    %385 = vmatprep.subr.mxu0 0.0
    %386 = vmatpush1.msra.mxu0 0.0
    %387 = vmatprep.subr.mxu0 0.0
    %388 = vmatpush1.msra.mxu0 0.0
    %389 = vmatprep.subr.mxu0 0.0
    %390 = vmatpush1.msra.mxu0 0.0
    %391 = vmatprep.subr.mxu0 0.0
    %392 = vmatpush1.msra.mxu0 0.0
    %393 = vmatprep.subr.mxu0 0.0
    %394 = vmatpush1.msra.mxu0 0.0
    %395 = vmatprep.subr.mxu0 0.0
    %396 = vmatpush1.msra.mxu0 0.0
    %397 = vmatprep.subr.mxu0 0.0
    %398 = vmatpush1.msra.mxu0 0.0
    %399 = vmatprep.subr.mxu0 0.0
    %400 = vmatpush1.msra.mxu0 0.0
    %401 = vmatprep.subr.mxu0 0.0
    %402 = vmatpush1.msra.mxu0 0.0
    %403 = vmatprep.subr.mxu0 0.0
    %404 = vmatpush1.msra.mxu0 0.0
    %405 = vmatprep.subr.mxu0 0.0
    %406 = vmatpush1.msra.mxu0 0.0
    %407 = vmatprep.subr.mxu0 0.0
    %408 = vmatpush1.msra.mxu0 0.0
    %409 = vmatprep.subr.mxu0 0.0
    %410 = vmatpush1.msra.mxu0 0.0
    %411 = vmatprep.subr.mxu0 0.0
    %412 = vmatpush1.msra.mxu0 0.0
    %413 = vmatprep.subr.mxu0 0.0
    %414 = vmatpush1.msra.mxu0 0.0
    %415 = vmatprep.subr.mxu0 0.0
    %416 = vmatpush1.msra.mxu0 0.0
    %417 = vmatprep.mubr.f32.mxu0 0.0
    %418 = vmatmul.mubr.f32.gmra.mrb[0].mxu0 %v69
    %v419 = vpop.f32.mrb[0].mxu0
    %v420 = vadd.f32 0.0, %v419
    %v421 = vpop.f32.mrb[0].mxu0
    %v422 = vadd.f32 0.0, %v421
    %423 = vmatprep.mubr.f32.mxu0 0.0
    %424 = vmatmul.mubr.f32.gmra.mrb[0].mxu0 %v72
    %v425 = vpop.f32.mrb[0].mxu0
    %v426 = vadd.f32 0.0, %v425
    %v427 = vpop.f32.mrb[0].mxu0
    %v428 = vadd.f32 0.0, %v427
    %429 = vdwg.mxu0
    %v430 = vmax.f32 %v338, %v420
    %v431 = vmax.f32 %v339, %v422
    %v432 = vmax.f32 %v340, %v426
    %v433 = vmax.f32 %v341, %v428
    %435 = vset.pattern.permute.xlu0 0
    %436 = vperm.xlu0 %435, %v43
    %v437 = vpop.permute.xlu0 %436
    %440 = vset.pattern.permute.xlu0 0
    %441 = vperm.xlu0 %440, %v44
    %v442 = vpop.permute.xlu0 %441
    %v444 = vadd.f32 %v430, %v437
    %v445 = vadd.f32 %v431, %v437
    %v446 = vadd.f32 %v432, %v442
    %v447 = vadd.f32 %v433, %v442
    %v448 = vtanh.pop %v444
    %v449 = vtanh.pop %v445
    %v450 = vtanh.pop %v446
    %v451 = vtanh.pop %v447
    %v452 = vld [vmem:[#allocation2] sm:$0xff]
    %v453 = vld [vmem:[#allocation2 + $0x8] sm:$0xff]
    %v454 = vld [vmem:[#allocation2 + $0x10] sm:$0xff]
    %v455 = vld [vmem:[#allocation2 + $0x18] sm:$0xff]
    %v456 = vld [vmem:[#allocation2 + $0x20] sm:$0xff]
    %v457 = vld [vmem:[#allocation2 + $0x28] sm:$0xff]
    %v458 = vld [vmem:[#allocation2 + $0x30] sm:$0xff]
    %v459 = vld [vmem:[#allocation2 + $0x38] sm:$0xff]
    %v460 = vld [vmem:[#allocation2 + $0x40] sm:$0xff]
    %v461 = vld [vmem:[#allocation2 + $0x48] sm:$0xff]
    %v462 = vld [vmem:[#allocation2 + $0x50] sm:$0xff]
    %v463 = vld [vmem:[#allocation2 + $0x58] sm:$0xff]
    %v464 = vld [vmem:[#allocation2 + $0x60] sm:$0xff]
    %v465 = vld [vmem:[#allocation2 + $0x68] sm:$0xff]
    %v466 = vld [vmem:[#allocation2 + $0x70] sm:$0xff]
    %v467 = vld [vmem:[#allocation2 + $0x78] sm:$0xff]
    %v468 = vld [vmem:[#allocation2 + $0x80] sm:$0xff]
    %v469 = vld [vmem:[#allocation2 + $0x88] sm:$0xff]
    %v470 = vld [vmem:[#allocation2 + $0x90] sm:$0xff]
    %v471 = vld [vmem:[#allocation2 + $0x98] sm:$0xff]
    %v472 = vld [vmem:[#allocation2 + $0xa0] sm:$0xff]
    %v473 = vld [vmem:[#allocation2 + $0xa8] sm:$0xff]
    %v474 = vld [vmem:[#allocation2 + $0xb0] sm:$0xff]
    %v475 = vld [vmem:[#allocation2 + $0xb8] sm:$0xff]
    %v476 = vld [vmem:[#allocation2 + $0xc0] sm:$0xf]
    %vm477 = vcmask 556032
    %v479 = vsel %vm477, %v449, 0
    %vm481 = vcmask 1043456
    %v483 = vsel %vm481, %v476, 0
    %485 = vmatprep.subr.mxu0 0.0
    %486 = vmatpush1.msra.mxu0 %v452
    %487 = vmatprep.subr.mxu0 0.0
    %488 = vmatpush1.msra.mxu0 %v453
    %489 = vmatprep.subr.mxu0 0.0
    %490 = vmatpush1.msra.mxu0 %v454
    %491 = vmatprep.subr.mxu0 0.0
    %492 = vmatpush1.msra.mxu0 %v455
    %493 = vmatprep.subr.mxu0 0.0
    %494 = vmatpush1.msra.mxu0 %v456
    %495 = vmatprep.subr.mxu0 0.0
    %496 = vmatpush1.msra.mxu0 %v457
    %497 = vmatprep.subr.mxu0 0.0
    %498 = vmatpush1.msra.mxu0 %v458
    %499 = vmatprep.subr.mxu0 0.0
    %500 = vmatpush1.msra.mxu0 %v459
    %501 = vmatprep.subr.mxu0 0.0
    %502 = vmatpush1.msra.mxu0 %v460
    %503 = vmatprep.subr.mxu0 0.0
    %504 = vmatpush1.msra.mxu0 %v461
    %505 = vmatprep.subr.mxu0 0.0
    %506 = vmatpush1.msra.mxu0 %v462
    %507 = vmatprep.subr.mxu0 0.0
    %508 = vmatpush1.msra.mxu0 %v463
    %509 = vmatprep.subr.mxu0 0.0
    %510 = vmatpush1.msra.mxu0 %v464
    %511 = vmatprep.subr.mxu0 0.0
    %512 = vmatpush1.msra.mxu0 %v465
    %513 = vmatprep.subr.mxu0 0.0
    %514 = vmatpush1.msra.mxu0 %v466
    %515 = vmatprep.subr.mxu0 0.0
    %516 = vmatpush1.msra.mxu0 %v467
    %517 = vmatprep.subr.mxu0 0.0
    %518 = vmatpush1.msra.mxu0 %v468
    %519 = vmatprep.subr.mxu0 0.0
    %520 = vmatpush1.msra.mxu0 %v469
    %521 = vmatprep.subr.mxu0 0.0
    %522 = vmatpush1.msra.mxu0 %v470
    %523 = vmatprep.subr.mxu0 0.0
    %524 = vmatpush1.msra.mxu0 %v471
    %525 = vmatprep.subr.mxu0 0.0
    %526 = vmatpush1.msra.mxu0 %v472
    %527 = vmatprep.subr.mxu0 0.0
    %528 = vmatpush1.msra.mxu0 %v473
    %529 = vmatprep.subr.mxu0 0.0
    %530 = vmatpush1.msra.mxu0 %v474
    %531 = vmatprep.subr.mxu0 0.0
    %532 = vmatpush1.msra.mxu0 %v475
    %533 = vmatprep.subr.mxu0 0.0
    %534 = vmatpush1.msra.mxu0 %v483
    %535 = vmatprep.subr.mxu0 0.0
    %536 = vmatpush1.msra.mxu0 0.0
    %537 = vmatprep.subr.mxu0 0.0
    %538 = vmatpush1.msra.mxu0 0.0
    %539 = vmatprep.subr.mxu0 0.0
    %540 = vmatpush1.msra.mxu0 0.0
    %541 = vmatprep.subr.mxu0 0.0
    %542 = vmatpush1.msra.mxu0 0.0
    %543 = vmatprep.subr.mxu0 0.0
    %544 = vmatpush1.msra.mxu0 0.0
    %545 = vmatprep.subr.mxu0 0.0
    %546 = vmatpush1.msra.mxu0 0.0
    %547 = vmatprep.subr.mxu0 0.0
    %548 = vmatpush1.msra.mxu0 0.0
    %549 = vmatprep.mubr.f32.mxu0 %v479
    %550 = vmatmul.mubr.f32.gmra.mrb[0].mxu0 %v448
    %v551 = vpop.f32.mrb[0].mxu0
    %v552 = vadd.f32 0.0, %v551
    %v553 = vpop.f32.mrb[0].mxu0
    %554 = vdwg.mxu0
    %v555 = vadd.f32 %v45, %v552
    %s556 = scalar_lea.vmem [#allocation2], 200
    %v557 = vld [vmem:[%s556] sm:$0xff]
    %v558 = vld [vmem:[%s556 + $0x8] sm:$0xff]
    %v559 = vld [vmem:[%s556 + $0x10] sm:$0xff]
    %v560 = vld [vmem:[%s556 + $0x18] sm:$0xff]
    %v561 = vld [vmem:[%s556 + $0x20] sm:$0xff]
    %v562 = vld [vmem:[%s556 + $0x28] sm:$0xff]
    %v563 = vld [vmem:[%s556 + $0x30] sm:$0xff]
    %v564 = vld [vmem:[%s556 + $0x38] sm:$0xff]
    %v565 = vld [vmem:[%s556 + $0x40] sm:$0xff]
    %v566 = vld [vmem:[%s556 + $0x48] sm:$0xff]
    %v567 = vld [vmem:[%s556 + $0x50] sm:$0xff]
    %v568 = vld [vmem:[%s556 + $0x58] sm:$0xff]
    %v569 = vld [vmem:[%s556 + $0x60] sm:$0xff]
    %v570 = vld [vmem:[%s556 + $0x68] sm:$0xff]
    %v571 = vld [vmem:[%s556 + $0x70] sm:$0xff]
    %v572 = vld [vmem:[%s556 + $0x78] sm:$0xff]
    %v573 = vld [vmem:[%s556 + $0x80] sm:$0xff]
    %v574 = vld [vmem:[%s556 + $0x88] sm:$0xff]
    %v575 = vld [vmem:[%s556 + $0x90] sm:$0xff]
    %v576 = vld [vmem:[%s556 + $0x98] sm:$0xff]
    %v577 = vld [vmem:[%s556 + $0xa0] sm:$0xff]
    %v578 = vld [vmem:[%s556 + $0xa8] sm:$0xff]
    %v579 = vld [vmem:[%s556 + $0xb0] sm:$0xff]
    %v580 = vld [vmem:[%s556 + $0xb8] sm:$0xff]
    %v581 = vld [vmem:[%s556 + $0xc0] sm:$0xf]
    %v583 = vrot.slane %v448, 1
    %v584 = vrot.slane %v449, 1
    %v586 = vsel %vm477, %v584, 0
    %v589 = vsel %vm481, %v581, 0
    %591 = vmatprep.subr.mxu0 0.0
    %592 = vmatpush1.msra.mxu0 %v557
    %593 = vmatprep.subr.mxu0 0.0
    %594 = vmatpush1.msra.mxu0 %v558
    %595 = vmatprep.subr.mxu0 0.0
    %596 = vmatpush1.msra.mxu0 %v559
    %597 = vmatprep.subr.mxu0 0.0
    %598 = vmatpush1.msra.mxu0 %v560
    %599 = vmatprep.subr.mxu0 0.0
    %600 = vmatpush1.msra.mxu0 %v561
    %601 = vmatprep.subr.mxu0 0.0
    %602 = vmatpush1.msra.mxu0 %v562
    %603 = vmatprep.subr.mxu0 0.0
    %604 = vmatpush1.msra.mxu0 %v563
    %605 = vmatprep.subr.mxu0 0.0
    %606 = vmatpush1.msra.mxu0 %v564
    %607 = vmatprep.subr.mxu0 0.0
    %608 = vmatpush1.msra.mxu0 %v565
    %609 = vmatprep.subr.mxu0 0.0
    %610 = vmatpush1.msra.mxu0 %v566
    %611 = vmatprep.subr.mxu0 0.0
    %612 = vmatpush1.msra.mxu0 %v567
    %613 = vmatprep.subr.mxu0 0.0
    %614 = vmatpush1.msra.mxu0 %v568
    %615 = vmatprep.subr.mxu0 0.0
    %616 = vmatpush1.msra.mxu0 %v569
    %617 = vmatprep.subr.mxu0 0.0
    %618 = vmatpush1.msra.mxu0 %v570
    %619 = vmatprep.subr.mxu0 0.0
    %620 = vmatpush1.msra.mxu0 %v571
    %621 = vmatprep.subr.mxu0 0.0
    %622 = vmatpush1.msra.mxu0 %v572
    %623 = vmatprep.subr.mxu0 0.0
    %624 = vmatpush1.msra.mxu0 %v573
    %625 = vmatprep.subr.mxu0 0.0
    %626 = vmatpush1.msra.mxu0 %v574
    %627 = vmatprep.subr.mxu0 0.0
    %628 = vmatpush1.msra.mxu0 %v575
    %629 = vmatprep.subr.mxu0 0.0
    %630 = vmatpush1.msra.mxu0 %v576
    %631 = vmatprep.subr.mxu0 0.0
    %632 = vmatpush1.msra.mxu0 %v577
    %633 = vmatprep.subr.mxu0 0.0
    %634 = vmatpush1.msra.mxu0 %v578
    %635 = vmatprep.subr.mxu0 0.0
    %636 = vmatpush1.msra.mxu0 %v579
    %637 = vmatprep.subr.mxu0 0.0
    %638 = vmatpush1.msra.mxu0 %v580
    %639 = vmatprep.subr.mxu0 0.0
    %640 = vmatpush1.msra.mxu0 %v589
    %641 = vmatprep.subr.mxu0 0.0
    %642 = vmatpush1.msra.mxu0 0.0
    %643 = vmatprep.subr.mxu0 0.0
    %644 = vmatpush1.msra.mxu0 0.0
    %645 = vmatprep.subr.mxu0 0.0
    %646 = vmatpush1.msra.mxu0 0.0
    %647 = vmatprep.subr.mxu0 0.0
    %648 = vmatpush1.msra.mxu0 0.0
    %649 = vmatprep.subr.mxu0 0.0
    %650 = vmatpush1.msra.mxu0 0.0
    %651 = vmatprep.subr.mxu0 0.0
    %652 = vmatpush1.msra.mxu0 0.0
    %653 = vmatprep.subr.mxu0 0.0
    %654 = vmatpush1.msra.mxu0 0.0
    %655 = vmatprep.mubr.f32.mxu0 %v586
    %656 = vmatmul.mubr.f32.gmra.mrb[0].mxu0 %v583
    %v657 = vpop.f32.mrb[0].mxu0
    %v658 = vadd.f32 0.0, %v657
    %v659 = vpop.f32.mrb[0].mxu0
    %660 = vdwg.mxu0
    %v661 = vadd.f32 %v555, %v658
    %s662 = scalar_lea.vmem [#allocation2], 400
    %v663 = vld [vmem:[%s662] sm:$0xff]
    %v664 = vld [vmem:[%s662 + $0x8] sm:$0xff]
    %v665 = vld [vmem:[%s662 + $0x10] sm:$0xff]
    %v666 = vld [vmem:[%s662 + $0x18] sm:$0xff]
    %v667 = vld [vmem:[%s662 + $0x20] sm:$0xff]
    %v668 = vld [vmem:[%s662 + $0x28] sm:$0xff]
    %v669 = vld [vmem:[%s662 + $0x30] sm:$0xff]
    %v670 = vld [vmem:[%s662 + $0x38] sm:$0xff]
    %v671 = vld [vmem:[%s662 + $0x40] sm:$0xff]
    %v672 = vld [vmem:[%s662 + $0x48] sm:$0xff]
    %v673 = vld [vmem:[%s662 + $0x50] sm:$0xff]
    %v674 = vld [vmem:[%s662 + $0x58] sm:$0xff]
    %v675 = vld [vmem:[%s662 + $0x60] sm:$0xff]
    %v676 = vld [vmem:[%s662 + $0x68] sm:$0xff]
    %v677 = vld [vmem:[%s662 + $0x70] sm:$0xff]
    %v678 = vld [vmem:[%s662 + $0x78] sm:$0xff]
    %v679 = vld [vmem:[%s662 + $0x80] sm:$0xff]
    %v680 = vld [vmem:[%s662 + $0x88] sm:$0xff]
    %v681 = vld [vmem:[%s662 + $0x90] sm:$0xff]
    %v682 = vld [vmem:[%s662 + $0x98] sm:$0xff]
    %v683 = vld [vmem:[%s662 + $0xa0] sm:$0xff]
    %v684 = vld [vmem:[%s662 + $0xa8] sm:$0xff]
    %v685 = vld [vmem:[%s662 + $0xb0] sm:$0xff]
    %v686 = vld [vmem:[%s662 + $0xb8] sm:$0xff]
    %v687 = vld [vmem:[%s662 + $0xc0] sm:$0xf]
    %v688 = vrot.slane %v448, 2
    %v689 = vrot.slane %v449, 2
    %v691 = vsel %vm477, %v689, 0
    %v694 = vsel %vm481, %v687, 0
    %696 = vmatprep.subr.mxu0 0.0
    %697 = vmatpush1.msra.mxu0 %v663
    %698 = vmatprep.subr.mxu0 0.0
    %699 = vmatpush1.msra.mxu0 %v664
    %700 = vmatprep.subr.mxu0 0.0
    %701 = vmatpush1.msra.mxu0 %v665
    %702 = vmatprep.subr.mxu0 0.0
    %703 = vmatpush1.msra.mxu0 %v666
    %704 = vmatprep.subr.mxu0 0.0
    %705 = vmatpush1.msra.mxu0 %v667
    %706 = vmatprep.subr.mxu0 0.0
    %707 = vmatpush1.msra.mxu0 %v668
    %708 = vmatprep.subr.mxu0 0.0
    %709 = vmatpush1.msra.mxu0 %v669
    %710 = vmatprep.subr.mxu0 0.0
    %711 = vmatpush1.msra.mxu0 %v670
    %712 = vmatprep.subr.mxu0 0.0
    %713 = vmatpush1.msra.mxu0 %v671
    %714 = vmatprep.subr.mxu0 0.0
    %715 = vmatpush1.msra.mxu0 %v672
    %716 = vmatprep.subr.mxu0 0.0
    %717 = vmatpush1.msra.mxu0 %v673
    %718 = vmatprep.subr.mxu0 0.0
    %719 = vmatpush1.msra.mxu0 %v674
    %720 = vmatprep.subr.mxu0 0.0
    %721 = vmatpush1.msra.mxu0 %v675
    %722 = vmatprep.subr.mxu0 0.0
    %723 = vmatpush1.msra.mxu0 %v676
    %724 = vmatprep.subr.mxu0 0.0
    %725 = vmatpush1.msra.mxu0 %v677
    %726 = vmatprep.subr.mxu0 0.0
    %727 = vmatpush1.msra.mxu0 %v678
    %728 = vmatprep.subr.mxu0 0.0
    %729 = vmatpush1.msra.mxu0 %v679
    %730 = vmatprep.subr.mxu0 0.0
    %731 = vmatpush1.msra.mxu0 %v680
    %732 = vmatprep.subr.mxu0 0.0
    %733 = vmatpush1.msra.mxu0 %v681
    %734 = vmatprep.subr.mxu0 0.0
    %735 = vmatpush1.msra.mxu0 %v682
    %736 = vmatprep.subr.mxu0 0.0
    %737 = vmatpush1.msra.mxu0 %v683
    %738 = vmatprep.subr.mxu0 0.0
    %739 = vmatpush1.msra.mxu0 %v684
    %740 = vmatprep.subr.mxu0 0.0
    %741 = vmatpush1.msra.mxu0 %v685
    %742 = vmatprep.subr.mxu0 0.0
    %743 = vmatpush1.msra.mxu0 %v686
    %744 = vmatprep.subr.mxu0 0.0
    %745 = vmatpush1.msra.mxu0 %v694
    %746 = vmatprep.subr.mxu0 0.0
    %747 = vmatpush1.msra.mxu0 0.0
    %748 = vmatprep.subr.mxu0 0.0
    %749 = vmatpush1.msra.mxu0 0.0
    %750 = vmatprep.subr.mxu0 0.0
    %751 = vmatpush1.msra.mxu0 0.0
    %752 = vmatprep.subr.mxu0 0.0
    %753 = vmatpush1.msra.mxu0 0.0
    %754 = vmatprep.subr.mxu0 0.0
    %755 = vmatpush1.msra.mxu0 0.0
    %756 = vmatprep.subr.mxu0 0.0
    %757 = vmatpush1.msra.mxu0 0.0
    %758 = vmatprep.subr.mxu0 0.0
    %759 = vmatpush1.msra.mxu0 0.0
    %760 = vmatprep.mubr.f32.mxu0 %v691
    %761 = vmatmul.mubr.f32.gmra.mrb[0].mxu0 %v688
    %v762 = vpop.f32.mrb[0].mxu0
    %v763 = vadd.f32 0.0, %v762
    %v764 = vpop.f32.mrb[0].mxu0
    %765 = vdwg.mxu0
    %v766 = vadd.f32 %v661, %v763
    %s767 = scalar_lea.vmem [#allocation2], 600
    %v768 = vld [vmem:[%s767] sm:$0xff]
    %v769 = vld [vmem:[%s767 + $0x8] sm:$0xff]
    %v770 = vld [vmem:[%s767 + $0x10] sm:$0xff]
    %v771 = vld [vmem:[%s767 + $0x18] sm:$0xff]
    %v772 = vld [vmem:[%s767 + $0x20] sm:$0xff]
    %v773 = vld [vmem:[%s767 + $0x28] sm:$0xff]
    %v774 = vld [vmem:[%s767 + $0x30] sm:$0xff]
    %v775 = vld [vmem:[%s767 + $0x38] sm:$0xff]
    %v776 = vld [vmem:[%s767 + $0x40] sm:$0xff]
    %v777 = vld [vmem:[%s767 + $0x48] sm:$0xff]
    %v778 = vld [vmem:[%s767 + $0x50] sm:$0xff]
    %v779 = vld [vmem:[%s767 + $0x58] sm:$0xff]
    %v780 = vld [vmem:[%s767 + $0x60] sm:$0xff]
    %v781 = vld [vmem:[%s767 + $0x68] sm:$0xff]
    %v782 = vld [vmem:[%s767 + $0x70] sm:$0xff]
    %v783 = vld [vmem:[%s767 + $0x78] sm:$0xff]
    %v784 = vld [vmem:[%s767 + $0x80] sm:$0xff]
    %v785 = vld [vmem:[%s767 + $0x88] sm:$0xff]
    %v786 = vld [vmem:[%s767 + $0x90] sm:$0xff]
    %v787 = vld [vmem:[%s767 + $0x98] sm:$0xff]
    %v788 = vld [vmem:[%s767 + $0xa0] sm:$0xff]
    %v789 = vld [vmem:[%s767 + $0xa8] sm:$0xff]
    %v790 = vld [vmem:[%s767 + $0xb0] sm:$0xff]
    %v791 = vld [vmem:[%s767 + $0xb8] sm:$0xff]
    %v792 = vld [vmem:[%s767 + $0xc0] sm:$0xf]
    %v793 = vrot.slane %v448, 3
    %v794 = vrot.slane %v449, 3
    %v796 = vsel %vm477, %v794, 0
    %v799 = vsel %vm481, %v792, 0
    %801 = vmatprep.subr.mxu0 0.0
    %802 = vmatpush1.msra.mxu0 %v768
    %803 = vmatprep.subr.mxu0 0.0
    %804 = vmatpush1.msra.mxu0 %v769
    %805 = vmatprep.subr.mxu0 0.0
    %806 = vmatpush1.msra.mxu0 %v770
    %807 = vmatprep.subr.mxu0 0.0
    %808 = vmatpush1.msra.mxu0 %v771
    %809 = vmatprep.subr.mxu0 0.0
    %810 = vmatpush1.msra.mxu0 %v772
    %811 = vmatprep.subr.mxu0 0.0
    %812 = vmatpush1.msra.mxu0 %v773
    %813 = vmatprep.subr.mxu0 0.0
    %814 = vmatpush1.msra.mxu0 %v774
    %815 = vmatprep.subr.mxu0 0.0
    %816 = vmatpush1.msra.mxu0 %v775
    %817 = vmatprep.subr.mxu0 0.0
    %818 = vmatpush1.msra.mxu0 %v776
    %819 = vmatprep.subr.mxu0 0.0
    %820 = vmatpush1.msra.mxu0 %v777
    %821 = vmatprep.subr.mxu0 0.0
    %822 = vmatpush1.msra.mxu0 %v778
    %823 = vmatprep.subr.mxu0 0.0
    %824 = vmatpush1.msra.mxu0 %v779
    %825 = vmatprep.subr.mxu0 0.0
    %826 = vmatpush1.msra.mxu0 %v780
    %827 = vmatprep.subr.mxu0 0.0
    %828 = vmatpush1.msra.mxu0 %v781
    %829 = vmatprep.subr.mxu0 0.0
    %830 = vmatpush1.msra.mxu0 %v782
    %831 = vmatprep.subr.mxu0 0.0
    %832 = vmatpush1.msra.mxu0 %v783
    %833 = vmatprep.subr.mxu0 0.0
    %834 = vmatpush1.msra.mxu0 %v784
    %835 = vmatprep.subr.mxu0 0.0
    %836 = vmatpush1.msra.mxu0 %v785
    %837 = vmatprep.subr.mxu0 0.0
    %838 = vmatpush1.msra.mxu0 %v786
    %839 = vmatprep.subr.mxu0 0.0
    %840 = vmatpush1.msra.mxu0 %v787
    %841 = vmatprep.subr.mxu0 0.0
    %842 = vmatpush1.msra.mxu0 %v788
    %843 = vmatprep.subr.mxu0 0.0
    %844 = vmatpush1.msra.mxu0 %v789
    %845 = vmatprep.subr.mxu0 0.0
    %846 = vmatpush1.msra.mxu0 %v790
    %847 = vmatprep.subr.mxu0 0.0
    %848 = vmatpush1.msra.mxu0 %v791
    %849 = vmatprep.subr.mxu0 0.0
    %850 = vmatpush1.msra.mxu0 %v799
    %851 = vmatprep.subr.mxu0 0.0
    %852 = vmatpush1.msra.mxu0 0.0
    %853 = vmatprep.subr.mxu0 0.0
    %854 = vmatpush1.msra.mxu0 0.0
    %855 = vmatprep.subr.mxu0 0.0
    %856 = vmatpush1.msra.mxu0 0.0
    %857 = vmatprep.subr.mxu0 0.0
    %858 = vmatpush1.msra.mxu0 0.0
    %859 = vmatprep.subr.mxu0 0.0
    %860 = vmatpush1.msra.mxu0 0.0
    %861 = vmatprep.subr.mxu0 0.0
    %862 = vmatpush1.msra.mxu0 0.0
    %863 = vmatprep.subr.mxu0 0.0
    %864 = vmatpush1.msra.mxu0 0.0
    %865 = vmatprep.mubr.f32.mxu0 %v796
    %866 = vmatmul.mubr.f32.gmra.mrb[0].mxu0 %v793
    %v867 = vpop.f32.mrb[0].mxu0
    %v868 = vadd.f32 0.0, %v867
    %v869 = vpop.f32.mrb[0].mxu0
    %870 = vdwg.mxu0
    %v871 = vadd.f32 %v766, %v868
    %s872 = scalar_lea.vmem [#allocation2], 800
    %v873 = vld [vmem:[%s872] sm:$0xff]
    %v874 = vld [vmem:[%s872 + $0x8] sm:$0xff]
    %v875 = vld [vmem:[%s872 + $0x10] sm:$0xff]
    %v876 = vld [vmem:[%s872 + $0x18] sm:$0xff]
    %v877 = vld [vmem:[%s872 + $0x20] sm:$0xff]
    %v878 = vld [vmem:[%s872 + $0x28] sm:$0xff]
    %v879 = vld [vmem:[%s872 + $0x30] sm:$0xff]
    %v880 = vld [vmem:[%s872 + $0x38] sm:$0xff]
    %v881 = vld [vmem:[%s872 + $0x40] sm:$0xff]
    %v882 = vld [vmem:[%s872 + $0x48] sm:$0xff]
    %v883 = vld [vmem:[%s872 + $0x50] sm:$0xff]
    %v884 = vld [vmem:[%s872 + $0x58] sm:$0xff]
    %v885 = vld [vmem:[%s872 + $0x60] sm:$0xff]
    %v886 = vld [vmem:[%s872 + $0x68] sm:$0xff]
    %v887 = vld [vmem:[%s872 + $0x70] sm:$0xff]
    %v888 = vld [vmem:[%s872 + $0x78] sm:$0xff]
    %v889 = vld [vmem:[%s872 + $0x80] sm:$0xff]
    %v890 = vld [vmem:[%s872 + $0x88] sm:$0xff]
    %v891 = vld [vmem:[%s872 + $0x90] sm:$0xff]
    %v892 = vld [vmem:[%s872 + $0x98] sm:$0xff]
    %v893 = vld [vmem:[%s872 + $0xa0] sm:$0xff]
    %v894 = vld [vmem:[%s872 + $0xa8] sm:$0xff]
    %v895 = vld [vmem:[%s872 + $0xb0] sm:$0xff]
    %v896 = vld [vmem:[%s872 + $0xb8] sm:$0xff]
    %v897 = vld [vmem:[%s872 + $0xc0] sm:$0xf]
    %v898 = vrot.slane %v448, 4
    %v899 = vrot.slane %v449, 4
    %v901 = vsel %vm477, %v899, 0
    %v904 = vsel %vm481, %v897, 0
    %906 = vmatprep.subr.mxu0 0.0
    %907 = vmatpush1.msra.mxu0 %v873
    %908 = vmatprep.subr.mxu0 0.0
    %909 = vmatpush1.msra.mxu0 %v874
    %910 = vmatprep.subr.mxu0 0.0
    %911 = vmatpush1.msra.mxu0 %v875
    %912 = vmatprep.subr.mxu0 0.0
    %913 = vmatpush1.msra.mxu0 %v876
    %914 = vmatprep.subr.mxu0 0.0
    %915 = vmatpush1.msra.mxu0 %v877
    %916 = vmatprep.subr.mxu0 0.0
    %917 = vmatpush1.msra.mxu0 %v878
    %918 = vmatprep.subr.mxu0 0.0
    %919 = vmatpush1.msra.mxu0 %v879
    %920 = vmatprep.subr.mxu0 0.0
    %921 = vmatpush1.msra.mxu0 %v880
    %922 = vmatprep.subr.mxu0 0.0
    %923 = vmatpush1.msra.mxu0 %v881
    %924 = vmatprep.subr.mxu0 0.0
    %925 = vmatpush1.msra.mxu0 %v882
    %926 = vmatprep.subr.mxu0 0.0
    %927 = vmatpush1.msra.mxu0 %v883
    %928 = vmatprep.subr.mxu0 0.0
    %929 = vmatpush1.msra.mxu0 %v884
    %930 = vmatprep.subr.mxu0 0.0
    %931 = vmatpush1.msra.mxu0 %v885
    %932 = vmatprep.subr.mxu0 0.0
    %933 = vmatpush1.msra.mxu0 %v886
    %934 = vmatprep.subr.mxu0 0.0
    %935 = vmatpush1.msra.mxu0 %v887
    %936 = vmatprep.subr.mxu0 0.0
    %937 = vmatpush1.msra.mxu0 %v888
    %938 = vmatprep.subr.mxu0 0.0
    %939 = vmatpush1.msra.mxu0 %v889
    %940 = vmatprep.subr.mxu0 0.0
    %941 = vmatpush1.msra.mxu0 %v890
    %942 = vmatprep.subr.mxu0 0.0
    %943 = vmatpush1.msra.mxu0 %v891
    %944 = vmatprep.subr.mxu0 0.0
    %945 = vmatpush1.msra.mxu0 %v892
    %946 = vmatprep.subr.mxu0 0.0
    %947 = vmatpush1.msra.mxu0 %v893
    %948 = vmatprep.subr.mxu0 0.0
    %949 = vmatpush1.msra.mxu0 %v894
    %950 = vmatprep.subr.mxu0 0.0
    %951 = vmatpush1.msra.mxu0 %v895
    %952 = vmatprep.subr.mxu0 0.0
    %953 = vmatpush1.msra.mxu0 %v896
    %954 = vmatprep.subr.mxu0 0.0
    %955 = vmatpush1.msra.mxu0 %v904
    %956 = vmatprep.subr.mxu0 0.0
    %957 = vmatpush1.msra.mxu0 0.0
    %958 = vmatprep.subr.mxu0 0.0
    %959 = vmatpush1.msra.mxu0 0.0
    %960 = vmatprep.subr.mxu0 0.0
    %961 = vmatpush1.msra.mxu0 0.0
    %962 = vmatprep.subr.mxu0 0.0
    %963 = vmatpush1.msra.mxu0 0.0
    %964 = vmatprep.subr.mxu0 0.0
    %965 = vmatpush1.msra.mxu0 0.0
    %966 = vmatprep.subr.mxu0 0.0
    %967 = vmatpush1.msra.mxu0 0.0
    %968 = vmatprep.subr.mxu0 0.0
    %969 = vmatpush1.msra.mxu0 0.0
    %970 = vmatprep.mubr.f32.mxu0 %v901
    %971 = vmatmul.mubr.f32.gmra.mrb[0].mxu0 %v898
    %v972 = vpop.f32.mrb[0].mxu0
    %v973 = vadd.f32 0.0, %v972
    %v974 = vpop.f32.mrb[0].mxu0
    %975 = vdwg.mxu0
    %v976 = vadd.f32 %v871, %v973
    %s977 = scalar_lea.vmem [#allocation2], 1000
    %v978 = vld [vmem:[%s977] sm:$0xff]
    %v979 = vld [vmem:[%s977 + $0x8] sm:$0xff]
    %v980 = vld [vmem:[%s977 + $0x10] sm:$0xff]
    %v981 = vld [vmem:[%s977 + $0x18] sm:$0xff]
    %v982 = vld [vmem:[%s977 + $0x20] sm:$0xff]
    %v983 = vld [vmem:[%s977 + $0x28] sm:$0xff]
    %v984 = vld [vmem:[%s977 + $0x30] sm:$0xff]
    %v985 = vld [vmem:[%s977 + $0x38] sm:$0xff]
    %v986 = vld [vmem:[%s977 + $0x40] sm:$0xff]
    %v987 = vld [vmem:[%s977 + $0x48] sm:$0xff]
    %v988 = vld [vmem:[%s977 + $0x50] sm:$0xff]
    %v989 = vld [vmem:[%s977 + $0x58] sm:$0xff]
    %v990 = vld [vmem:[%s977 + $0x60] sm:$0xff]
    %v991 = vld [vmem:[%s977 + $0x68] sm:$0xff]
    %v992 = vld [vmem:[%s977 + $0x70] sm:$0xff]
    %v993 = vld [vmem:[%s977 + $0x78] sm:$0xff]
    %v994 = vld [vmem:[%s977 + $0x80] sm:$0xff]
    %v995 = vld [vmem:[%s977 + $0x88] sm:$0xff]
    %v996 = vld [vmem:[%s977 + $0x90] sm:$0xff]
    %v997 = vld [vmem:[%s977 + $0x98] sm:$0xff]
    %v998 = vld [vmem:[%s977 + $0xa0] sm:$0xff]
    %v999 = vld [vmem:[%s977 + $0xa8] sm:$0xff]
    %v1000 = vld [vmem:[%s977 + $0xb0] sm:$0xff]
    %v1001 = vld [vmem:[%s977 + $0xb8] sm:$0xff]
    %v1002 = vld [vmem:[%s977 + $0xc0] sm:$0xf]
    %v1003 = vrot.slane %v448, 5
    %v1004 = vrot.slane %v449, 5
    %v1006 = vsel %vm477, %v1004, 0
    %v1009 = vsel %vm481, %v1002, 0
    %1011 = vmatprep.subr.mxu0 0.0
    %1012 = vmatpush1.msra.mxu0 %v978
    %1013 = vmatprep.subr.mxu0 0.0
    %1014 = vmatpush1.msra.mxu0 %v979
    %1015 = vmatprep.subr.mxu0 0.0
    %1016 = vmatpush1.msra.mxu0 %v980
    %1017 = vmatprep.subr.mxu0 0.0
    %1018 = vmatpush1.msra.mxu0 %v981
    %1019 = vmatprep.subr.mxu0 0.0
    %1020 = vmatpush1.msra.mxu0 %v982
    %1021 = vmatprep.subr.mxu0 0.0
    %1022 = vmatpush1.msra.mxu0 %v983
    %1023 = vmatprep.subr.mxu0 0.0
    %1024 = vmatpush1.msra.mxu0 %v984
    %1025 = vmatprep.subr.mxu0 0.0
    %1026 = vmatpush1.msra.mxu0 %v985
    %1027 = vmatprep.subr.mxu0 0.0
    %1028 = vmatpush1.msra.mxu0 %v986
    %1029 = vmatprep.subr.mxu0 0.0
    %1030 = vmatpush1.msra.mxu0 %v987
    %1031 = vmatprep.subr.mxu0 0.0
    %1032 = vmatpush1.msra.mxu0 %v988
    %1033 = vmatprep.subr.mxu0 0.0
    %1034 = vmatpush1.msra.mxu0 %v989
    %1035 = vmatprep.subr.mxu0 0.0
    %1036 = vmatpush1.msra.mxu0 %v990
    %1037 = vmatprep.subr.mxu0 0.0
    %1038 = vmatpush1.msra.mxu0 %v991
    %1039 = vmatprep.subr.mxu0 0.0
    %1040 = vmatpush1.msra.mxu0 %v992
    %1041 = vmatprep.subr.mxu0 0.0
    %1042 = vmatpush1.msra.mxu0 %v993
    %1043 = vmatprep.subr.mxu0 0.0
    %1044 = vmatpush1.msra.mxu0 %v994
    %1045 = vmatprep.subr.mxu0 0.0
    %1046 = vmatpush1.msra.mxu0 %v995
    %1047 = vmatprep.subr.mxu0 0.0
    %1048 = vmatpush1.msra.mxu0 %v996
    %1049 = vmatprep.subr.mxu0 0.0
    %1050 = vmatpush1.msra.mxu0 %v997
    %1051 = vmatprep.subr.mxu0 0.0
    %1052 = vmatpush1.msra.mxu0 %v998
    %1053 = vmatprep.subr.mxu0 0.0
    %1054 = vmatpush1.msra.mxu0 %v999
    %1055 = vmatprep.subr.mxu0 0.0
    %1056 = vmatpush1.msra.mxu0 %v1000
    %1057 = vmatprep.subr.mxu0 0.0
    %1058 = vmatpush1.msra.mxu0 %v1001
    %1059 = vmatprep.subr.mxu0 0.0
    %1060 = vmatpush1.msra.mxu0 %v1009
    %1061 = vmatprep.subr.mxu0 0.0
    %1062 = vmatpush1.msra.mxu0 0.0
    %1063 = vmatprep.subr.mxu0 0.0
    %1064 = vmatpush1.msra.mxu0 0.0
    %1065 = vmatprep.subr.mxu0 0.0
    %1066 = vmatpush1.msra.mxu0 0.0
    %1067 = vmatprep.subr.mxu0 0.0
    %1068 = vmatpush1.msra.mxu0 0.0
    %1069 = vmatprep.subr.mxu0 0.0
    %1070 = vmatpush1.msra.mxu0 0.0
    %1071 = vmatprep.subr.mxu0 0.0
    %1072 = vmatpush1.msra.mxu0 0.0
    %1073 = vmatprep.subr.mxu0 0.0
    %1074 = vmatpush1.msra.mxu0 0.0
    %1075 = vmatprep.mubr.f32.mxu0 %v1006
    %1076 = vmatmul.mubr.f32.gmra.mrb[0].mxu0 %v1003
    %v1077 = vpop.f32.mrb[0].mxu0
    %v1078 = vadd.f32 0.0, %v1077
    %v1079 = vpop.f32.mrb[0].mxu0
    %1080 = vdwg.mxu0
    %v1081 = vadd.f32 %v976, %v1078
    %s1082 = scalar_lea.vmem [#allocation2], 1200
    %v1083 = vld [vmem:[%s1082] sm:$0xff]
    %v1084 = vld [vmem:[%s1082 + $0x8] sm:$0xff]
    %v1085 = vld [vmem:[%s1082 + $0x10] sm:$0xff]
    %v1086 = vld [vmem:[%s1082 + $0x18] sm:$0xff]
    %v1087 = vld [vmem:[%s1082 + $0x20] sm:$0xff]
    %v1088 = vld [vmem:[%s1082 + $0x28] sm:$0xff]
    %v1089 = vld [vmem:[%s1082 + $0x30] sm:$0xff]
    %v1090 = vld [vmem:[%s1082 + $0x38] sm:$0xff]
    %v1091 = vld [vmem:[%s1082 + $0x40] sm:$0xff]
    %v1092 = vld [vmem:[%s1082 + $0x48] sm:$0xff]
    %v1093 = vld [vmem:[%s1082 + $0x50] sm:$0xff]
    %v1094 = vld [vmem:[%s1082 + $0x58] sm:$0xff]
    %v1095 = vld [vmem:[%s1082 + $0x60] sm:$0xff]
    %v1096 = vld [vmem:[%s1082 + $0x68] sm:$0xff]
    %v1097 = vld [vmem:[%s1082 + $0x70] sm:$0xff]
    %v1098 = vld [vmem:[%s1082 + $0x78] sm:$0xff]
    %v1099 = vld [vmem:[%s1082 + $0x80] sm:$0xff]
    %v1100 = vld [vmem:[%s1082 + $0x88] sm:$0xff]
    %v1101 = vld [vmem:[%s1082 + $0x90] sm:$0xff]
    %v1102 = vld [vmem:[%s1082 + $0x98] sm:$0xff]
    %v1103 = vld [vmem:[%s1082 + $0xa0] sm:$0xff]
    %v1104 = vld [vmem:[%s1082 + $0xa8] sm:$0xff]
    %v1105 = vld [vmem:[%s1082 + $0xb0] sm:$0xff]
    %v1106 = vld [vmem:[%s1082 + $0xb8] sm:$0xff]
    %v1107 = vld [vmem:[%s1082 + $0xc0] sm:$0xf]
    %v1108 = vrot.slane %v448, 6
    %v1109 = vrot.slane %v449, 6
    %v1111 = vsel %vm477, %v1109, 0
    %v1114 = vsel %vm481, %v1107, 0
    %1116 = vmatprep.subr.mxu0 0.0
    %1117 = vmatpush1.msra.mxu0 %v1083
    %1118 = vmatprep.subr.mxu0 0.0
    %1119 = vmatpush1.msra.mxu0 %v1084
    %1120 = vmatprep.subr.mxu0 0.0
    %1121 = vmatpush1.msra.mxu0 %v1085
    %1122 = vmatprep.subr.mxu0 0.0
    %1123 = vmatpush1.msra.mxu0 %v1086
    %1124 = vmatprep.subr.mxu0 0.0
    %1125 = vmatpush1.msra.mxu0 %v1087
    %1126 = vmatprep.subr.mxu0 0.0
    %1127 = vmatpush1.msra.mxu0 %v1088
    %1128 = vmatprep.subr.mxu0 0.0
    %1129 = vmatpush1.msra.mxu0 %v1089
    %1130 = vmatprep.subr.mxu0 0.0
    %1131 = vmatpush1.msra.mxu0 %v1090
    %1132 = vmatprep.subr.mxu0 0.0
    %1133 = vmatpush1.msra.mxu0 %v1091
    %1134 = vmatprep.subr.mxu0 0.0
    %1135 = vmatpush1.msra.mxu0 %v1092
    %1136 = vmatprep.subr.mxu0 0.0
    %1137 = vmatpush1.msra.mxu0 %v1093
    %1138 = vmatprep.subr.mxu0 0.0
    %1139 = vmatpush1.msra.mxu0 %v1094
    %1140 = vmatprep.subr.mxu0 0.0
    %1141 = vmatpush1.msra.mxu0 %v1095
    %1142 = vmatprep.subr.mxu0 0.0
    %1143 = vmatpush1.msra.mxu0 %v1096
    %1144 = vmatprep.subr.mxu0 0.0
    %1145 = vmatpush1.msra.mxu0 %v1097
    %1146 = vmatprep.subr.mxu0 0.0
    %1147 = vmatpush1.msra.mxu0 %v1098
    %1148 = vmatprep.subr.mxu0 0.0
    %1149 = vmatpush1.msra.mxu0 %v1099
    %1150 = vmatprep.subr.mxu0 0.0
    %1151 = vmatpush1.msra.mxu0 %v1100
    %1152 = vmatprep.subr.mxu0 0.0
    %1153 = vmatpush1.msra.mxu0 %v1101
    %1154 = vmatprep.subr.mxu0 0.0
    %1155 = vmatpush1.msra.mxu0 %v1102
    %1156 = vmatprep.subr.mxu0 0.0
    %1157 = vmatpush1.msra.mxu0 %v1103
    %1158 = vmatprep.subr.mxu0 0.0
    %1159 = vmatpush1.msra.mxu0 %v1104
    %1160 = vmatprep.subr.mxu0 0.0
    %1161 = vmatpush1.msra.mxu0 %v1105
    %1162 = vmatprep.subr.mxu0 0.0
    %1163 = vmatpush1.msra.mxu0 %v1106
    %1164 = vmatprep.subr.mxu0 0.0
    %1165 = vmatpush1.msra.mxu0 %v1114
    %1166 = vmatprep.subr.mxu0 0.0
    %1167 = vmatpush1.msra.mxu0 0.0
    %1168 = vmatprep.subr.mxu0 0.0
    %1169 = vmatpush1.msra.mxu0 0.0
    %1170 = vmatprep.subr.mxu0 0.0
    %1171 = vmatpush1.msra.mxu0 0.0
    %1172 = vmatprep.subr.mxu0 0.0
    %1173 = vmatpush1.msra.mxu0 0.0
    %1174 = vmatprep.subr.mxu0 0.0
    %1175 = vmatpush1.msra.mxu0 0.0
    %1176 = vmatprep.subr.mxu0 0.0
    %1177 = vmatpush1.msra.mxu0 0.0
    %1178 = vmatprep.subr.mxu0 0.0
    %1179 = vmatpush1.msra.mxu0 0.0
    %1180 = vmatprep.mubr.f32.mxu0 %v1111
    %1181 = vmatmul.mubr.f32.gmra.mrb[0].mxu0 %v1108
    %v1182 = vpop.f32.mrb[0].mxu0
    %v1183 = vadd.f32 0.0, %v1182
    %v1184 = vpop.f32.mrb[0].mxu0
    %1185 = vdwg.mxu0
    %v1186 = vadd.f32 %v1081, %v1183
    %s1187 = scalar_lea.vmem [#allocation2], 1400
    %v1188 = vld [vmem:[%s1187] sm:$0xff]
    %v1189 = vld [vmem:[%s1187 + $0x8] sm:$0xff]
    %v1190 = vld [vmem:[%s1187 + $0x10] sm:$0xff]
    %v1191 = vld [vmem:[%s1187 + $0x18] sm:$0xff]
    %v1192 = vld [vmem:[%s1187 + $0x20] sm:$0xff]
    %v1193 = vld [vmem:[%s1187 + $0x28] sm:$0xff]
    %v1194 = vld [vmem:[%s1187 + $0x30] sm:$0xff]
    %v1195 = vld [vmem:[%s1187 + $0x38] sm:$0xff]
    %v1196 = vld [vmem:[%s1187 + $0x40] sm:$0xff]
    %v1197 = vld [vmem:[%s1187 + $0x48] sm:$0xff]
    %v1198 = vld [vmem:[%s1187 + $0x50] sm:$0xff]
    %v1199 = vld [vmem:[%s1187 + $0x58] sm:$0xff]
    %v1200 = vld [vmem:[%s1187 + $0x60] sm:$0xff]
    %v1201 = vld [vmem:[%s1187 + $0x68] sm:$0xff]
    %v1202 = vld [vmem:[%s1187 + $0x70] sm:$0xff]
    %v1203 = vld [vmem:[%s1187 + $0x78] sm:$0xff]
    %v1204 = vld [vmem:[%s1187 + $0x80] sm:$0xff]
    %v1205 = vld [vmem:[%s1187 + $0x88] sm:$0xff]
    %v1206 = vld [vmem:[%s1187 + $0x90] sm:$0xff]
    %v1207 = vld [vmem:[%s1187 + $0x98] sm:$0xff]
    %v1208 = vld [vmem:[%s1187 + $0xa0] sm:$0xff]
    %v1209 = vld [vmem:[%s1187 + $0xa8] sm:$0xff]
    %v1210 = vld [vmem:[%s1187 + $0xb0] sm:$0xff]
    %v1211 = vld [vmem:[%s1187 + $0xb8] sm:$0xff]
    %v1212 = vld [vmem:[%s1187 + $0xc0] sm:$0xf]
    %v1213 = vrot.slane %v448, 7
    %v1214 = vrot.slane %v449, 7
    %v1216 = vsel %vm477, %v1214, 0
    %v1219 = vsel %vm481, %v1212, 0
    %1221 = vmatprep.subr.mxu0 0.0
    %1222 = vmatpush1.msra.mxu0 %v1188
    %1223 = vmatprep.subr.mxu0 0.0
    %1224 = vmatpush1.msra.mxu0 %v1189
    %1225 = vmatprep.subr.mxu0 0.0
    %1226 = vmatpush1.msra.mxu0 %v1190
    %1227 = vmatprep.subr.mxu0 0.0
    %1228 = vmatpush1.msra.mxu0 %v1191
    %1229 = vmatprep.subr.mxu0 0.0
    %1230 = vmatpush1.msra.mxu0 %v1192
    %1231 = vmatprep.subr.mxu0 0.0
    %1232 = vmatpush1.msra.mxu0 %v1193
    %1233 = vmatprep.subr.mxu0 0.0
    %1234 = vmatpush1.msra.mxu0 %v1194
    %1235 = vmatprep.subr.mxu0 0.0
    %1236 = vmatpush1.msra.mxu0 %v1195
    %1237 = vmatprep.subr.mxu0 0.0
    %1238 = vmatpush1.msra.mxu0 %v1196
    %1239 = vmatprep.subr.mxu0 0.0
    %1240 = vmatpush1.msra.mxu0 %v1197
    %1241 = vmatprep.subr.mxu0 0.0
    %1242 = vmatpush1.msra.mxu0 %v1198
    %1243 = vmatprep.subr.mxu0 0.0
    %1244 = vmatpush1.msra.mxu0 %v1199
    %1245 = vmatprep.subr.mxu0 0.0
    %1246 = vmatpush1.msra.mxu0 %v1200
    %1247 = vmatprep.subr.mxu0 0.0
    %1248 = vmatpush1.msra.mxu0 %v1201
    %1249 = vmatprep.subr.mxu0 0.0
    %1250 = vmatpush1.msra.mxu0 %v1202
    %1251 = vmatprep.subr.mxu0 0.0
    %1252 = vmatpush1.msra.mxu0 %v1203
    %1253 = vmatprep.subr.mxu0 0.0
    %1254 = vmatpush1.msra.mxu0 %v1204
    %1255 = vmatprep.subr.mxu0 0.0
    %1256 = vmatpush1.msra.mxu0 %v1205
    %1257 = vmatprep.subr.mxu0 0.0
    %1258 = vmatpush1.msra.mxu0 %v1206
    %1259 = vmatprep.subr.mxu0 0.0
    %1260 = vmatpush1.msra.mxu0 %v1207
    %1261 = vmatprep.subr.mxu0 0.0
    %1262 = vmatpush1.msra.mxu0 %v1208
    %1263 = vmatprep.subr.mxu0 0.0
    %1264 = vmatpush1.msra.mxu0 %v1209
    %1265 = vmatprep.subr.mxu0 0.0
    %1266 = vmatpush1.msra.mxu0 %v1210
    %1267 = vmatprep.subr.mxu0 0.0
    %1268 = vmatpush1.msra.mxu0 %v1211
    %1269 = vmatprep.subr.mxu0 0.0
    %1270 = vmatpush1.msra.mxu0 %v1219
    %1271 = vmatprep.subr.mxu0 0.0
    %1272 = vmatpush1.msra.mxu0 0.0
    %1273 = vmatprep.subr.mxu0 0.0
    %1274 = vmatpush1.msra.mxu0 0.0
    %1275 = vmatprep.subr.mxu0 0.0
    %1276 = vmatpush1.msra.mxu0 0.0
    %1277 = vmatprep.subr.mxu0 0.0
    %1278 = vmatpush1.msra.mxu0 0.0
    %1279 = vmatprep.subr.mxu0 0.0
    %1280 = vmatpush1.msra.mxu0 0.0
    %1281 = vmatprep.subr.mxu0 0.0
    %1282 = vmatpush1.msra.mxu0 0.0
    %1283 = vmatprep.subr.mxu0 0.0
    %1284 = vmatpush1.msra.mxu0 0.0
    %1285 = vmatprep.mubr.f32.mxu0 %v1216
    %1286 = vmatmul.mubr.f32.gmra.mrb[0].mxu0 %v1213
    %v1287 = vpop.f32.mrb[0].mxu0
    %v1288 = vadd.f32 0.0, %v1287
    %v1289 = vpop.f32.mrb[0].mxu0
    %1290 = vdwg.mxu0
    %v1291 = vadd.f32 %v1186, %v1288
    %s1292 = scalar_lea.vmem [#allocation2], 1600
    %v1293 = vld [vmem:[%s1292] sm:$0xff]
    %v1294 = vld [vmem:[%s1292 + $0x8] sm:$0xff]
    %v1295 = vld [vmem:[%s1292 + $0x10] sm:$0xff]
    %v1296 = vld [vmem:[%s1292 + $0x18] sm:$0xff]
    %v1297 = vld [vmem:[%s1292 + $0x20] sm:$0xff]
    %v1298 = vld [vmem:[%s1292 + $0x28] sm:$0xff]
    %v1299 = vld [vmem:[%s1292 + $0x30] sm:$0xff]
    %v1300 = vld [vmem:[%s1292 + $0x38] sm:$0xff]
    %v1301 = vld [vmem:[%s1292 + $0x40] sm:$0xff]
    %v1302 = vld [vmem:[%s1292 + $0x48] sm:$0xff]
    %v1303 = vld [vmem:[%s1292 + $0x50] sm:$0xff]
    %v1304 = vld [vmem:[%s1292 + $0x58] sm:$0xff]
    %v1305 = vld [vmem:[%s1292 + $0x60] sm:$0xff]
    %v1306 = vld [vmem:[%s1292 + $0x68] sm:$0xff]
    %v1307 = vld [vmem:[%s1292 + $0x70] sm:$0xff]
    %v1308 = vld [vmem:[%s1292 + $0x78] sm:$0xff]
    %v1309 = vld [vmem:[%s1292 + $0x80] sm:$0xff]
    %v1310 = vld [vmem:[%s1292 + $0x88] sm:$0xff]
    %v1311 = vld [vmem:[%s1292 + $0x90] sm:$0xff]
    %v1312 = vld [vmem:[%s1292 + $0x98] sm:$0xff]
    %v1313 = vld [vmem:[%s1292 + $0xa0] sm:$0xff]
    %v1314 = vld [vmem:[%s1292 + $0xa8] sm:$0xff]
    %v1315 = vld [vmem:[%s1292 + $0xb0] sm:$0xff]
    %v1316 = vld [vmem:[%s1292 + $0xb8] sm:$0xff]
    %v1317 = vld [vmem:[%s1292 + $0xc0] sm:$0xf]
    %v1319 = vsel %vm477, %v451, 0
    %v1322 = vsel %vm481, %v1317, 0
    %1324 = vmatprep.subr.mxu0 0.0
    %1325 = vmatpush1.msra.mxu0 %v1293
    %1326 = vmatprep.subr.mxu0 0.0
    %1327 = vmatpush1.msra.mxu0 %v1294
    %1328 = vmatprep.subr.mxu0 0.0
    %1329 = vmatpush1.msra.mxu0 %v1295
    %1330 = vmatprep.subr.mxu0 0.0
    %1331 = vmatpush1.msra.mxu0 %v1296
    %1332 = vmatprep.subr.mxu0 0.0
    %1333 = vmatpush1.msra.mxu0 %v1297
    %1334 = vmatprep.subr.mxu0 0.0
    %1335 = vmatpush1.msra.mxu0 %v1298
    %1336 = vmatprep.subr.mxu0 0.0
    %1337 = vmatpush1.msra.mxu0 %v1299
    %1338 = vmatprep.subr.mxu0 0.0
    %1339 = vmatpush1.msra.mxu0 %v1300
    %1340 = vmatprep.subr.mxu0 0.0
    %1341 = vmatpush1.msra.mxu0 %v1301
    %1342 = vmatprep.subr.mxu0 0.0
    %1343 = vmatpush1.msra.mxu0 %v1302
    %1344 = vmatprep.subr.mxu0 0.0
    %1345 = vmatpush1.msra.mxu0 %v1303
    %1346 = vmatprep.subr.mxu0 0.0
    %1347 = vmatpush1.msra.mxu0 %v1304
    %1348 = vmatprep.subr.mxu0 0.0
    %1349 = vmatpush1.msra.mxu0 %v1305
    %1350 = vmatprep.subr.mxu0 0.0
    %1351 = vmatpush1.msra.mxu0 %v1306
    %1352 = vmatprep.subr.mxu0 0.0
    %1353 = vmatpush1.msra.mxu0 %v1307
    %1354 = vmatprep.subr.mxu0 0.0
    %1355 = vmatpush1.msra.mxu0 %v1308
    %1356 = vmatprep.subr.mxu0 0.0
    %1357 = vmatpush1.msra.mxu0 %v1309
    %1358 = vmatprep.subr.mxu0 0.0
    %1359 = vmatpush1.msra.mxu0 %v1310
    %1360 = vmatprep.subr.mxu0 0.0
    %1361 = vmatpush1.msra.mxu0 %v1311
    %1362 = vmatprep.subr.mxu0 0.0
    %1363 = vmatpush1.msra.mxu0 %v1312
    %1364 = vmatprep.subr.mxu0 0.0
    %1365 = vmatpush1.msra.mxu0 %v1313
    %1366 = vmatprep.subr.mxu0 0.0
    %1367 = vmatpush1.msra.mxu0 %v1314
    %1368 = vmatprep.subr.mxu0 0.0
    %1369 = vmatpush1.msra.mxu0 %v1315
    %1370 = vmatprep.subr.mxu0 0.0
    %1371 = vmatpush1.msra.mxu0 %v1316
    %1372 = vmatprep.subr.mxu0 0.0
    %1373 = vmatpush1.msra.mxu0 %v1322
    %1374 = vmatprep.subr.mxu0 0.0
    %1375 = vmatpush1.msra.mxu0 0.0
    %1376 = vmatprep.subr.mxu0 0.0
    %1377 = vmatpush1.msra.mxu0 0.0
    %1378 = vmatprep.subr.mxu0 0.0
    %1379 = vmatpush1.msra.mxu0 0.0
    %1380 = vmatprep.subr.mxu0 0.0
    %1381 = vmatpush1.msra.mxu0 0.0
    %1382 = vmatprep.subr.mxu0 0.0
    %1383 = vmatpush1.msra.mxu0 0.0
    %1384 = vmatprep.subr.mxu0 0.0
    %1385 = vmatpush1.msra.mxu0 0.0
    %1386 = vmatprep.subr.mxu0 0.0
    %1387 = vmatpush1.msra.mxu0 0.0
    %1388 = vmatprep.mubr.f32.mxu0 %v1319
    %1389 = vmatmul.mubr.f32.gmra.mrb[0].mxu0 %v450
    %v1390 = vpop.f32.mrb[0].mxu0
    %v1391 = vadd.f32 0.0, %v1390
    %v1392 = vpop.f32.mrb[0].mxu0
    %1393 = vdwg.mxu0
    %v1394 = vadd.f32 %v1291, %v1391
    %s1395 = scalar_lea.vmem [#allocation2], 1800
    %v1396 = vld [vmem:[%s1395] sm:$0xff]
    %v1397 = vld [vmem:[%s1395 + $0x8] sm:$0xff]
    %v1398 = vld [vmem:[%s1395 + $0x10] sm:$0xff]
    %v1399 = vld [vmem:[%s1395 + $0x18] sm:$0xff]
    %v1400 = vld [vmem:[%s1395 + $0x20] sm:$0xff]
    %v1401 = vld [vmem:[%s1395 + $0x28] sm:$0xff]
    %v1402 = vld [vmem:[%s1395 + $0x30] sm:$0xff]
    %v1403 = vld [vmem:[%s1395 + $0x38] sm:$0xff]
    %v1404 = vld [vmem:[%s1395 + $0x40] sm:$0xff]
    %v1405 = vld [vmem:[%s1395 + $0x48] sm:$0xff]
    %v1406 = vld [vmem:[%s1395 + $0x50] sm:$0xff]
    %v1407 = vld [vmem:[%s1395 + $0x58] sm:$0xff]
    %v1408 = vld [vmem:[%s1395 + $0x60] sm:$0xff]
    %v1409 = vld [vmem:[%s1395 + $0x68] sm:$0xff]
    %v1410 = vld [vmem:[%s1395 + $0x70] sm:$0xff]
    %v1411 = vld [vmem:[%s1395 + $0x78] sm:$0xff]
    %v1412 = vld [vmem:[%s1395 + $0x80] sm:$0xff]
    %v1413 = vld [vmem:[%s1395 + $0x88] sm:$0xff]
    %v1414 = vld [vmem:[%s1395 + $0x90] sm:$0xff]
    %v1415 = vld [vmem:[%s1395 + $0x98] sm:$0xff]
    %v1416 = vld [vmem:[%s1395 + $0xa0] sm:$0xff]
    %v1417 = vld [vmem:[%s1395 + $0xa8] sm:$0xff]
    %v1418 = vld [vmem:[%s1395 + $0xb0] sm:$0xff]
    %v1419 = vld [vmem:[%s1395 + $0xb8] sm:$0xff]
    %v1420 = vld [vmem:[%s1395 + $0xc0] sm:$0xf]
    %v1422 = vrot.slane %v450, 1
    %v1423 = vrot.slane %v451, 1
    %v1425 = vsel %vm477, %v1423, 0
    %v1428 = vsel %vm481, %v1420, 0
    %1430 = vmatprep.subr.mxu0 0.0
    %1431 = vmatpush1.msra.mxu0 %v1396
    %1432 = vmatprep.subr.mxu0 0.0
    %1433 = vmatpush1.msra.mxu0 %v1397
    %1434 = vmatprep.subr.mxu0 0.0
    %1435 = vmatpush1.msra.mxu0 %v1398
    %1436 = vmatprep.subr.mxu0 0.0
    %1437 = vmatpush1.msra.mxu0 %v1399
    %1438 = vmatprep.subr.mxu0 0.0
    %1439 = vmatpush1.msra.mxu0 %v1400
    %1440 = vmatprep.subr.mxu0 0.0
    %1441 = vmatpush1.msra.mxu0 %v1401
    %1442 = vmatprep.subr.mxu0 0.0
    %1443 = vmatpush1.msra.mxu0 %v1402
    %1444 = vmatprep.subr.mxu0 0.0
    %1445 = vmatpush1.msra.mxu0 %v1403
    %1446 = vmatprep.subr.mxu0 0.0
    %1447 = vmatpush1.msra.mxu0 %v1404
    %1448 = vmatprep.subr.mxu0 0.0
    %1449 = vmatpush1.msra.mxu0 %v1405
    %1450 = vmatprep.subr.mxu0 0.0
    %1451 = vmatpush1.msra.mxu0 %v1406
    %1452 = vmatprep.subr.mxu0 0.0
    %1453 = vmatpush1.msra.mxu0 %v1407
    %1454 = vmatprep.subr.mxu0 0.0
    %1455 = vmatpush1.msra.mxu0 %v1408
    %1456 = vmatprep.subr.mxu0 0.0
    %1457 = vmatpush1.msra.mxu0 %v1409
    %1458 = vmatprep.subr.mxu0 0.0
    %1459 = vmatpush1.msra.mxu0 %v1410
    %1460 = vmatprep.subr.mxu0 0.0
    %1461 = vmatpush1.msra.mxu0 %v1411
    %1462 = vmatprep.subr.mxu0 0.0
    %1463 = vmatpush1.msra.mxu0 %v1412
    %1464 = vmatprep.subr.mxu0 0.0
    %1465 = vmatpush1.msra.mxu0 %v1413
    %1466 = vmatprep.subr.mxu0 0.0
    %1467 = vmatpush1.msra.mxu0 %v1414
    %1468 = vmatprep.subr.mxu0 0.0
    %1469 = vmatpush1.msra.mxu0 %v1415
    %1470 = vmatprep.subr.mxu0 0.0
    %1471 = vmatpush1.msra.mxu0 %v1416
    %1472 = vmatprep.subr.mxu0 0.0
    %1473 = vmatpush1.msra.mxu0 %v1417
    %1474 = vmatprep.subr.mxu0 0.0
    %1475 = vmatpush1.msra.mxu0 %v1418
    %1476 = vmatprep.subr.mxu0 0.0
    %1477 = vmatpush1.msra.mxu0 %v1419
    %1478 = vmatprep.subr.mxu0 0.0
    %1479 = vmatpush1.msra.mxu0 %v1428
    %1480 = vmatprep.subr.mxu0 0.0
    %1481 = vmatpush1.msra.mxu0 0.0
    %1482 = vmatprep.subr.mxu0 0.0
    %1483 = vmatpush1.msra.mxu0 0.0
    %1484 = vmatprep.subr.mxu0 0.0
    %1485 = vmatpush1.msra.mxu0 0.0
    %1486 = vmatprep.subr.mxu0 0.0
    %1487 = vmatpush1.msra.mxu0 0.0
    %1488 = vmatprep.subr.mxu0 0.0
    %1489 = vmatpush1.msra.mxu0 0.0
    %1490 = vmatprep.subr.mxu0 0.0
    %1491 = vmatpush1.msra.mxu0 0.0
    %1492 = vmatprep.subr.mxu0 0.0
    %1493 = vmatpush1.msra.mxu0 0.0
    %1494 = vmatprep.mubr.f32.mxu0 %v1425
    %1495 = vmatmul.mubr.f32.gmra.mrb[0].mxu0 %v1422
    %v1496 = vpop.f32.mrb[0].mxu0
    %v1497 = vadd.f32 0.0, %v1496
    %v1498 = vpop.f32.mrb[0].mxu0
    %1499 = vdwg.mxu0
    %v1500 = vadd.f32 %v1394, %v1497
    %v1501 = vmax.f32 %v1500, 0.0
    %1502 = vmatprep.subr.mxu0 0.0
    %1503 = vmatpush1.msra.mxu0 %v46
    %1504 = vmatprep.subr.mxu0 0.0
    %1505 = vmatpush1.msra.mxu0 %v47
    %1506 = vmatprep.subr.mxu0 0.0
    %1507 = vmatpush1.msra.mxu0 %v48
    %1508 = vmatprep.subr.mxu0 0.0
    %1509 = vmatpush1.msra.mxu0 %v49
    %1510 = vmatprep.subr.mxu0 0.0
    %1511 = vmatpush1.msra.mxu0 %v50
    %1512 = vmatprep.subr.mxu0 0.0
    %1513 = vmatpush1.msra.mxu0 %v51
    %1514 = vmatprep.subr.mxu0 0.0
    %1515 = vmatpush1.msra.mxu0 %v52
    %1516 = vmatprep.subr.mxu0 0.0
    %1517 = vmatpush1.msra.mxu0 %v53
    %1518 = vmatprep.subr.mxu0 0.0
    %1519 = vmatpush1.msra.mxu0 %v54
    %1520 = vmatprep.subr.mxu0 0.0
    %1521 = vmatpush1.msra.mxu0 %v55
    %1522 = vmatprep.subr.mxu0 0.0
    %1523 = vmatpush1.msra.mxu0 %v56
    %1524 = vmatprep.subr.mxu0 0.0
    %1525 = vmatpush1.msra.mxu0 %v57
    %1526 = vmatprep.subr.mxu0 0.0
    %1527 = vmatpush1.msra.mxu0 %v58
    %1528 = vmatprep.subr.mxu0 0.0
    %1529 = vmatpush1.msra.mxu0 %v59
    %1530 = vmatprep.subr.mxu0 0.0
    %1531 = vmatpush1.msra.mxu0 %v60
    %1532 = vmatprep.subr.mxu0 0.0
    %1533 = vmatpush1.msra.mxu0 %v61
    %1534 = vmatprep.subr.mxu0 0.0
    %1535 = vmatpush1.msra.mxu0 0.0
    %1536 = vmatprep.subr.mxu0 0.0
    %1537 = vmatpush1.msra.mxu0 0.0
    %1538 = vmatprep.subr.mxu0 0.0
    %1539 = vmatpush1.msra.mxu0 0.0
    %1540 = vmatprep.subr.mxu0 0.0
    %1541 = vmatpush1.msra.mxu0 0.0
    %1542 = vmatprep.subr.mxu0 0.0
    %1543 = vmatpush1.msra.mxu0 0.0
    %1544 = vmatprep.subr.mxu0 0.0
    %1545 = vmatpush1.msra.mxu0 0.0
    %1546 = vmatprep.subr.mxu0 0.0
    %1547 = vmatpush1.msra.mxu0 0.0
    %1548 = vmatprep.subr.mxu0 0.0
    %1549 = vmatpush1.msra.mxu0 0.0
    %1550 = vmatprep.subr.mxu0 0.0
    %1551 = vmatpush1.msra.mxu0 0.0
    %1552 = vmatprep.subr.mxu0 0.0
    %1553 = vmatpush1.msra.mxu0 0.0
    %1554 = vmatprep.subr.mxu0 0.0
    %1555 = vmatpush1.msra.mxu0 0.0
    %1556 = vmatprep.subr.mxu0 0.0
    %1557 = vmatpush1.msra.mxu0 0.0
    %1558 = vmatprep.subr.mxu0 0.0
    %1559 = vmatpush1.msra.mxu0 0.0
    %1560 = vmatprep.subr.mxu0 0.0
    %1561 = vmatpush1.msra.mxu0 0.0
    %1562 = vmatprep.subr.mxu0 0.0
    %1563 = vmatpush1.msra.mxu0 0.0
    %1564 = vmatprep.subr.mxu0 0.0
    %1565 = vmatpush1.msra.mxu0 0.0
    %1566 = vmatprep.mubr.f32.mxu0 0.0
    %1567 = vmatmul.mubr.f32.gmra.mrb[0].mxu0 %v1501
    %v1568 = vpop.f32.mrb[0].mxu0
    %v1569 = vadd.f32 %v62, %v1568
    %v1570 = vpop.f32.mrb[0].mxu0
    %1571 = vdwg.mxu0
    %vm1572 = vcmask 73728
    %1573 = vst.msk [vmem:[#allocation5] sm:$0x1] %vm1572, %v1569
    %s1574 = scalar_lea.vmem %s0, 128
    %v1575 = vld [vmem:[%s1574] sm:$0xff]
    %v1576 = vld [vmem:[%s1574 + $0x8] sm:$0xff]
    %v1577 = vld [vmem:[%s1574 + $0x10] sm:$0x1]
    %v1578 = vld [vmem:[%s1574 + $0x18] sm:$0x1]
    %v1580 = vsel %vm74, %v1577, 0
    %v1583 = vsel %vm74, %v1578, 0
    %1585 = vmatprep.subr.mxu0 %v1576
    %1586 = vmatpush1.msra.mxu0 %v1575
    %1587 = vmatprep.subr.mxu0 %v1583
    %1588 = vmatpush1.msra.mxu0 %v1580
    %1589 = vmatprep.subr.mxu0 0.0
    %1590 = vmatpush1.msra.mxu0 0.0
    %1591 = vmatprep.subr.mxu0 0.0
    %1592 = vmatpush1.msra.mxu0 0.0
    %1593 = vmatprep.subr.mxu0 0.0
    %1594 = vmatpush1.msra.mxu0 0.0
    %1595 = vmatprep.subr.mxu0 0.0
    %1596 = vmatpush1.msra.mxu0 0.0
    %1597 = vmatprep.subr.mxu0 0.0
    %1598 = vmatpush1.msra.mxu0 0.0
    %1599 = vmatprep.subr.mxu0 0.0
    %1600 = vmatpush1.msra.mxu0 0.0
    %1601 = vmatprep.subr.mxu0 0.0
    %1602 = vmatpush1.msra.mxu0 0.0
    %1603 = vmatprep.subr.mxu0 0.0
    %1604 = vmatpush1.msra.mxu0 0.0
    %1605 = vmatprep.subr.mxu0 0.0
    %1606 = vmatpush1.msra.mxu0 0.0
    %1607 = vmatprep.subr.mxu0 0.0
    %1608 = vmatpush1.msra.mxu0 0.0
    %1609 = vmatprep.subr.mxu0 0.0
    %1610 = vmatpush1.msra.mxu0 0.0
    %1611 = vmatprep.subr.mxu0 0.0
    %1612 = vmatpush1.msra.mxu0 0.0
    %1613 = vmatprep.subr.mxu0 0.0
    %1614 = vmatpush1.msra.mxu0 0.0
    %1615 = vmatprep.subr.mxu0 0.0
    %1616 = vmatpush1.msra.mxu0 0.0
    %1617 = vmatprep.subr.mxu0 0.0
    %1618 = vmatpush1.msra.mxu0 0.0
    %1619 = vmatprep.subr.mxu0 0.0
    %1620 = vmatpush1.msra.mxu0 0.0
    %1621 = vmatprep.subr.mxu0 0.0
    %1622 = vmatpush1.msra.mxu0 0.0
    %1623 = vmatprep.subr.mxu0 0.0
    %1624 = vmatpush1.msra.mxu0 0.0
    %1625 = vmatprep.subr.mxu0 0.0
    %1626 = vmatpush1.msra.mxu0 0.0
    %1627 = vmatprep.subr.mxu0 0.0
    %1628 = vmatpush1.msra.mxu0 0.0
    %1629 = vmatprep.subr.mxu0 0.0
    %1630 = vmatpush1.msra.mxu0 0.0
    %1631 = vmatprep.subr.mxu0 0.0
    %1632 = vmatpush1.msra.mxu0 0.0
    %1633 = vmatprep.subr.mxu0 0.0
    %1634 = vmatpush1.msra.mxu0 0.0
    %1635 = vmatprep.subr.mxu0 0.0
    %1636 = vmatpush1.msra.mxu0 0.0
    %1637 = vmatprep.subr.mxu0 0.0
    %1638 = vmatpush1.msra.mxu0 0.0
    %1639 = vmatprep.subr.mxu0 0.0
    %1640 = vmatpush1.msra.mxu0 0.0
    %1641 = vmatprep.subr.mxu0 0.0
    %1642 = vmatpush1.msra.mxu0 0.0
    %1643 = vmatprep.subr.mxu0 0.0
    %1644 = vmatpush1.msra.mxu0 0.0
    %1645 = vmatprep.subr.mxu0 0.0
    %1646 = vmatpush1.msra.mxu0 0.0
    %1647 = vmatprep.subr.mxu0 0.0
    %1648 = vmatpush1.msra.mxu0 0.0
    %1649 = vmatprep.mubr.f32.mxu0 0.0
    %1650 = vmatmul.mubr.f32.gmra.mrb[0].mxu0 %v69
    %v1651 = vpop.f32.mrb[0].mxu0
    %v1652 = vadd.f32 0.0, %v1651
    %v1653 = vpop.f32.mrb[0].mxu0
    %v1654 = vadd.f32 0.0, %v1653
    %1655 = vmatprep.mubr.f32.mxu0 0.0
    %1656 = vmatmul.mubr.f32.gmra.mrb[0].mxu0 %v72
    %v1657 = vpop.f32.mrb[0].mxu0
    %v1658 = vadd.f32 0.0, %v1657
    %v1659 = vpop.f32.mrb[0].mxu0
    %v1660 = vadd.f32 0.0, %v1659
    %1661 = vdwg.mxu0
    %s1662 = scalar_lea.vmem %s0, 160
    %v1663 = vld [vmem:[%s1662] sm:$0xff]
    %v1664 = vld [vmem:[%s1662 + $0x8] sm:$0xff]
    %v1665 = vld [vmem:[%s1662 + $0x10] sm:$0x1]
    %v1666 = vld [vmem:[%s1662 + $0x18] sm:$0x1]
    %v1668 = vsel %vm74, %v1665, 0
    %v1671 = vsel %vm74, %v1666, 0
    %1673 = vmatprep.subr.mxu0 %v1664
    %1674 = vmatpush1.msra.mxu0 %v1663
    %1675 = vmatprep.subr.mxu0 %v1671
    %1676 = vmatpush1.msra.mxu0 %v1668
    %1677 = vmatprep.subr.mxu0 0.0
    %1678 = vmatpush1.msra.mxu0 0.0
    %1679 = vmatprep.subr.mxu0 0.0
    %1680 = vmatpush1.msra.mxu0 0.0
    %1681 = vmatprep.subr.mxu0 0.0
    %1682 = vmatpush1.msra.mxu0 0.0
    %1683 = vmatprep.subr.mxu0 0.0
    %1684 = vmatpush1.msra.mxu0 0.0
    %1685 = vmatprep.subr.mxu0 0.0
    %1686 = vmatpush1.msra.mxu0 0.0
    %1687 = vmatprep.subr.mxu0 0.0
    %1688 = vmatpush1.msra.mxu0 0.0
    %1689 = vmatprep.subr.mxu0 0.0
    %1690 = vmatpush1.msra.mxu0 0.0
    %1691 = vmatprep.subr.mxu0 0.0
    %1692 = vmatpush1.msra.mxu0 0.0
    %1693 = vmatprep.subr.mxu0 0.0
    %1694 = vmatpush1.msra.mxu0 0.0
    %1695 = vmatprep.subr.mxu0 0.0
    %1696 = vmatpush1.msra.mxu0 0.0
    %1697 = vmatprep.subr.mxu0 0.0
    %1698 = vmatpush1.msra.mxu0 0.0
    %1699 = vmatprep.subr.mxu0 0.0
    %1700 = vmatpush1.msra.mxu0 0.0
    %1701 = vmatprep.subr.mxu0 0.0
    %1702 = vmatpush1.msra.mxu0 0.0
    %1703 = vmatprep.subr.mxu0 0.0
    %1704 = vmatpush1.msra.mxu0 0.0
    %1705 = vmatprep.subr.mxu0 0.0
    %1706 = vmatpush1.msra.mxu0 0.0
    %1707 = vmatprep.subr.mxu0 0.0
    %1708 = vmatpush1.msra.mxu0 0.0
    %1709 = vmatprep.subr.mxu0 0.0
    %1710 = vmatpush1.msra.mxu0 0.0
    %1711 = vmatprep.subr.mxu0 0.0
    %1712 = vmatpush1.msra.mxu0 0.0
    %1713 = vmatprep.subr.mxu0 0.0
    %1714 = vmatpush1.msra.mxu0 0.0
    %1715 = vmatprep.subr.mxu0 0.0
    %1716 = vmatpush1.msra.mxu0 0.0
    %1717 = vmatprep.subr.mxu0 0.0
    %1718 = vmatpush1.msra.mxu0 0.0
    %1719 = vmatprep.subr.mxu0 0.0
    %1720 = vmatpush1.msra.mxu0 0.0
    %1721 = vmatprep.subr.mxu0 0.0
    %1722 = vmatpush1.msra.mxu0 0.0
    %1723 = vmatprep.subr.mxu0 0.0
    %1724 = vmatpush1.msra.mxu0 0.0
    %1725 = vmatprep.subr.mxu0 0.0
    %1726 = vmatpush1.msra.mxu0 0.0
    %1727 = vmatprep.subr.mxu0 0.0
    %1728 = vmatpush1.msra.mxu0 0.0
    %1729 = vmatprep.subr.mxu0 0.0
    %1730 = vmatpush1.msra.mxu0 0.0
    %1731 = vmatprep.subr.mxu0 0.0
    %1732 = vmatpush1.msra.mxu0 0.0
    %1733 = vmatprep.subr.mxu0 0.0
    %1734 = vmatpush1.msra.mxu0 0.0
    %1735 = vmatprep.subr.mxu0 0.0
    %1736 = vmatpush1.msra.mxu0 0.0
    %1737 = vmatprep.mubr.f32.mxu0 0.0
    %1738 = vmatmul.mubr.f32.gmra.mrb[0].mxu0 %v69
    %v1739 = vpop.f32.mrb[0].mxu0
    %v1740 = vadd.f32 0.0, %v1739
    %v1741 = vpop.f32.mrb[0].mxu0
    %v1742 = vadd.f32 0.0, %v1741
    %1743 = vmatprep.mubr.f32.mxu0 0.0
    %1744 = vmatmul.mubr.f32.gmra.mrb[0].mxu0 %v72
    %v1745 = vpop.f32.mrb[0].mxu0
    %v1746 = vadd.f32 0.0, %v1745
    %v1747 = vpop.f32.mrb[0].mxu0
    %v1748 = vadd.f32 0.0, %v1747
    %1749 = vdwg.mxu0
    %v1750 = vmax.f32 %v1652, %v1740
    %v1751 = vmax.f32 %v1654, %v1742
    %v1752 = vmax.f32 %v1658, %v1746
    %v1753 = vmax.f32 %v1660, %v1748
    %s1754 = scalar_lea.vmem %s0, 192
    %v1755 = vld [vmem:[%s1754] sm:$0xff]
    %v1756 = vld [vmem:[%s1754 + $0x8] sm:$0xff]
    %v1757 = vld [vmem:[%s1754 + $0x10] sm:$0x1]
    %v1758 = vld [vmem:[%s1754 + $0x18] sm:$0x1]
    %v1760 = vsel %vm74, %v1757, 0
    %v1763 = vsel %vm74, %v1758, 0
    %1765 = vmatprep.subr.mxu0 %v1756
    %1766 = vmatpush1.msra.mxu0 %v1755
    %1767 = vmatprep.subr.mxu0 %v1763
    %1768 = vmatpush1.msra.mxu0 %v1760
    %1769 = vmatprep.subr.mxu0 0.0
    %1770 = vmatpush1.msra.mxu0 0.0
    %1771 = vmatprep.subr.mxu0 0.0
    %1772 = vmatpush1.msra.mxu0 0.0
    %1773 = vmatprep.subr.mxu0 0.0
    %1774 = vmatpush1.msra.mxu0 0.0
    %1775 = vmatprep.subr.mxu0 0.0
    %1776 = vmatpush1.msra.mxu0 0.0
    %1777 = vmatprep.subr.mxu0 0.0
    %1778 = vmatpush1.msra.mxu0 0.0
    %1779 = vmatprep.subr.mxu0 0.0
    %1780 = vmatpush1.msra.mxu0 0.0
    %1781 = vmatprep.subr.mxu0 0.0
    %1782 = vmatpush1.msra.mxu0 0.0
    %1783 = vmatprep.subr.mxu0 0.0
    %1784 = vmatpush1.msra.mxu0 0.0
    %1785 = vmatprep.subr.mxu0 0.0
    %1786 = vmatpush1.msra.mxu0 0.0
    %1787 = vmatprep.subr.mxu0 0.0
    %1788 = vmatpush1.msra.mxu0 0.0
    %1789 = vmatprep.subr.mxu0 0.0
    %1790 = vmatpush1.msra.mxu0 0.0
    %1791 = vmatprep.subr.mxu0 0.0
    %1792 = vmatpush1.msra.mxu0 0.0
    %1793 = vmatprep.subr.mxu0 0.0
    %1794 = vmatpush1.msra.mxu0 0.0
    %1795 = vmatprep.subr.mxu0 0.0
    %1796 = vmatpush1.msra.mxu0 0.0
    %1797 = vmatprep.subr.mxu0 0.0
    %1798 = vmatpush1.msra.mxu0 0.0
    %1799 = vmatprep.subr.mxu0 0.0
    %1800 = vmatpush1.msra.mxu0 0.0
    %1801 = vmatprep.subr.mxu0 0.0
    %1802 = vmatpush1.msra.mxu0 0.0
    %1803 = vmatprep.subr.mxu0 0.0
    %1804 = vmatpush1.msra.mxu0 0.0
    %1805 = vmatprep.subr.mxu0 0.0
    %1806 = vmatpush1.msra.mxu0 0.0
    %1807 = vmatprep.subr.mxu0 0.0
    %1808 = vmatpush1.msra.mxu0 0.0
    %1809 = vmatprep.subr.mxu0 0.0
    %1810 = vmatpush1.msra.mxu0 0.0
    %1811 = vmatprep.subr.mxu0 0.0
    %1812 = vmatpush1.msra.mxu0 0.0
    %1813 = vmatprep.subr.mxu0 0.0
    %1814 = vmatpush1.msra.mxu0 0.0
    %1815 = vmatprep.subr.mxu0 0.0
    %1816 = vmatpush1.msra.mxu0 0.0
    %1817 = vmatprep.subr.mxu0 0.0
    %1818 = vmatpush1.msra.mxu0 0.0
    %1819 = vmatprep.subr.mxu0 0.0
    %1820 = vmatpush1.msra.mxu0 0.0
    %1821 = vmatprep.subr.mxu0 0.0
    %1822 = vmatpush1.msra.mxu0 0.0
    %1823 = vmatprep.subr.mxu0 0.0
    %1824 = vmatpush1.msra.mxu0 0.0
    %1825 = vmatprep.subr.mxu0 0.0
    %1826 = vmatpush1.msra.mxu0 0.0
    %1827 = vmatprep.subr.mxu0 0.0
    %1828 = vmatpush1.msra.mxu0 0.0
    %1829 = vmatprep.mubr.f32.mxu0 0.0
    %1830 = vmatmul.mubr.f32.gmra.mrb[0].mxu0 %v69
    %v1831 = vpop.f32.mrb[0].mxu0
    %v1832 = vadd.f32 0.0, %v1831
    %v1833 = vpop.f32.mrb[0].mxu0
    %v1834 = vadd.f32 0.0, %v1833
    %1835 = vmatprep.mubr.f32.mxu0 0.0
    %1836 = vmatmul.mubr.f32.gmra.mrb[0].mxu0 %v72
    %v1837 = vpop.f32.mrb[0].mxu0
    %v1838 = vadd.f32 0.0, %v1837
    %v1839 = vpop.f32.mrb[0].mxu0
    %v1840 = vadd.f32 0.0, %v1839
    %1841 = vdwg.mxu0
    %v1842 = vmax.f32 %v1750, %v1832
    %v1843 = vmax.f32 %v1751, %v1834
    %v1844 = vmax.f32 %v1752, %v1838
    %v1845 = vmax.f32 %v1753, %v1840
    %s1846 = scalar_lea.vmem %s0, 224
    %v1847 = vld [vmem:[%s1846] sm:$0xff]
    %v1848 = vld [vmem:[%s1846 + $0x8] sm:$0xff]
    %v1849 = vld [vmem:[%s1846 + $0x10] sm:$0x1]
    %v1850 = vld [vmem:[%s1846 + $0x18] sm:$0x1]
    %v1852 = vsel %vm74, %v1849, 0
    %v1855 = vsel %vm74, %v1850, 0
    %1857 = vmatprep.subr.mxu0 %v1848
    %1858 = vmatpush1.msra.mxu0 %v1847
    %1859 = vmatprep.subr.mxu0 %v1855
    %1860 = vmatpush1.msra.mxu0 %v1852
    %1861 = vmatprep.subr.mxu0 0.0
    %1862 = vmatpush1.msra.mxu0 0.0
    %1863 = vmatprep.subr.mxu0 0.0
    %1864 = vmatpush1.msra.mxu0 0.0
    %1865 = vmatprep.subr.mxu0 0.0
    %1866 = vmatpush1.msra.mxu0 0.0
    %1867 = vmatprep.subr.mxu0 0.0
    %1868 = vmatpush1.msra.mxu0 0.0
    %1869 = vmatprep.subr.mxu0 0.0
    %1870 = vmatpush1.msra.mxu0 0.0
    %1871 = vmatprep.subr.mxu0 0.0
    %1872 = vmatpush1.msra.mxu0 0.0
    %1873 = vmatprep.subr.mxu0 0.0
    %1874 = vmatpush1.msra.mxu0 0.0
    %1875 = vmatprep.subr.mxu0 0.0
    %1876 = vmatpush1.msra.mxu0 0.0
    %1877 = vmatprep.subr.mxu0 0.0
    %1878 = vmatpush1.msra.mxu0 0.0
    %1879 = vmatprep.subr.mxu0 0.0
    %1880 = vmatpush1.msra.mxu0 0.0
    %1881 = vmatprep.subr.mxu0 0.0
    %1882 = vmatpush1.msra.mxu0 0.0
    %1883 = vmatprep.subr.mxu0 0.0
    %1884 = vmatpush1.msra.mxu0 0.0
    %1885 = vmatprep.subr.mxu0 0.0
    %1886 = vmatpush1.msra.mxu0 0.0
    %1887 = vmatprep.subr.mxu0 0.0
    %1888 = vmatpush1.msra.mxu0 0.0
    %1889 = vmatprep.subr.mxu0 0.0
    %1890 = vmatpush1.msra.mxu0 0.0
    %1891 = vmatprep.subr.mxu0 0.0
    %1892 = vmatpush1.msra.mxu0 0.0
    %1893 = vmatprep.subr.mxu0 0.0
    %1894 = vmatpush1.msra.mxu0 0.0
    %1895 = vmatprep.subr.mxu0 0.0
    %1896 = vmatpush1.msra.mxu0 0.0
    %1897 = vmatprep.subr.mxu0 0.0
    %1898 = vmatpush1.msra.mxu0 0.0
    %1899 = vmatprep.subr.mxu0 0.0
    %1900 = vmatpush1.msra.mxu0 0.0
    %1901 = vmatprep.subr.mxu0 0.0
    %1902 = vmatpush1.msra.mxu0 0.0
    %1903 = vmatprep.subr.mxu0 0.0
    %1904 = vmatpush1.msra.mxu0 0.0
    %1905 = vmatprep.subr.mxu0 0.0
    %1906 = vmatpush1.msra.mxu0 0.0
    %1907 = vmatprep.subr.mxu0 0.0
    %1908 = vmatpush1.msra.mxu0 0.0
    %1909 = vmatprep.subr.mxu0 0.0
    %1910 = vmatpush1.msra.mxu0 0.0
    %1911 = vmatprep.subr.mxu0 0.0
    %1912 = vmatpush1.msra.mxu0 0.0
    %1913 = vmatprep.subr.mxu0 0.0
    %1914 = vmatpush1.msra.mxu0 0.0
    %1915 = vmatprep.subr.mxu0 0.0
    %1916 = vmatpush1.msra.mxu0 0.0
    %1917 = vmatprep.subr.mxu0 0.0
    %1918 = vmatpush1.msra.mxu0 0.0
    %1919 = vmatprep.subr.mxu0 0.0
    %1920 = vmatpush1.msra.mxu0 0.0
    %1921 = vmatprep.mubr.f32.mxu0 0.0
    %1922 = vmatmul.mubr.f32.gmra.mrb[0].mxu0 %v69
    %v1923 = vpop.f32.mrb[0].mxu0
    %v1924 = vadd.f32 0.0, %v1923
    %v1925 = vpop.f32.mrb[0].mxu0
    %v1926 = vadd.f32 0.0, %v1925
    %1927 = vmatprep.mubr.f32.mxu0 0.0
    %1928 = vmatmul.mubr.f32.gmra.mrb[0].mxu0 %v72
    %v1929 = vpop.f32.mrb[0].mxu0
    %v1930 = vadd.f32 0.0, %v1929
    %v1931 = vpop.f32.mrb[0].mxu0
    %v1932 = vadd.f32 0.0, %v1931
    %1933 = vdwg.mxu0
    %v1934 = vmax.f32 %v1842, %v1924
    %v1935 = vmax.f32 %v1843, %v1926
    %v1936 = vmax.f32 %v1844, %v1930
    %v1937 = vmax.f32 %v1845, %v1932
    %v1938 = vadd.f32 %v1934, %v437
    %v1939 = vadd.f32 %v1935, %v437
    %v1940 = vadd.f32 %v1936, %v442
    %v1941 = vadd.f32 %v1937, %v442
    %v1942 = vtanh.pop %v1938
    %v1943 = vtanh.pop %v1939
    %v1944 = vtanh.pop %v1940
    %v1945 = vtanh.pop %v1941
    %v1946 = vld [vmem:[#allocation2] sm:$0xff]
    %v1947 = vld [vmem:[#allocation2 + $0x8] sm:$0xff]
    %v1948 = vld [vmem:[#allocation2 + $0x10] sm:$0xff]
    %v1949 = vld [vmem:[#allocation2 + $0x18] sm:$0xff]
    %v1950 = vld [vmem:[#allocation2 + $0x20] sm:$0xff]
    %v1951 = vld [vmem:[#allocation2 + $0x28] sm:$0xff]
    %v1952 = vld [vmem:[#allocation2 + $0x30] sm:$0xff]
    %v1953 = vld [vmem:[#allocation2 + $0x38] sm:$0xff]
    %v1954 = vld [vmem:[#allocation2 + $0x40] sm:$0xff]
    %v1955 = vld [vmem:[#allocation2 + $0x48] sm:$0xff]
    %v1956 = vld [vmem:[#allocation2 + $0x50] sm:$0xff]
    %v1957 = vld [vmem:[#allocation2 + $0x58] sm:$0xff]
    %v1958 = vld [vmem:[#allocation2 + $0x60] sm:$0xff]
    %v1959 = vld [vmem:[#allocation2 + $0x68] sm:$0xff]
    %v1960 = vld [vmem:[#allocation2 + $0x70] sm:$0xff]
    %v1961 = vld [vmem:[#allocation2 + $0x78] sm:$0xff]
    %v1962 = vld [vmem:[#allocation2 + $0x80] sm:$0xff]
    %v1963 = vld [vmem:[#allocation2 + $0x88] sm:$0xff]
    %v1964 = vld [vmem:[#allocation2 + $0x90] sm:$0xff]
    %v1965 = vld [vmem:[#allocation2 + $0x98] sm:$0xff]
    %v1966 = vld [vmem:[#allocation2 + $0xa0] sm:$0xff]
    %v1967 = vld [vmem:[#allocation2 + $0xa8] sm:$0xff]
    %v1968 = vld [vmem:[#allocation2 + $0xb0] sm:$0xff]
    %v1969 = vld [vmem:[#allocation2 + $0xb8] sm:$0xff]
    %v1970 = vld [vmem:[#allocation2 + $0xc0] sm:$0xf]
    %v1972 = vsel %vm477, %v1943, 0
    %v1975 = vsel %vm481, %v1970, 0
    %1977 = vmatprep.subr.mxu0 0.0
    %1978 = vmatpush1.msra.mxu0 %v1946
    %1979 = vmatprep.subr.mxu0 0.0
    %1980 = vmatpush1.msra.mxu0 %v1947
    %1981 = vmatprep.subr.mxu0 0.0
    %1982 = vmatpush1.msra.mxu0 %v1948
    %1983 = vmatprep.subr.mxu0 0.0
    %1984 = vmatpush1.msra.mxu0 %v1949
    %1985 = vmatprep.subr.mxu0 0.0
    %1986 = vmatpush1.msra.mxu0 %v1950
    %1987 = vmatprep.subr.mxu0 0.0
    %1988 = vmatpush1.msra.mxu0 %v1951
    %1989 = vmatprep.subr.mxu0 0.0
    %1990 = vmatpush1.msra.mxu0 %v1952
    %1991 = vmatprep.subr.mxu0 0.0
    %1992 = vmatpush1.msra.mxu0 %v1953
    %1993 = vmatprep.subr.mxu0 0.0
    %1994 = vmatpush1.msra.mxu0 %v1954
    %1995 = vmatprep.subr.mxu0 0.0
    %1996 = vmatpush1.msra.mxu0 %v1955
    %1997 = vmatprep.subr.mxu0 0.0
    %1998 = vmatpush1.msra.mxu0 %v1956
    %1999 = vmatprep.subr.mxu0 0.0
    %2000 = vmatpush1.msra.mxu0 %v1957
    %2001 = vmatprep.subr.mxu0 0.0
    %2002 = vmatpush1.msra.mxu0 %v1958
    %2003 = vmatprep.subr.mxu0 0.0
    %2004 = vmatpush1.msra.mxu0 %v1959
    %2005 = vmatprep.subr.mxu0 0.0
    %2006 = vmatpush1.msra.mxu0 %v1960
    %2007 = vmatprep.subr.mxu0 0.0
    %2008 = vmatpush1.msra.mxu0 %v1961
    %2009 = vmatprep.subr.mxu0 0.0
    %2010 = vmatpush1.msra.mxu0 %v1962
    %2011 = vmatprep.subr.mxu0 0.0
    %2012 = vmatpush1.msra.mxu0 %v1963
    %2013 = vmatprep.subr.mxu0 0.0
    %2014 = vmatpush1.msra.mxu0 %v1964
    %2015 = vmatprep.subr.mxu0 0.0
    %2016 = vmatpush1.msra.mxu0 %v1965
    %2017 = vmatprep.subr.mxu0 0.0
    %2018 = vmatpush1.msra.mxu0 %v1966
    %2019 = vmatprep.subr.mxu0 0.0
    %2020 = vmatpush1.msra.mxu0 %v1967
    %2021 = vmatprep.subr.mxu0 0.0
    %2022 = vmatpush1.msra.mxu0 %v1968
    %2023 = vmatprep.subr.mxu0 0.0
    %2024 = vmatpush1.msra.mxu0 %v1969
    %2025 = vmatprep.subr.mxu0 0.0
    %2026 = vmatpush1.msra.mxu0 %v1975
    %2027 = vmatprep.subr.mxu0 0.0
    %2028 = vmatpush1.msra.mxu0 0.0
    %2029 = vmatprep.subr.mxu0 0.0
    %2030 = vmatpush1.msra.mxu0 0.0
    %2031 = vmatprep.subr.mxu0 0.0
    %2032 = vmatpush1.msra.mxu0 0.0
    %2033 = vmatprep.subr.mxu0 0.0
    %2034 = vmatpush1.msra.mxu0 0.0
    %2035 = vmatprep.subr.mxu0 0.0
    %2036 = vmatpush1.msra.mxu0 0.0
    %2037 = vmatprep.subr.mxu0 0.0
    %2038 = vmatpush1.msra.mxu0 0.0
    %2039 = vmatprep.subr.mxu0 0.0
    %2040 = vmatpush1.msra.mxu0 0.0
    %2041 = vmatprep.mubr.f32.mxu0 %v1972
    %2042 = vmatmul.mubr.f32.gmra.mrb[0].mxu0 %v1942
    %v2043 = vpop.f32.mrb[0].mxu0
    %v2044 = vadd.f32 0.0, %v2043
    %v2045 = vpop.f32.mrb[0].mxu0
    %2046 = vdwg.mxu0
    %v2047 = vadd.f32 %v45, %v2044
    %v2048 = vld [vmem:[%s556] sm:$0xff]
    %v2049 = vld [vmem:[%s556 + $0x8] sm:$0xff]
    %v2050 = vld [vmem:[%s556 + $0x10] sm:$0xff]
    %v2051 = vld [vmem:[%s556 + $0x18] sm:$0xff]
    %v2052 = vld [vmem:[%s556 + $0x20] sm:$0xff]
    %v2053 = vld [vmem:[%s556 + $0x28] sm:$0xff]
    %v2054 = vld [vmem:[%s556 + $0x30] sm:$0xff]
    %v2055 = vld [vmem:[%s556 + $0x38] sm:$0xff]
    %v2056 = vld [vmem:[%s556 + $0x40] sm:$0xff]
    %v2057 = vld [vmem:[%s556 + $0x48] sm:$0xff]
    %v2058 = vld [vmem:[%s556 + $0x50] sm:$0xff]
    %v2059 = vld [vmem:[%s556 + $0x58] sm:$0xff]
    %v2060 = vld [vmem:[%s556 + $0x60] sm:$0xff]
    %v2061 = vld [vmem:[%s556 + $0x68] sm:$0xff]
    %v2062 = vld [vmem:[%s556 + $0x70] sm:$0xff]
    %v2063 = vld [vmem:[%s556 + $0x78] sm:$0xff]
    %v2064 = vld [vmem:[%s556 + $0x80] sm:$0xff]
    %v2065 = vld [vmem:[%s556 + $0x88] sm:$0xff]
    %v2066 = vld [vmem:[%s556 + $0x90] sm:$0xff]
    %v2067 = vld [vmem:[%s556 + $0x98] sm:$0xff]
    %v2068 = vld [vmem:[%s556 + $0xa0] sm:$0xff]
    %v2069 = vld [vmem:[%s556 + $0xa8] sm:$0xff]
    %v2070 = vld [vmem:[%s556 + $0xb0] sm:$0xff]
    %v2071 = vld [vmem:[%s556 + $0xb8] sm:$0xff]
    %v2072 = vld [vmem:[%s556 + $0xc0] sm:$0xf]
    %v2074 = vrot.slane %v1942, 1
    %v2075 = vrot.slane %v1943, 1
    %v2077 = vsel %vm477, %v2075, 0
    %v2080 = vsel %vm481, %v2072, 0
    %2082 = vmatprep.subr.mxu0 0.0
    %2083 = vmatpush1.msra.mxu0 %v2048
    %2084 = vmatprep.subr.mxu0 0.0
    %2085 = vmatpush1.msra.mxu0 %v2049
    %2086 = vmatprep.subr.mxu0 0.0
    %2087 = vmatpush1.msra.mxu0 %v2050
    %2088 = vmatprep.subr.mxu0 0.0
    %2089 = vmatpush1.msra.mxu0 %v2051
    %2090 = vmatprep.subr.mxu0 0.0
    %2091 = vmatpush1.msra.mxu0 %v2052
    %2092 = vmatprep.subr.mxu0 0.0
    %2093 = vmatpush1.msra.mxu0 %v2053
    %2094 = vmatprep.subr.mxu0 0.0
    %2095 = vmatpush1.msra.mxu0 %v2054
    %2096 = vmatprep.subr.mxu0 0.0
    %2097 = vmatpush1.msra.mxu0 %v2055
    %2098 = vmatprep.subr.mxu0 0.0
    %2099 = vmatpush1.msra.mxu0 %v2056
    %2100 = vmatprep.subr.mxu0 0.0
    %2101 = vmatpush1.msra.mxu0 %v2057
    %2102 = vmatprep.subr.mxu0 0.0
    %2103 = vmatpush1.msra.mxu0 %v2058
    %2104 = vmatprep.subr.mxu0 0.0
    %2105 = vmatpush1.msra.mxu0 %v2059
    %2106 = vmatprep.subr.mxu0 0.0
    %2107 = vmatpush1.msra.mxu0 %v2060
    %2108 = vmatprep.subr.mxu0 0.0
    %2109 = vmatpush1.msra.mxu0 %v2061
    %2110 = vmatprep.subr.mxu0 0.0
    %2111 = vmatpush1.msra.mxu0 %v2062
    %2112 = vmatprep.subr.mxu0 0.0
    %2113 = vmatpush1.msra.mxu0 %v2063
    %2114 = vmatprep.subr.mxu0 0.0
    %2115 = vmatpush1.msra.mxu0 %v2064
    %2116 = vmatprep.subr.mxu0 0.0
    %2117 = vmatpush1.msra.mxu0 %v2065
    %2118 = vmatprep.subr.mxu0 0.0
    %2119 = vmatpush1.msra.mxu0 %v2066
    %2120 = vmatprep.subr.mxu0 0.0
    %2121 = vmatpush1.msra.mxu0 %v2067
    %2122 = vmatprep.subr.mxu0 0.0
    %2123 = vmatpush1.msra.mxu0 %v2068
    %2124 = vmatprep.subr.mxu0 0.0
    %2125 = vmatpush1.msra.mxu0 %v2069
    %2126 = vmatprep.subr.mxu0 0.0
    %2127 = vmatpush1.msra.mxu0 %v2070
    %2128 = vmatprep.subr.mxu0 0.0
    %2129 = vmatpush1.msra.mxu0 %v2071
    %2130 = vmatprep.subr.mxu0 0.0
    %2131 = vmatpush1.msra.mxu0 %v2080
    %2132 = vmatprep.subr.mxu0 0.0
    %2133 = vmatpush1.msra.mxu0 0.0
    %2134 = vmatprep.subr.mxu0 0.0
    %2135 = vmatpush1.msra.mxu0 0.0
    %2136 = vmatprep.subr.mxu0 0.0
    %2137 = vmatpush1.msra.mxu0 0.0
    %2138 = vmatprep.subr.mxu0 0.0
    %2139 = vmatpush1.msra.mxu0 0.0
    %2140 = vmatprep.subr.mxu0 0.0
    %2141 = vmatpush1.msra.mxu0 0.0
    %2142 = vmatprep.subr.mxu0 0.0
    %2143 = vmatpush1.msra.mxu0 0.0
    %2144 = vmatprep.subr.mxu0 0.0
    %2145 = vmatpush1.msra.mxu0 0.0
    %2146 = vmatprep.mubr.f32.mxu0 %v2077
    %2147 = vmatmul.mubr.f32.gmra.mrb[0].mxu0 %v2074
    %v2148 = vpop.f32.mrb[0].mxu0
    %v2149 = vadd.f32 0.0, %v2148
    %v2150 = vpop.f32.mrb[0].mxu0
    %2151 = vdwg.mxu0
    %v2152 = vadd.f32 %v2047, %v2149
    %v2153 = vld [vmem:[%s662] sm:$0xff]
    %v2154 = vld [vmem:[%s662 + $0x8] sm:$0xff]
    %v2155 = vld [vmem:[%s662 + $0x10] sm:$0xff]
    %v2156 = vld [vmem:[%s662 + $0x18] sm:$0xff]
    %v2157 = vld [vmem:[%s662 + $0x20] sm:$0xff]
    %v2158 = vld [vmem:[%s662 + $0x28] sm:$0xff]
    %v2159 = vld [vmem:[%s662 + $0x30] sm:$0xff]
    %v2160 = vld [vmem:[%s662 + $0x38] sm:$0xff]
    %v2161 = vld [vmem:[%s662 + $0x40] sm:$0xff]
    %v2162 = vld [vmem:[%s662 + $0x48] sm:$0xff]
    %v2163 = vld [vmem:[%s662 + $0x50] sm:$0xff]
    %v2164 = vld [vmem:[%s662 + $0x58] sm:$0xff]
    %v2165 = vld [vmem:[%s662 + $0x60] sm:$0xff]
    %v2166 = vld [vmem:[%s662 + $0x68] sm:$0xff]
    %v2167 = vld [vmem:[%s662 + $0x70] sm:$0xff]
    %v2168 = vld [vmem:[%s662 + $0x78] sm:$0xff]
    %v2169 = vld [vmem:[%s662 + $0x80] sm:$0xff]
    %v2170 = vld [vmem:[%s662 + $0x88] sm:$0xff]
    %v2171 = vld [vmem:[%s662 + $0x90] sm:$0xff]
    %v2172 = vld [vmem:[%s662 + $0x98] sm:$0xff]
    %v2173 = vld [vmem:[%s662 + $0xa0] sm:$0xff]
    %v2174 = vld [vmem:[%s662 + $0xa8] sm:$0xff]
    %v2175 = vld [vmem:[%s662 + $0xb0] sm:$0xff]
    %v2176 = vld [vmem:[%s662 + $0xb8] sm:$0xff]
    %v2177 = vld [vmem:[%s662 + $0xc0] sm:$0xf]
    %v2178 = vrot.slane %v1942, 2
    %v2179 = vrot.slane %v1943, 2
    %v2181 = vsel %vm477, %v2179, 0
    %v2184 = vsel %vm481, %v2177, 0
    %2186 = vmatprep.subr.mxu0 0.0
    %2187 = vmatpush1.msra.mxu0 %v2153
    %2188 = vmatprep.subr.mxu0 0.0
    %2189 = vmatpush1.msra.mxu0 %v2154
    %2190 = vmatprep.subr.mxu0 0.0
    %2191 = vmatpush1.msra.mxu0 %v2155
    %2192 = vmatprep.subr.mxu0 0.0
    %2193 = vmatpush1.msra.mxu0 %v2156
    %2194 = vmatprep.subr.mxu0 0.0
    %2195 = vmatpush1.msra.mxu0 %v2157
    %2196 = vmatprep.subr.mxu0 0.0
    %2197 = vmatpush1.msra.mxu0 %v2158
    %2198 = vmatprep.subr.mxu0 0.0
    %2199 = vmatpush1.msra.mxu0 %v2159
    %2200 = vmatprep.subr.mxu0 0.0
    %2201 = vmatpush1.msra.mxu0 %v2160
    %2202 = vmatprep.subr.mxu0 0.0
    %2203 = vmatpush1.msra.mxu0 %v2161
    %2204 = vmatprep.subr.mxu0 0.0
    %2205 = vmatpush1.msra.mxu0 %v2162
    %2206 = vmatprep.subr.mxu0 0.0
    %2207 = vmatpush1.msra.mxu0 %v2163
    %2208 = vmatprep.subr.mxu0 0.0
    %2209 = vmatpush1.msra.mxu0 %v2164
    %2210 = vmatprep.subr.mxu0 0.0
    %2211 = vmatpush1.msra.mxu0 %v2165
    %2212 = vmatprep.subr.mxu0 0.0
    %2213 = vmatpush1.msra.mxu0 %v2166
    %2214 = vmatprep.subr.mxu0 0.0
    %2215 = vmatpush1.msra.mxu0 %v2167
    %2216 = vmatprep.subr.mxu0 0.0
    %2217 = vmatpush1.msra.mxu0 %v2168
    %2218 = vmatprep.subr.mxu0 0.0
    %2219 = vmatpush1.msra.mxu0 %v2169
    %2220 = vmatprep.subr.mxu0 0.0
    %2221 = vmatpush1.msra.mxu0 %v2170
    %2222 = vmatprep.subr.mxu0 0.0
    %2223 = vmatpush1.msra.mxu0 %v2171
    %2224 = vmatprep.subr.mxu0 0.0
    %2225 = vmatpush1.msra.mxu0 %v2172
    %2226 = vmatprep.subr.mxu0 0.0
    %2227 = vmatpush1.msra.mxu0 %v2173
    %2228 = vmatprep.subr.mxu0 0.0
    %2229 = vmatpush1.msra.mxu0 %v2174
    %2230 = vmatprep.subr.mxu0 0.0
    %2231 = vmatpush1.msra.mxu0 %v2175
    %2232 = vmatprep.subr.mxu0 0.0
    %2233 = vmatpush1.msra.mxu0 %v2176
    %2234 = vmatprep.subr.mxu0 0.0
    %2235 = vmatpush1.msra.mxu0 %v2184
    %2236 = vmatprep.subr.mxu0 0.0
    %2237 = vmatpush1.msra.mxu0 0.0
    %2238 = vmatprep.subr.mxu0 0.0
    %2239 = vmatpush1.msra.mxu0 0.0
    %2240 = vmatprep.subr.mxu0 0.0
    %2241 = vmatpush1.msra.mxu0 0.0
    %2242 = vmatprep.subr.mxu0 0.0
    %2243 = vmatpush1.msra.mxu0 0.0
    %2244 = vmatprep.subr.mxu0 0.0
    %2245 = vmatpush1.msra.mxu0 0.0
    %2246 = vmatprep.subr.mxu0 0.0
    %2247 = vmatpush1.msra.mxu0 0.0
    %2248 = vmatprep.subr.mxu0 0.0
    %2249 = vmatpush1.msra.mxu0 0.0
    %2250 = vmatprep.mubr.f32.mxu0 %v2181
    %2251 = vmatmul.mubr.f32.gmra.mrb[0].mxu0 %v2178
    %v2252 = vpop.f32.mrb[0].mxu0
    %v2253 = vadd.f32 0.0, %v2252
    %v2254 = vpop.f32.mrb[0].mxu0
    %2255 = vdwg.mxu0
    %v2256 = vadd.f32 %v2152, %v2253
    %v2257 = vld [vmem:[%s767] sm:$0xff]
    %v2258 = vld [vmem:[%s767 + $0x8] sm:$0xff]
    %v2259 = vld [vmem:[%s767 + $0x10] sm:$0xff]
    %v2260 = vld [vmem:[%s767 + $0x18] sm:$0xff]
    %v2261 = vld [vmem:[%s767 + $0x20] sm:$0xff]
    %v2262 = vld [vmem:[%s767 + $0x28] sm:$0xff]
    %v2263 = vld [vmem:[%s767 + $0x30] sm:$0xff]
    %v2264 = vld [vmem:[%s767 + $0x38] sm:$0xff]
    %v2265 = vld [vmem:[%s767 + $0x40] sm:$0xff]
    %v2266 = vld [vmem:[%s767 + $0x48] sm:$0xff]
    %v2267 = vld [vmem:[%s767 + $0x50] sm:$0xff]
    %v2268 = vld [vmem:[%s767 + $0x58] sm:$0xff]
    %v2269 = vld [vmem:[%s767 + $0x60] sm:$0xff]
    %v2270 = vld [vmem:[%s767 + $0x68] sm:$0xff]
    %v2271 = vld [vmem:[%s767 + $0x70] sm:$0xff]
    %v2272 = vld [vmem:[%s767 + $0x78] sm:$0xff]
    %v2273 = vld [vmem:[%s767 + $0x80] sm:$0xff]
    %v2274 = vld [vmem:[%s767 + $0x88] sm:$0xff]
    %v2275 = vld [vmem:[%s767 + $0x90] sm:$0xff]
    %v2276 = vld [vmem:[%s767 + $0x98] sm:$0xff]
    %v2277 = vld [vmem:[%s767 + $0xa0] sm:$0xff]
    %v2278 = vld [vmem:[%s767 + $0xa8] sm:$0xff]
    %v2279 = vld [vmem:[%s767 + $0xb0] sm:$0xff]
    %v2280 = vld [vmem:[%s767 + $0xb8] sm:$0xff]
    %v2281 = vld [vmem:[%s767 + $0xc0] sm:$0xf]
    %v2282 = vrot.slane %v1942, 3
    %v2283 = vrot.slane %v1943, 3
    %v2285 = vsel %vm477, %v2283, 0
    %v2288 = vsel %vm481, %v2281, 0
    %2290 = vmatprep.subr.mxu0 0.0
    %2291 = vmatpush1.msra.mxu0 %v2257
    %2292 = vmatprep.subr.mxu0 0.0
    %2293 = vmatpush1.msra.mxu0 %v2258
    %2294 = vmatprep.subr.mxu0 0.0
    %2295 = vmatpush1.msra.mxu0 %v2259
    %2296 = vmatprep.subr.mxu0 0.0
    %2297 = vmatpush1.msra.mxu0 %v2260
    %2298 = vmatprep.subr.mxu0 0.0
    %2299 = vmatpush1.msra.mxu0 %v2261
    %2300 = vmatprep.subr.mxu0 0.0
    %2301 = vmatpush1.msra.mxu0 %v2262
    %2302 = vmatprep.subr.mxu0 0.0
    %2303 = vmatpush1.msra.mxu0 %v2263
    %2304 = vmatprep.subr.mxu0 0.0
    %2305 = vmatpush1.msra.mxu0 %v2264
    %2306 = vmatprep.subr.mxu0 0.0
    %2307 = vmatpush1.msra.mxu0 %v2265
    %2308 = vmatprep.subr.mxu0 0.0
    %2309 = vmatpush1.msra.mxu0 %v2266
    %2310 = vmatprep.subr.mxu0 0.0
    %2311 = vmatpush1.msra.mxu0 %v2267
    %2312 = vmatprep.subr.mxu0 0.0
    %2313 = vmatpush1.msra.mxu0 %v2268
    %2314 = vmatprep.subr.mxu0 0.0
    %2315 = vmatpush1.msra.mxu0 %v2269
    %2316 = vmatprep.subr.mxu0 0.0
    %2317 = vmatpush1.msra.mxu0 %v2270
    %2318 = vmatprep.subr.mxu0 0.0
    %2319 = vmatpush1.msra.mxu0 %v2271
    %2320 = vmatprep.subr.mxu0 0.0
    %2321 = vmatpush1.msra.mxu0 %v2272
    %2322 = vmatprep.subr.mxu0 0.0
    %2323 = vmatpush1.msra.mxu0 %v2273
    %2324 = vmatprep.subr.mxu0 0.0
    %2325 = vmatpush1.msra.mxu0 %v2274
    %2326 = vmatprep.subr.mxu0 0.0
    %2327 = vmatpush1.msra.mxu0 %v2275
    %2328 = vmatprep.subr.mxu0 0.0
    %2329 = vmatpush1.msra.mxu0 %v2276
    %2330 = vmatprep.subr.mxu0 0.0
    %2331 = vmatpush1.msra.mxu0 %v2277
    %2332 = vmatprep.subr.mxu0 0.0
    %2333 = vmatpush1.msra.mxu0 %v2278
    %2334 = vmatprep.subr.mxu0 0.0
    %2335 = vmatpush1.msra.mxu0 %v2279
    %2336 = vmatprep.subr.mxu0 0.0
    %2337 = vmatpush1.msra.mxu0 %v2280
    %2338 = vmatprep.subr.mxu0 0.0
    %2339 = vmatpush1.msra.mxu0 %v2288
    %2340 = vmatprep.subr.mxu0 0.0
    %2341 = vmatpush1.msra.mxu0 0.0
    %2342 = vmatprep.subr.mxu0 0.0
    %2343 = vmatpush1.msra.mxu0 0.0
    %2344 = vmatprep.subr.mxu0 0.0
    %2345 = vmatpush1.msra.mxu0 0.0
    %2346 = vmatprep.subr.mxu0 0.0
    %2347 = vmatpush1.msra.mxu0 0.0
    %2348 = vmatprep.subr.mxu0 0.0
    %2349 = vmatpush1.msra.mxu0 0.0
    %2350 = vmatprep.subr.mxu0 0.0
    %2351 = vmatpush1.msra.mxu0 0.0
    %2352 = vmatprep.subr.mxu0 0.0
    %2353 = vmatpush1.msra.mxu0 0.0
    %2354 = vmatprep.mubr.f32.mxu0 %v2285
    %2355 = vmatmul.mubr.f32.gmra.mrb[0].mxu0 %v2282
    %v2356 = vpop.f32.mrb[0].mxu0
    %v2357 = vadd.f32 0.0, %v2356
    %v2358 = vpop.f32.mrb[0].mxu0
    %2359 = vdwg.mxu0
    %v2360 = vadd.f32 %v2256, %v2357
    %v2361 = vld [vmem:[%s872] sm:$0xff]
    %v2362 = vld [vmem:[%s872 + $0x8] sm:$0xff]
    %v2363 = vld [vmem:[%s872 + $0x10] sm:$0xff]
    %v2364 = vld [vmem:[%s872 + $0x18] sm:$0xff]
    %v2365 = vld [vmem:[%s872 + $0x20] sm:$0xff]
    %v2366 = vld [vmem:[%s872 + $0x28] sm:$0xff]
    %v2367 = vld [vmem:[%s872 + $0x30] sm:$0xff]
    %v2368 = vld [vmem:[%s872 + $0x38] sm:$0xff]
    %v2369 = vld [vmem:[%s872 + $0x40] sm:$0xff]
    %v2370 = vld [vmem:[%s872 + $0x48] sm:$0xff]
    %v2371 = vld [vmem:[%s872 + $0x50] sm:$0xff]
    %v2372 = vld [vmem:[%s872 + $0x58] sm:$0xff]
    %v2373 = vld [vmem:[%s872 + $0x60] sm:$0xff]
    %v2374 = vld [vmem:[%s872 + $0x68] sm:$0xff]
    %v2375 = vld [vmem:[%s872 + $0x70] sm:$0xff]
    %v2376 = vld [vmem:[%s872 + $0x78] sm:$0xff]
    %v2377 = vld [vmem:[%s872 + $0x80] sm:$0xff]
    %v2378 = vld [vmem:[%s872 + $0x88] sm:$0xff]
    %v2379 = vld [vmem:[%s872 + $0x90] sm:$0xff]
    %v2380 = vld [vmem:[%s872 + $0x98] sm:$0xff]
    %v2381 = vld [vmem:[%s872 + $0xa0] sm:$0xff]
    %v2382 = vld [vmem:[%s872 + $0xa8] sm:$0xff]
    %v2383 = vld [vmem:[%s872 + $0xb0] sm:$0xff]
    %v2384 = vld [vmem:[%s872 + $0xb8] sm:$0xff]
    %v2385 = vld [vmem:[%s872 + $0xc0] sm:$0xf]
    %v2386 = vrot.slane %v1942, 4
    %v2387 = vrot.slane %v1943, 4
    %v2389 = vsel %vm477, %v2387, 0
    %v2392 = vsel %vm481, %v2385, 0
    %2394 = vmatprep.subr.mxu0 0.0
    %2395 = vmatpush1.msra.mxu0 %v2361
    %2396 = vmatprep.subr.mxu0 0.0
    %2397 = vmatpush1.msra.mxu0 %v2362
    %2398 = vmatprep.subr.mxu0 0.0
    %2399 = vmatpush1.msra.mxu0 %v2363
    %2400 = vmatprep.subr.mxu0 0.0
    %2401 = vmatpush1.msra.mxu0 %v2364
    %2402 = vmatprep.subr.mxu0 0.0
    %2403 = vmatpush1.msra.mxu0 %v2365
    %2404 = vmatprep.subr.mxu0 0.0
    %2405 = vmatpush1.msra.mxu0 %v2366
    %2406 = vmatprep.subr.mxu0 0.0
    %2407 = vmatpush1.msra.mxu0 %v2367
    %2408 = vmatprep.subr.mxu0 0.0
    %2409 = vmatpush1.msra.mxu0 %v2368
    %2410 = vmatprep.subr.mxu0 0.0
    %2411 = vmatpush1.msra.mxu0 %v2369
    %2412 = vmatprep.subr.mxu0 0.0
    %2413 = vmatpush1.msra.mxu0 %v2370
    %2414 = vmatprep.subr.mxu0 0.0
    %2415 = vmatpush1.msra.mxu0 %v2371
    %2416 = vmatprep.subr.mxu0 0.0
    %2417 = vmatpush1.msra.mxu0 %v2372
    %2418 = vmatprep.subr.mxu0 0.0
    %2419 = vmatpush1.msra.mxu0 %v2373
    %2420 = vmatprep.subr.mxu0 0.0
    %2421 = vmatpush1.msra.mxu0 %v2374
    %2422 = vmatprep.subr.mxu0 0.0
    %2423 = vmatpush1.msra.mxu0 %v2375
    %2424 = vmatprep.subr.mxu0 0.0
    %2425 = vmatpush1.msra.mxu0 %v2376
    %2426 = vmatprep.subr.mxu0 0.0
    %2427 = vmatpush1.msra.mxu0 %v2377
    %2428 = vmatprep.subr.mxu0 0.0
    %2429 = vmatpush1.msra.mxu0 %v2378
    %2430 = vmatprep.subr.mxu0 0.0
    %2431 = vmatpush1.msra.mxu0 %v2379
    %2432 = vmatprep.subr.mxu0 0.0
    %2433 = vmatpush1.msra.mxu0 %v2380
    %2434 = vmatprep.subr.mxu0 0.0
    %2435 = vmatpush1.msra.mxu0 %v2381
    %2436 = vmatprep.subr.mxu0 0.0
    %2437 = vmatpush1.msra.mxu0 %v2382
    %2438 = vmatprep.subr.mxu0 0.0
    %2439 = vmatpush1.msra.mxu0 %v2383
    %2440 = vmatprep.subr.mxu0 0.0
    %2441 = vmatpush1.msra.mxu0 %v2384
    %2442 = vmatprep.subr.mxu0 0.0
    %2443 = vmatpush1.msra.mxu0 %v2392
    %2444 = vmatprep.subr.mxu0 0.0
    %2445 = vmatpush1.msra.mxu0 0.0
    %2446 = vmatprep.subr.mxu0 0.0
    %2447 = vmatpush1.msra.mxu0 0.0
    %2448 = vmatprep.subr.mxu0 0.0
    %2449 = vmatpush1.msra.mxu0 0.0
    %2450 = vmatprep.subr.mxu0 0.0
    %2451 = vmatpush1.msra.mxu0 0.0
    %2452 = vmatprep.subr.mxu0 0.0
    %2453 = vmatpush1.msra.mxu0 0.0
    %2454 = vmatprep.subr.mxu0 0.0
    %2455 = vmatpush1.msra.mxu0 0.0
    %2456 = vmatprep.subr.mxu0 0.0
    %2457 = vmatpush1.msra.mxu0 0.0
    %2458 = vmatprep.mubr.f32.mxu0 %v2389
    %2459 = vmatmul.mubr.f32.gmra.mrb[0].mxu0 %v2386
    %v2460 = vpop.f32.mrb[0].mxu0
    %v2461 = vadd.f32 0.0, %v2460
    %v2462 = vpop.f32.mrb[0].mxu0
    %2463 = vdwg.mxu0
    %v2464 = vadd.f32 %v2360, %v2461
    %v2465 = vld [vmem:[%s977] sm:$0xff]
    %v2466 = vld [vmem:[%s977 + $0x8] sm:$0xff]
    %v2467 = vld [vmem:[%s977 + $0x10] sm:$0xff]
    %v2468 = vld [vmem:[%s977 + $0x18] sm:$0xff]
    %v2469 = vld [vmem:[%s977 + $0x20] sm:$0xff]
    %v2470 = vld [vmem:[%s977 + $0x28] sm:$0xff]
    %v2471 = vld [vmem:[%s977 + $0x30] sm:$0xff]
    %v2472 = vld [vmem:[%s977 + $0x38] sm:$0xff]
    %v2473 = vld [vmem:[%s977 + $0x40] sm:$0xff]
    %v2474 = vld [vmem:[%s977 + $0x48] sm:$0xff]
    %v2475 = vld [vmem:[%s977 + $0x50] sm:$0xff]
    %v2476 = vld [vmem:[%s977 + $0x58] sm:$0xff]
    %v2477 = vld [vmem:[%s977 + $0x60] sm:$0xff]
    %v2478 = vld [vmem:[%s977 + $0x68] sm:$0xff]
    %v2479 = vld [vmem:[%s977 + $0x70] sm:$0xff]
    %v2480 = vld [vmem:[%s977 + $0x78] sm:$0xff]
    %v2481 = vld [vmem:[%s977 + $0x80] sm:$0xff]
    %v2482 = vld [vmem:[%s977 + $0x88] sm:$0xff]
    %v2483 = vld [vmem:[%s977 + $0x90] sm:$0xff]
    %v2484 = vld [vmem:[%s977 + $0x98] sm:$0xff]
    %v2485 = vld [vmem:[%s977 + $0xa0] sm:$0xff]
    %v2486 = vld [vmem:[%s977 + $0xa8] sm:$0xff]
    %v2487 = vld [vmem:[%s977 + $0xb0] sm:$0xff]
    %v2488 = vld [vmem:[%s977 + $0xb8] sm:$0xff]
    %v2489 = vld [vmem:[%s977 + $0xc0] sm:$0xf]
    %v2490 = vrot.slane %v1942, 5
    %v2491 = vrot.slane %v1943, 5
    %v2493 = vsel %vm477, %v2491, 0
    %v2496 = vsel %vm481, %v2489, 0
    %2498 = vmatprep.subr.mxu0 0.0
    %2499 = vmatpush1.msra.mxu0 %v2465
    %2500 = vmatprep.subr.mxu0 0.0
    %2501 = vmatpush1.msra.mxu0 %v2466
    %2502 = vmatprep.subr.mxu0 0.0
    %2503 = vmatpush1.msra.mxu0 %v2467
    %2504 = vmatprep.subr.mxu0 0.0
    %2505 = vmatpush1.msra.mxu0 %v2468
    %2506 = vmatprep.subr.mxu0 0.0
    %2507 = vmatpush1.msra.mxu0 %v2469
    %2508 = vmatprep.subr.mxu0 0.0
    %2509 = vmatpush1.msra.mxu0 %v2470
    %2510 = vmatprep.subr.mxu0 0.0
    %2511 = vmatpush1.msra.mxu0 %v2471
    %2512 = vmatprep.subr.mxu0 0.0
    %2513 = vmatpush1.msra.mxu0 %v2472
    %2514 = vmatprep.subr.mxu0 0.0
    %2515 = vmatpush1.msra.mxu0 %v2473
    %2516 = vmatprep.subr.mxu0 0.0
    %2517 = vmatpush1.msra.mxu0 %v2474
    %2518 = vmatprep.subr.mxu0 0.0
    %2519 = vmatpush1.msra.mxu0 %v2475
    %2520 = vmatprep.subr.mxu0 0.0
    %2521 = vmatpush1.msra.mxu0 %v2476
    %2522 = vmatprep.subr.mxu0 0.0
    %2523 = vmatpush1.msra.mxu0 %v2477
    %2524 = vmatprep.subr.mxu0 0.0
    %2525 = vmatpush1.msra.mxu0 %v2478
    %2526 = vmatprep.subr.mxu0 0.0
    %2527 = vmatpush1.msra.mxu0 %v2479
    %2528 = vmatprep.subr.mxu0 0.0
    %2529 = vmatpush1.msra.mxu0 %v2480
    %2530 = vmatprep.subr.mxu0 0.0
    %2531 = vmatpush1.msra.mxu0 %v2481
    %2532 = vmatprep.subr.mxu0 0.0
    %2533 = vmatpush1.msra.mxu0 %v2482
    %2534 = vmatprep.subr.mxu0 0.0
    %2535 = vmatpush1.msra.mxu0 %v2483
    %2536 = vmatprep.subr.mxu0 0.0
    %2537 = vmatpush1.msra.mxu0 %v2484
    %2538 = vmatprep.subr.mxu0 0.0
    %2539 = vmatpush1.msra.mxu0 %v2485
    %2540 = vmatprep.subr.mxu0 0.0
    %2541 = vmatpush1.msra.mxu0 %v2486
    %2542 = vmatprep.subr.mxu0 0.0
    %2543 = vmatpush1.msra.mxu0 %v2487
    %2544 = vmatprep.subr.mxu0 0.0
    %2545 = vmatpush1.msra.mxu0 %v2488
    %2546 = vmatprep.subr.mxu0 0.0
    %2547 = vmatpush1.msra.mxu0 %v2496
    %2548 = vmatprep.subr.mxu0 0.0
    %2549 = vmatpush1.msra.mxu0 0.0
    %2550 = vmatprep.subr.mxu0 0.0
    %2551 = vmatpush1.msra.mxu0 0.0
    %2552 = vmatprep.subr.mxu0 0.0
    %2553 = vmatpush1.msra.mxu0 0.0
    %2554 = vmatprep.subr.mxu0 0.0
    %2555 = vmatpush1.msra.mxu0 0.0
    %2556 = vmatprep.subr.mxu0 0.0
    %2557 = vmatpush1.msra.mxu0 0.0
    %2558 = vmatprep.subr.mxu0 0.0
    %2559 = vmatpush1.msra.mxu0 0.0
    %2560 = vmatprep.subr.mxu0 0.0
    %2561 = vmatpush1.msra.mxu0 0.0
    %2562 = vmatprep.mubr.f32.mxu0 %v2493
    %2563 = vmatmul.mubr.f32.gmra.mrb[0].mxu0 %v2490
    %v2564 = vpop.f32.mrb[0].mxu0
    %v2565 = vadd.f32 0.0, %v2564
    %v2566 = vpop.f32.mrb[0].mxu0
    %2567 = vdwg.mxu0
    %v2568 = vadd.f32 %v2464, %v2565
    %v2569 = vld [vmem:[%s1082] sm:$0xff]
    %v2570 = vld [vmem:[%s1082 + $0x8] sm:$0xff]
    %v2571 = vld [vmem:[%s1082 + $0x10] sm:$0xff]
    %v2572 = vld [vmem:[%s1082 + $0x18] sm:$0xff]
    %v2573 = vld [vmem:[%s1082 + $0x20] sm:$0xff]
    %v2574 = vld [vmem:[%s1082 + $0x28] sm:$0xff]
    %v2575 = vld [vmem:[%s1082 + $0x30] sm:$0xff]
    %v2576 = vld [vmem:[%s1082 + $0x38] sm:$0xff]
    %v2577 = vld [vmem:[%s1082 + $0x40] sm:$0xff]
    %v2578 = vld [vmem:[%s1082 + $0x48] sm:$0xff]
    %v2579 = vld [vmem:[%s1082 + $0x50] sm:$0xff]
    %v2580 = vld [vmem:[%s1082 + $0x58] sm:$0xff]
    %v2581 = vld [vmem:[%s1082 + $0x60] sm:$0xff]
    %v2582 = vld [vmem:[%s1082 + $0x68] sm:$0xff]
    %v2583 = vld [vmem:[%s1082 + $0x70] sm:$0xff]
    %v2584 = vld [vmem:[%s1082 + $0x78] sm:$0xff]
    %v2585 = vld [vmem:[%s1082 + $0x80] sm:$0xff]
    %v2586 = vld [vmem:[%s1082 + $0x88] sm:$0xff]
    %v2587 = vld [vmem:[%s1082 + $0x90] sm:$0xff]
    %v2588 = vld [vmem:[%s1082 + $0x98] sm:$0xff]
    %v2589 = vld [vmem:[%s1082 + $0xa0] sm:$0xff]
    %v2590 = vld [vmem:[%s1082 + $0xa8] sm:$0xff]
    %v2591 = vld [vmem:[%s1082 + $0xb0] sm:$0xff]
    %v2592 = vld [vmem:[%s1082 + $0xb8] sm:$0xff]
    %v2593 = vld [vmem:[%s1082 + $0xc0] sm:$0xf]
    %v2594 = vrot.slane %v1942, 6
    %v2595 = vrot.slane %v1943, 6
    %v2597 = vsel %vm477, %v2595, 0
    %v2600 = vsel %vm481, %v2593, 0
    %2602 = vmatprep.subr.mxu0 0.0
    %2603 = vmatpush1.msra.mxu0 %v2569
    %2604 = vmatprep.subr.mxu0 0.0
    %2605 = vmatpush1.msra.mxu0 %v2570
    %2606 = vmatprep.subr.mxu0 0.0
    %2607 = vmatpush1.msra.mxu0 %v2571
    %2608 = vmatprep.subr.mxu0 0.0
    %2609 = vmatpush1.msra.mxu0 %v2572
    %2610 = vmatprep.subr.mxu0 0.0
    %2611 = vmatpush1.msra.mxu0 %v2573
    %2612 = vmatprep.subr.mxu0 0.0
    %2613 = vmatpush1.msra.mxu0 %v2574
    %2614 = vmatprep.subr.mxu0 0.0
    %2615 = vmatpush1.msra.mxu0 %v2575
    %2616 = vmatprep.subr.mxu0 0.0
    %2617 = vmatpush1.msra.mxu0 %v2576
    %2618 = vmatprep.subr.mxu0 0.0
    %2619 = vmatpush1.msra.mxu0 %v2577
    %2620 = vmatprep.subr.mxu0 0.0
    %2621 = vmatpush1.msra.mxu0 %v2578
    %2622 = vmatprep.subr.mxu0 0.0
    %2623 = vmatpush1.msra.mxu0 %v2579
    %2624 = vmatprep.subr.mxu0 0.0
    %2625 = vmatpush1.msra.mxu0 %v2580
    %2626 = vmatprep.subr.mxu0 0.0
    %2627 = vmatpush1.msra.mxu0 %v2581
    %2628 = vmatprep.subr.mxu0 0.0
    %2629 = vmatpush1.msra.mxu0 %v2582
    %2630 = vmatprep.subr.mxu0 0.0
    %2631 = vmatpush1.msra.mxu0 %v2583
    %2632 = vmatprep.subr.mxu0 0.0
    %2633 = vmatpush1.msra.mxu0 %v2584
    %2634 = vmatprep.subr.mxu0 0.0
    %2635 = vmatpush1.msra.mxu0 %v2585
    %2636 = vmatprep.subr.mxu0 0.0
    %2637 = vmatpush1.msra.mxu0 %v2586
    %2638 = vmatprep.subr.mxu0 0.0
    %2639 = vmatpush1.msra.mxu0 %v2587
    %2640 = vmatprep.subr.mxu0 0.0
    %2641 = vmatpush1.msra.mxu0 %v2588
    %2642 = vmatprep.subr.mxu0 0.0
    %2643 = vmatpush1.msra.mxu0 %v2589
    %2644 = vmatprep.subr.mxu0 0.0
    %2645 = vmatpush1.msra.mxu0 %v2590
    %2646 = vmatprep.subr.mxu0 0.0
    %2647 = vmatpush1.msra.mxu0 %v2591
    %2648 = vmatprep.subr.mxu0 0.0
    %2649 = vmatpush1.msra.mxu0 %v2592
    %2650 = vmatprep.subr.mxu0 0.0
    %2651 = vmatpush1.msra.mxu0 %v2600
    %2652 = vmatprep.subr.mxu0 0.0
    %2653 = vmatpush1.msra.mxu0 0.0
    %2654 = vmatprep.subr.mxu0 0.0
    %2655 = vmatpush1.msra.mxu0 0.0
    %2656 = vmatprep.subr.mxu0 0.0
    %2657 = vmatpush1.msra.mxu0 0.0
    %2658 = vmatprep.subr.mxu0 0.0
    %2659 = vmatpush1.msra.mxu0 0.0
    %2660 = vmatprep.subr.mxu0 0.0
    %2661 = vmatpush1.msra.mxu0 0.0
    %2662 = vmatprep.subr.mxu0 0.0
    %2663 = vmatpush1.msra.mxu0 0.0
    %2664 = vmatprep.subr.mxu0 0.0
    %2665 = vmatpush1.msra.mxu0 0.0
    %2666 = vmatprep.mubr.f32.mxu0 %v2597
    %2667 = vmatmul.mubr.f32.gmra.mrb[0].mxu0 %v2594
    %v2668 = vpop.f32.mrb[0].mxu0
    %v2669 = vadd.f32 0.0, %v2668
    %v2670 = vpop.f32.mrb[0].mxu0
    %2671 = vdwg.mxu0
    %v2672 = vadd.f32 %v2568, %v2669
    %v2673 = vld [vmem:[%s1187] sm:$0xff]
    %v2674 = vld [vmem:[%s1187 + $0x8] sm:$0xff]
    %v2675 = vld [vmem:[%s1187 + $0x10] sm:$0xff]
    %v2676 = vld [vmem:[%s1187 + $0x18] sm:$0xff]
    %v2677 = vld [vmem:[%s1187 + $0x20] sm:$0xff]
    %v2678 = vld [vmem:[%s1187 + $0x28] sm:$0xff]
    %v2679 = vld [vmem:[%s1187 + $0x30] sm:$0xff]
    %v2680 = vld [vmem:[%s1187 + $0x38] sm:$0xff]
    %v2681 = vld [vmem:[%s1187 + $0x40] sm:$0xff]
    %v2682 = vld [vmem:[%s1187 + $0x48] sm:$0xff]
    %v2683 = vld [vmem:[%s1187 + $0x50] sm:$0xff]
    %v2684 = vld [vmem:[%s1187 + $0x58] sm:$0xff]
    %v2685 = vld [vmem:[%s1187 + $0x60] sm:$0xff]
    %v2686 = vld [vmem:[%s1187 + $0x68] sm:$0xff]
    %v2687 = vld [vmem:[%s1187 + $0x70] sm:$0xff]
    %v2688 = vld [vmem:[%s1187 + $0x78] sm:$0xff]
    %v2689 = vld [vmem:[%s1187 + $0x80] sm:$0xff]
    %v2690 = vld [vmem:[%s1187 + $0x88] sm:$0xff]
    %v2691 = vld [vmem:[%s1187 + $0x90] sm:$0xff]
    %v2692 = vld [vmem:[%s1187 + $0x98] sm:$0xff]
    %v2693 = vld [vmem:[%s1187 + $0xa0] sm:$0xff]
    %v2694 = vld [vmem:[%s1187 + $0xa8] sm:$0xff]
    %v2695 = vld [vmem:[%s1187 + $0xb0] sm:$0xff]
    %v2696 = vld [vmem:[%s1187 + $0xb8] sm:$0xff]
    %v2697 = vld [vmem:[%s1187 + $0xc0] sm:$0xf]
    %v2698 = vrot.slane %v1942, 7
    %v2699 = vrot.slane %v1943, 7
    %v2701 = vsel %vm477, %v2699, 0
    %v2704 = vsel %vm481, %v2697, 0
    %2706 = vmatprep.subr.mxu0 0.0
    %2707 = vmatpush1.msra.mxu0 %v2673
    %2708 = vmatprep.subr.mxu0 0.0
    %2709 = vmatpush1.msra.mxu0 %v2674
    %2710 = vmatprep.subr.mxu0 0.0
    %2711 = vmatpush1.msra.mxu0 %v2675
    %2712 = vmatprep.subr.mxu0 0.0
    %2713 = vmatpush1.msra.mxu0 %v2676
    %2714 = vmatprep.subr.mxu0 0.0
    %2715 = vmatpush1.msra.mxu0 %v2677
    %2716 = vmatprep.subr.mxu0 0.0
    %2717 = vmatpush1.msra.mxu0 %v2678
    %2718 = vmatprep.subr.mxu0 0.0
    %2719 = vmatpush1.msra.mxu0 %v2679
    %2720 = vmatprep.subr.mxu0 0.0
    %2721 = vmatpush1.msra.mxu0 %v2680
    %2722 = vmatprep.subr.mxu0 0.0
    %2723 = vmatpush1.msra.mxu0 %v2681
    %2724 = vmatprep.subr.mxu0 0.0
    %2725 = vmatpush1.msra.mxu0 %v2682
    %2726 = vmatprep.subr.mxu0 0.0
    %2727 = vmatpush1.msra.mxu0 %v2683
    %2728 = vmatprep.subr.mxu0 0.0
    %2729 = vmatpush1.msra.mxu0 %v2684
    %2730 = vmatprep.subr.mxu0 0.0
    %2731 = vmatpush1.msra.mxu0 %v2685
    %2732 = vmatprep.subr.mxu0 0.0
    %2733 = vmatpush1.msra.mxu0 %v2686
    %2734 = vmatprep.subr.mxu0 0.0
    %2735 = vmatpush1.msra.mxu0 %v2687
    %2736 = vmatprep.subr.mxu0 0.0
    %2737 = vmatpush1.msra.mxu0 %v2688
    %2738 = vmatprep.subr.mxu0 0.0
    %2739 = vmatpush1.msra.mxu0 %v2689
    %2740 = vmatprep.subr.mxu0 0.0
    %2741 = vmatpush1.msra.mxu0 %v2690
    %2742 = vmatprep.subr.mxu0 0.0
    %2743 = vmatpush1.msra.mxu0 %v2691
    %2744 = vmatprep.subr.mxu0 0.0
    %2745 = vmatpush1.msra.mxu0 %v2692
    %2746 = vmatprep.subr.mxu0 0.0
    %2747 = vmatpush1.msra.mxu0 %v2693
    %2748 = vmatprep.subr.mxu0 0.0
    %2749 = vmatpush1.msra.mxu0 %v2694
    %2750 = vmatprep.subr.mxu0 0.0
    %2751 = vmatpush1.msra.mxu0 %v2695
    %2752 = vmatprep.subr.mxu0 0.0
    %2753 = vmatpush1.msra.mxu0 %v2696
    %2754 = vmatprep.subr.mxu0 0.0
    %2755 = vmatpush1.msra.mxu0 %v2704
    %2756 = vmatprep.subr.mxu0 0.0
    %2757 = vmatpush1.msra.mxu0 0.0
    %2758 = vmatprep.subr.mxu0 0.0
    %2759 = vmatpush1.msra.mxu0 0.0
    %2760 = vmatprep.subr.mxu0 0.0
    %2761 = vmatpush1.msra.mxu0 0.0
    %2762 = vmatprep.subr.mxu0 0.0
    %2763 = vmatpush1.msra.mxu0 0.0
    %2764 = vmatprep.subr.mxu0 0.0
    %2765 = vmatpush1.msra.mxu0 0.0
    %2766 = vmatprep.subr.mxu0 0.0
    %2767 = vmatpush1.msra.mxu0 0.0
    %2768 = vmatprep.subr.mxu0 0.0
    %2769 = vmatpush1.msra.mxu0 0.0
    %2770 = vmatprep.mubr.f32.mxu0 %v2701
    %2771 = vmatmul.mubr.f32.gmra.mrb[0].mxu0 %v2698
    %v2772 = vpop.f32.mrb[0].mxu0
    %v2773 = vadd.f32 0.0, %v2772
    %v2774 = vpop.f32.mrb[0].mxu0
    %2775 = vdwg.mxu0
    %v2776 = vadd.f32 %v2672, %v2773
    %v2777 = vld [vmem:[%s1292] sm:$0xff]
    %v2778 = vld [vmem:[%s1292 + $0x8] sm:$0xff]
    %v2779 = vld [vmem:[%s1292 + $0x10] sm:$0xff]
    %v2780 = vld [vmem:[%s1292 + $0x18] sm:$0xff]
    %v2781 = vld [vmem:[%s1292 + $0x20] sm:$0xff]
    %v2782 = vld [vmem:[%s1292 + $0x28] sm:$0xff]
    %v2783 = vld [vmem:[%s1292 + $0x30] sm:$0xff]
    %v2784 = vld [vmem:[%s1292 + $0x38] sm:$0xff]
    %v2785 = vld [vmem:[%s1292 + $0x40] sm:$0xff]
    %v2786 = vld [vmem:[%s1292 + $0x48] sm:$0xff]
    %v2787 = vld [vmem:[%s1292 + $0x50] sm:$0xff]
    %v2788 = vld [vmem:[%s1292 + $0x58] sm:$0xff]
    %v2789 = vld [vmem:[%s1292 + $0x60] sm:$0xff]
    %v2790 = vld [vmem:[%s1292 + $0x68] sm:$0xff]
    %v2791 = vld [vmem:[%s1292 + $0x70] sm:$0xff]
    %v2792 = vld [vmem:[%s1292 + $0x78] sm:$0xff]
    %v2793 = vld [vmem:[%s1292 + $0x80] sm:$0xff]
    %v2794 = vld [vmem:[%s1292 + $0x88] sm:$0xff]
    %v2795 = vld [vmem:[%s1292 + $0x90] sm:$0xff]
    %v2796 = vld [vmem:[%s1292 + $0x98] sm:$0xff]
    %v2797 = vld [vmem:[%s1292 + $0xa0] sm:$0xff]
    %v2798 = vld [vmem:[%s1292 + $0xa8] sm:$0xff]
    %v2799 = vld [vmem:[%s1292 + $0xb0] sm:$0xff]
    %v2800 = vld [vmem:[%s1292 + $0xb8] sm:$0xff]
    %v2801 = vld [vmem:[%s1292 + $0xc0] sm:$0xf]
    %v2803 = vsel %vm477, %v1945, 0
    %v2806 = vsel %vm481, %v2801, 0
    %2808 = vmatprep.subr.mxu0 0.0
    %2809 = vmatpush1.msra.mxu0 %v2777
    %2810 = vmatprep.subr.mxu0 0.0
    %2811 = vmatpush1.msra.mxu0 %v2778
    %2812 = vmatprep.subr.mxu0 0.0
    %2813 = vmatpush1.msra.mxu0 %v2779
    %2814 = vmatprep.subr.mxu0 0.0
    %2815 = vmatpush1.msra.mxu0 %v2780
    %2816 = vmatprep.subr.mxu0 0.0
    %2817 = vmatpush1.msra.mxu0 %v2781
    %2818 = vmatprep.subr.mxu0 0.0
    %2819 = vmatpush1.msra.mxu0 %v2782
    %2820 = vmatprep.subr.mxu0 0.0
    %2821 = vmatpush1.msra.mxu0 %v2783
    %2822 = vmatprep.subr.mxu0 0.0
    %2823 = vmatpush1.msra.mxu0 %v2784
    %2824 = vmatprep.subr.mxu0 0.0
    %2825 = vmatpush1.msra.mxu0 %v2785
    %2826 = vmatprep.subr.mxu0 0.0
    %2827 = vmatpush1.msra.mxu0 %v2786
    %2828 = vmatprep.subr.mxu0 0.0
    %2829 = vmatpush1.msra.mxu0 %v2787
    %2830 = vmatprep.subr.mxu0 0.0
    %2831 = vmatpush1.msra.mxu0 %v2788
    %2832 = vmatprep.subr.mxu0 0.0
    %2833 = vmatpush1.msra.mxu0 %v2789
    %2834 = vmatprep.subr.mxu0 0.0
    %2835 = vmatpush1.msra.mxu0 %v2790
    %2836 = vmatprep.subr.mxu0 0.0
    %2837 = vmatpush1.msra.mxu0 %v2791
    %2838 = vmatprep.subr.mxu0 0.0
    %2839 = vmatpush1.msra.mxu0 %v2792
    %2840 = vmatprep.subr.mxu0 0.0
    %2841 = vmatpush1.msra.mxu0 %v2793
    %2842 = vmatprep.subr.mxu0 0.0
    %2843 = vmatpush1.msra.mxu0 %v2794
    %2844 = vmatprep.subr.mxu0 0.0
    %2845 = vmatpush1.msra.mxu0 %v2795
    %2846 = vmatprep.subr.mxu0 0.0
    %2847 = vmatpush1.msra.mxu0 %v2796
    %2848 = vmatprep.subr.mxu0 0.0
    %2849 = vmatpush1.msra.mxu0 %v2797
    %2850 = vmatprep.subr.mxu0 0.0
    %2851 = vmatpush1.msra.mxu0 %v2798
    %2852 = vmatprep.subr.mxu0 0.0
    %2853 = vmatpush1.msra.mxu0 %v2799
    %2854 = vmatprep.subr.mxu0 0.0
    %2855 = vmatpush1.msra.mxu0 %v2800
    %2856 = vmatprep.subr.mxu0 0.0
    %2857 = vmatpush1.msra.mxu0 %v2806
    %2858 = vmatprep.subr.mxu0 0.0
    %2859 = vmatpush1.msra.mxu0 0.0
    %2860 = vmatprep.subr.mxu0 0.0
    %2861 = vmatpush1.msra.mxu0 0.0
    %2862 = vmatprep.subr.mxu0 0.0
    %2863 = vmatpush1.msra.mxu0 0.0
    %2864 = vmatprep.subr.mxu0 0.0
    %2865 = vmatpush1.msra.mxu0 0.0
    %2866 = vmatprep.subr.mxu0 0.0
    %2867 = vmatpush1.msra.mxu0 0.0
    %2868 = vmatprep.subr.mxu0 0.0
    %2869 = vmatpush1.msra.mxu0 0.0
    %2870 = vmatprep.subr.mxu0 0.0
    %2871 = vmatpush1.msra.mxu0 0.0
    %2872 = vmatprep.mubr.f32.mxu0 %v2803
    %2873 = vmatmul.mubr.f32.gmra.mrb[0].mxu0 %v1944
    %v2874 = vpop.f32.mrb[0].mxu0
    %v2875 = vadd.f32 0.0, %v2874
    %v2876 = vpop.f32.mrb[0].mxu0
    %2877 = vdwg.mxu0
    %v2878 = vadd.f32 %v2776, %v2875
    %v2879 = vld [vmem:[%s1395] sm:$0xff]
    %v2880 = vld [vmem:[%s1395 + $0x8] sm:$0xff]
    %v2881 = vld [vmem:[%s1395 + $0x10] sm:$0xff]
    %v2882 = vld [vmem:[%s1395 + $0x18] sm:$0xff]
    %v2883 = vld [vmem:[%s1395 + $0x20] sm:$0xff]
    %v2884 = vld [vmem:[%s1395 + $0x28] sm:$0xff]
    %v2885 = vld [vmem:[%s1395 + $0x30] sm:$0xff]
    %v2886 = vld [vmem:[%s1395 + $0x38] sm:$0xff]
    %v2887 = vld [vmem:[%s1395 + $0x40] sm:$0xff]
    %v2888 = vld [vmem:[%s1395 + $0x48] sm:$0xff]
    %v2889 = vld [vmem:[%s1395 + $0x50] sm:$0xff]
    %v2890 = vld [vmem:[%s1395 + $0x58] sm:$0xff]
    %v2891 = vld [vmem:[%s1395 + $0x60] sm:$0xff]
    %v2892 = vld [vmem:[%s1395 + $0x68] sm:$0xff]
    %v2893 = vld [vmem:[%s1395 + $0x70] sm:$0xff]
    %v2894 = vld [vmem:[%s1395 + $0x78] sm:$0xff]
    %v2895 = vld [vmem:[%s1395 + $0x80] sm:$0xff]
    %v2896 = vld [vmem:[%s1395 + $0x88] sm:$0xff]
    %v2897 = vld [vmem:[%s1395 + $0x90] sm:$0xff]
    %v2898 = vld [vmem:[%s1395 + $0x98] sm:$0xff]
    %v2899 = vld [vmem:[%s1395 + $0xa0] sm:$0xff]
    %v2900 = vld [vmem:[%s1395 + $0xa8] sm:$0xff]
    %v2901 = vld [vmem:[%s1395 + $0xb0] sm:$0xff]
    %v2902 = vld [vmem:[%s1395 + $0xb8] sm:$0xff]
    %v2903 = vld [vmem:[%s1395 + $0xc0] sm:$0xf]
    %v2905 = vrot.slane %v1944, 1
    %v2906 = vrot.slane %v1945, 1
    %v2908 = vsel %vm477, %v2906, 0
    %v2911 = vsel %vm481, %v2903, 0
    %2913 = vmatprep.subr.mxu0 0.0
    %2914 = vmatpush1.msra.mxu0 %v2879
    %2915 = vmatprep.subr.mxu0 0.0
    %2916 = vmatpush1.msra.mxu0 %v2880
    %2917 = vmatprep.subr.mxu0 0.0
    %2918 = vmatpush1.msra.mxu0 %v2881
    %2919 = vmatprep.subr.mxu0 0.0
    %2920 = vmatpush1.msra.mxu0 %v2882
    %2921 = vmatprep.subr.mxu0 0.0
    %2922 = vmatpush1.msra.mxu0 %v2883
    %2923 = vmatprep.subr.mxu0 0.0
    %2924 = vmatpush1.msra.mxu0 %v2884
    %2925 = vmatprep.subr.mxu0 0.0
    %2926 = vmatpush1.msra.mxu0 %v2885
    %2927 = vmatprep.subr.mxu0 0.0
    %2928 = vmatpush1.msra.mxu0 %v2886
    %2929 = vmatprep.subr.mxu0 0.0
    %2930 = vmatpush1.msra.mxu0 %v2887
    %2931 = vmatprep.subr.mxu0 0.0
    %2932 = vmatpush1.msra.mxu0 %v2888
    %2933 = vmatprep.subr.mxu0 0.0
    %2934 = vmatpush1.msra.mxu0 %v2889
    %2935 = vmatprep.subr.mxu0 0.0
    %2936 = vmatpush1.msra.mxu0 %v2890
    %2937 = vmatprep.subr.mxu0 0.0
    %2938 = vmatpush1.msra.mxu0 %v2891
    %2939 = vmatprep.subr.mxu0 0.0
    %2940 = vmatpush1.msra.mxu0 %v2892
    %2941 = vmatprep.subr.mxu0 0.0
    %2942 = vmatpush1.msra.mxu0 %v2893
    %2943 = vmatprep.subr.mxu0 0.0
    %2944 = vmatpush1.msra.mxu0 %v2894
    %2945 = vmatprep.subr.mxu0 0.0
    %2946 = vmatpush1.msra.mxu0 %v2895
    %2947 = vmatprep.subr.mxu0 0.0
    %2948 = vmatpush1.msra.mxu0 %v2896
    %2949 = vmatprep.subr.mxu0 0.0
    %2950 = vmatpush1.msra.mxu0 %v2897
    %2951 = vmatprep.subr.mxu0 0.0
    %2952 = vmatpush1.msra.mxu0 %v2898
    %2953 = vmatprep.subr.mxu0 0.0
    %2954 = vmatpush1.msra.mxu0 %v2899
    %2955 = vmatprep.subr.mxu0 0.0
    %2956 = vmatpush1.msra.mxu0 %v2900
    %2957 = vmatprep.subr.mxu0 0.0
    %2958 = vmatpush1.msra.mxu0 %v2901
    %2959 = vmatprep.subr.mxu0 0.0
    %2960 = vmatpush1.msra.mxu0 %v2902
    %2961 = vmatprep.subr.mxu0 0.0
    %2962 = vmatpush1.msra.mxu0 %v2911
    %2963 = vmatprep.subr.mxu0 0.0
    %2964 = vmatpush1.msra.mxu0 0.0
    %2965 = vmatprep.subr.mxu0 0.0
    %2966 = vmatpush1.msra.mxu0 0.0
    %2967 = vmatprep.subr.mxu0 0.0
    %2968 = vmatpush1.msra.mxu0 0.0
    %2969 = vmatprep.subr.mxu0 0.0
    %2970 = vmatpush1.msra.mxu0 0.0
    %2971 = vmatprep.subr.mxu0 0.0
    %2972 = vmatpush1.msra.mxu0 0.0
    %2973 = vmatprep.subr.mxu0 0.0
    %2974 = vmatpush1.msra.mxu0 0.0
    %2975 = vmatprep.subr.mxu0 0.0
    %2976 = vmatpush1.msra.mxu0 0.0
    %2977 = vmatprep.mubr.f32.mxu0 %v2908
    %2978 = vmatmul.mubr.f32.gmra.mrb[0].mxu0 %v2905
    %v2979 = vpop.f32.mrb[0].mxu0
    %v2980 = vadd.f32 0.0, %v2979
    %v2981 = vpop.f32.mrb[0].mxu0
    %2982 = vdwg.mxu0
    %v2983 = vadd.f32 %v2878, %v2980
    %v2984 = vmax.f32 %v2983, 0.0
    %2985 = vmatprep.subr.mxu0 0.0
    %2986 = vmatpush1.msra.mxu0 %v46
    %2987 = vmatprep.subr.mxu0 0.0
    %2988 = vmatpush1.msra.mxu0 %v47
    %2989 = vmatprep.subr.mxu0 0.0
    %2990 = vmatpush1.msra.mxu0 %v48
    %2991 = vmatprep.subr.mxu0 0.0
    %2992 = vmatpush1.msra.mxu0 %v49
    %2993 = vmatprep.subr.mxu0 0.0
    %2994 = vmatpush1.msra.mxu0 %v50
    %2995 = vmatprep.subr.mxu0 0.0
    %2996 = vmatpush1.msra.mxu0 %v51
    %2997 = vmatprep.subr.mxu0 0.0
    %2998 = vmatpush1.msra.mxu0 %v52
    %2999 = vmatprep.subr.mxu0 0.0
    %3000 = vmatpush1.msra.mxu0 %v53
    %3001 = vmatprep.subr.mxu0 0.0
    %3002 = vmatpush1.msra.mxu0 %v54
    %3003 = vmatprep.subr.mxu0 0.0
    %3004 = vmatpush1.msra.mxu0 %v55
    %3005 = vmatprep.subr.mxu0 0.0
    %3006 = vmatpush1.msra.mxu0 %v56
    %3007 = vmatprep.subr.mxu0 0.0
    %3008 = vmatpush1.msra.mxu0 %v57
    %3009 = vmatprep.subr.mxu0 0.0
    %3010 = vmatpush1.msra.mxu0 %v58
    %3011 = vmatprep.subr.mxu0 0.0
    %3012 = vmatpush1.msra.mxu0 %v59
    %3013 = vmatprep.subr.mxu0 0.0
    %3014 = vmatpush1.msra.mxu0 %v60
    %3015 = vmatprep.subr.mxu0 0.0
    %3016 = vmatpush1.msra.mxu0 %v61
    %3017 = vmatprep.subr.mxu0 0.0
    %3018 = vmatpush1.msra.mxu0 0.0
    %3019 = vmatprep.subr.mxu0 0.0
    %3020 = vmatpush1.msra.mxu0 0.0
    %3021 = vmatprep.subr.mxu0 0.0
    %3022 = vmatpush1.msra.mxu0 0.0
    %3023 = vmatprep.subr.mxu0 0.0
    %3024 = vmatpush1.msra.mxu0 0.0
    %3025 = vmatprep.subr.mxu0 0.0
    %3026 = vmatpush1.msra.mxu0 0.0
    %3027 = vmatprep.subr.mxu0 0.0
    %3028 = vmatpush1.msra.mxu0 0.0
    %3029 = vmatprep.subr.mxu0 0.0
    %3030 = vmatpush1.msra.mxu0 0.0
    %3031 = vmatprep.subr.mxu0 0.0
    %3032 = vmatpush1.msra.mxu0 0.0
    %3033 = vmatprep.subr.mxu0 0.0
    %3034 = vmatpush1.msra.mxu0 0.0
    %3035 = vmatprep.subr.mxu0 0.0
    %3036 = vmatpush1.msra.mxu0 0.0
    %3037 = vmatprep.subr.mxu0 0.0
    %3038 = vmatpush1.msra.mxu0 0.0
    %3039 = vmatprep.subr.mxu0 0.0
    %3040 = vmatpush1.msra.mxu0 0.0
    %3041 = vmatprep.subr.mxu0 0.0
    %3042 = vmatpush1.msra.mxu0 0.0
    %3043 = vmatprep.subr.mxu0 0.0
    %3044 = vmatpush1.msra.mxu0 0.0
    %3045 = vmatprep.subr.mxu0 0.0
    %3046 = vmatpush1.msra.mxu0 0.0
    %3047 = vmatprep.subr.mxu0 0.0
    %3048 = vmatpush1.msra.mxu0 0.0
    %3049 = vmatprep.mubr.f32.mxu0 0.0
    %3050 = vmatmul.mubr.f32.gmra.mrb[0].mxu0 %v2984
    %v3051 = vpop.f32.mrb[0].mxu0
    %v3052 = vadd.f32 %v62, %v3051
    %v3053 = vpop.f32.mrb[0].mxu0
    %3054 = vdwg.mxu0
    %3055 = vst.msk [vmem:[#allocation5 + $0x1] sm:$0x1] %vm1572, %v3052
    // Predicated region
    $region34: #{tiny_cnn_forward.1} parent=1 // pred_check
      _
    $region35: #{tiny_cnn_forward.1} parent=1 // pred_check_branch
      %3057 = sbr.rel (0) target = $region37
    $region36: #{tiny_cnn_forward.1} parent=1 // pred_region
      %s3059 = ssub.s32 32, 32
      %3060 = vsyncadd [#allocation4], %s3059
      %s3062 = sshll.u32 [#allocation5], 4
      %s3063 = int_to_ptr.vmem [resolvable:$true] %s3062
      %3065 = dma.vmem_to_hbm [thread:$0]  %s3063, 32, %s7, [#allocation4]
    $region37: #{tiny_cnn_forward.1} parent=1 // pred_fallthru
      _
    // Predicated region
    $region38: #{tiny_cnn_forward.1} parent=1 // pred_check
      _
    $region39: #{tiny_cnn_forward.1} parent=1 // pred_check_branch
      %3067 = sbr.rel (0) target = $region41
    $region40: #{tiny_cnn_forward.1} parent=1 // pred_region
      %3068 = dma.done [#allocation4], 32
    $region41: #{tiny_cnn_forward.1} parent=1 // pred_fallthru
      _
    %3069 = vsyncpa [#allocation3], 1
    %3070 = vsyncpa [#allocation4], 1

</llo_original>
